<compile_context>
chip_gen: v5e
topology: v5e:2x2
jax: 0.10.0
libtpu: 0.0.40
codegen_flags: <defaults>
</compile_context>

<pallas_src>
import functools

import jax
import jax.numpy as jnp
from jax.experimental import pallas as pl
from jax.experimental.pallas import tpu as pltpu

# ---------------- synthetic config (small shapes) ----------------
IMG_H, IMG_W = 32, 32
OUT_H, OUT_W = 8, 8
OUT_CHANNELS = 128
N_CLASSES = 4
ROI_SIZE = 2
HIDDEN_DIM = 512
ANC_SCALES = (0.25, 0.5, 0.75, 1.0, 2.0)
ANC_RATIOS = (0.5, 1.0, 1.5)
N_ANC = len(ANC_SCALES) * len(ANC_RATIOS) * 2        # 30 anchors / cell
N_POS_PER_IMG = 8
N_NEG_PER_IMG = 8
W_CONF, W_REG = 1.0, 5.0

HEAD_N_PAD = 256          # conf(30) + reg(120) = 150 -> padded to lane-dense 256
CLS_N_PAD = 128           # n_classes(4) -> padded to lane-dense 128


# ======================= Pallas kernels =======================

def _conv_mm_kernel(x_ref, w_ref, b_ref, o_ref):
    """Fused matmul + bias + ReLU (bf16 MXU operands, f32 accumulate)."""
    acc = jnp.dot(x_ref[...], w_ref[...], preferred_element_type=jnp.float32)
    o_ref[...] = jnp.maximum(acc + b_ref[...], 0.0)


def conv_matmul_bias_relu(x_bf16, w_bf16, b_f32, *, tm=64):
    M, K = x_bf16.shape
    K2, N = w_bf16.shape
    assert K == K2 and M % tm == 0
    return pl.pallas_call(
        _conv_mm_kernel,
        out_shape=jax.ShapeDtypeStruct((M, N), jnp.float32),
        grid=(M // tm,),
        in_specs=[
            pl.BlockSpec((tm, K), lambda i: (i, 0)),
            pl.BlockSpec((K, N), lambda i: (0, 0)),
            pl.BlockSpec((1, N), lambda i: (0, 0)),
        ],
        out_specs=pl.BlockSpec((tm, N), lambda i: (i, 0)),
        compiler_params=pltpu.CompilerParams(
            dimension_semantics=("parallel",)),
    )(x_bf16, w_bf16, b_f32.reshape(1, N))


def _proposal_kernel(cols_ref, wc_ref, bc_ref, wh_ref, bh_ref, o_ref):
    """Fused ProposalModule: 3x3 conv matmul + ReLU -> merged conf/reg head.

    `hid` never leaves VMEM (dropout = identity)."""
    hid = jnp.dot(cols_ref[...], wc_ref[...], preferred_element_type=jnp.float32)
    hid = jnp.maximum(hid + bc_ref[...], 0.0)
    head = jnp.dot(hid.astype(jnp.bfloat16), wh_ref[...],
                   preferred_element_type=jnp.float32) + bh_ref[...]
    o_ref[...] = head


def proposal_module(cols_bf16, wconv_bf16, bconv_f32, whead_bf16, bhead_f32,
                    *, tm=64):
    M, K = cols_bf16.shape
    H = wconv_bf16.shape[1]
    N = whead_bf16.shape[1]
    assert M % tm == 0
    return pl.pallas_call(
        _proposal_kernel,
        out_shape=jax.ShapeDtypeStruct((M, N), jnp.float32),
        grid=(M // tm,),
        in_specs=[
            pl.BlockSpec((tm, K), lambda i: (i, 0)),
            pl.BlockSpec((K, H), lambda i: (0, 0)),
            pl.BlockSpec((1, H), lambda i: (0, 0)),
            pl.BlockSpec((H, N), lambda i: (0, 0)),
            pl.BlockSpec((1, N), lambda i: (0, 0)),
        ],
        out_specs=pl.BlockSpec((tm, N), lambda i: (i, 0)),
        compiler_params=pltpu.CompilerParams(
            dimension_semantics=("parallel",)),
    )(cols_bf16, wconv_bf16, bconv_f32.reshape(1, H),
      whead_bf16, bhead_f32.reshape(1, N))


def _cls_loss_kernel(mask_ref, invcnt_ref, fm_ref, fcw_ref, fcb_ref,
                     clsw_ref, clsb_ref, cpos_ref, cneg_ref,
                     regp_ref, gtoff_ref, onehot_ref, o_ref, *, batch_size):
    """Fused: ROI avg-pool (one MXU matmul) -> FC+ReLU -> cls head -> all losses."""
    # ROI average pooling as mask @ feature_map
    pooled = jnp.dot(mask_ref[...], fm_ref[...],
                     preferred_element_type=jnp.float32)            # (NP, C)
    pooled = pooled * invcnt_ref[...]
    # FC + ReLU (dropout = identity)
    h = jnp.dot(pooled.astype(jnp.bfloat16), fcw_ref[...],
                preferred_element_type=jnp.float32) + fcb_ref[...]
    h = jnp.maximum(h, 0.0)                                          # (NP, HIDDEN)
    # Classifier head (padded to 128 lanes; only first N_CLASSES are real)
    logits_full = jnp.dot(h.astype(jnp.bfloat16), clsw_ref[...],
                          preferred_element_type=jnp.float32) + clsb_ref[...]
    logits = logits_full[:, :N_CLASSES]                              # (NP, 4)

    def bce_sum(x, t):
        # numerically-stable BCE with logits, summed (f32 on VPU/EUP)
        return jnp.sum(jnp.maximum(x, 0.0) - x * t
                       + jnp.log(1.0 + jnp.exp(-jnp.abs(x))))

    cp = cpos_ref[...]
    cn = cneg_ref[...]
    cls_loss_rpn = (bce_sum(cp, jnp.ones_like(cp))
                    + bce_sum(cn, jnp.zeros_like(cn))) / batch_size

    d = regp_ref[...] - gtoff_ref[...]
    ad = jnp.abs(d)
    reg_loss = jnp.sum(jnp.where(ad < 1.0, 0.5 * d * d, ad - 0.5)) / batch_size

    m = jnp.max(logits, axis=-1, keepdims=True)
    lse = m + jnp.log(jnp.sum(jnp.exp(logits - m), axis=-1, keepdims=True))
    ce = -jnp.sum(onehot_ref[...] * (logits - lse)) / logits.shape[0]

    total = W_CONF * cls_loss_rpn + W_REG * reg_loss + ce
    o_ref[...] = jnp.reshape(total, (1, 1))


# ======================= plain-JAX glue =======================

def im2col(x, kh, kw, stride, pad):
    B, H, W, C = x.shape
    xp = jnp.pad(x, ((0, 0), (pad, pad), (pad, pad), (0, 0)))
    Ho = (H + 2 * pad - kh) // stride + 1
    Wo = (W + 2 * pad - kw) // stride + 1
    cols = []
    for i in range(kh):
        for j in range(kw):
            patch = xp[:, i:i + stride * (Ho - 1) + 1:stride,
                          j:j + stride * (Wo - 1) + 1:stride, :]
            cols.append(patch)
    return jnp.concatenate(cols, axis=-1), Ho, Wo


def gen_anchor_base(out_h, out_w):
    ys = jnp.arange(out_h, dtype=jnp.float32) + 0.5
    xs = jnp.arange(out_w, dtype=jnp.float32) + 0.5
    cy, cx = jnp.meshgrid(ys, xs, indexing="ij")      # (H, W)
    whs = []
    for s in ANC_SCALES:
        for r in ANC_RATIOS:
            for _ in range(2):                        # x2 like the reference
                whs.append((s, s * r))
    whs = jnp.array(whs, dtype=jnp.float32)           # (N_ANC, 2)
    w = whs[:, 0][None, None, :]
    h = whs[:, 1][None, None, :]
    cx = cx[:, :, None]
    cy = cy[:, :, None]
    x1 = jnp.clip(cx - w / 2, 0.0, float(out_w))
    y1 = jnp.clip(cy - h / 2, 0.0, float(out_h))
    x2 = jnp.clip(cx + w / 2, 0.0, float(out_w))
    y2 = jnp.clip(cy + h / 2, 0.0, float(out_h))
    anc = jnp.stack([x1, y1, x2, y2], axis=-1)        # (H, W, N_ANC, 4)
    return anc.reshape(-1, 4)                         # index = (h*W + w)*N_ANC + a


def box_iou(anc, gt):
    ax1, ay1, ax2, ay2 = (anc[:, k] for k in range(4))
    gx1, gy1, gx2, gy2 = (gt[..., k] for k in range(4))
    ix1 = jnp.maximum(ax1[None, :, None], gx1[:, None, :])
    iy1 = jnp.maximum(ay1[None, :, None], gy1[:, None, :])
    ix2 = jnp.minimum(ax2[None, :, None], gx2[:, None, :])
    iy2 = jnp.minimum(ay2[None, :, None], gy2[:, None, :])
    iw = jnp.maximum(ix2 - ix1, 0.0)
    ih = jnp.maximum(iy2 - iy1, 0.0)
    inter = iw * ih
    area_a = ((ax2 - ax1) * (ay2 - ay1))[None, :, None]
    area_g = ((gx2 - gx1) * (gy2 - gy1))[:, None, :]
    return inter / jnp.maximum(area_a + area_g - inter, 1e-6)


def xyxy_to_cxcywh(b):
    w = b[:, 2] - b[:, 0]
    h = b[:, 3] - b[:, 1]
    return b[:, 0] + w / 2, b[:, 1] + h / 2, w, h


def bbox_offsets(anc, gt):
    acx, acy, aw, ah = xyxy_to_cxcywh(anc)
    gcx, gcy, gw, gh = xyxy_to_cxcywh(gt)
    tx = (gcx - acx) / aw
    ty = (gcy - acy) / ah
    tw = jnp.log(gw / aw)
    th = jnp.log(gh / ah)
    return jnp.stack([tx, ty, tw, th], axis=-1)


def generate_proposals(anc, offsets):
    acx, acy, aw, ah = xyxy_to_cxcywh(anc)
    cx = acx + offsets[:, 0] * aw
    cy = acy + offsets[:, 1] * ah
    w = aw * jnp.exp(offsets[:, 2])
    h = ah * jnp.exp(offsets[:, 3])
    return jnp.stack([cx - w / 2, cy - h / 2, cx + w / 2, cy + h / 2], axis=-1)


def get_req_anchors(anc_base, gt_proj, gt_classes):
    # TODO(synk): original uses dynamic torch.where counts; replaced by fixed
    # top-k positives / bottom-k negatives per image for static shapes.
    B = gt_proj.shape[0]
    A = anc_base.shape[0]
    iou = box_iou(anc_base, gt_proj)                  # (B, A, M)
    max_iou = jnp.max(iou, axis=-1)                   # (B, A)
    argmax_gt = jnp.argmax(iou, axis=-1)              # (B, A)
    pos_l, neg_l, off_l, cls_l, coord_l, sep_l = [], [], [], [], [], []
    for b in range(B):
        _, pos_idx = jax.lax.top_k(max_iou[b], N_POS_PER_IMG)
        _, neg_idx = jax.lax.top_k(-max_iou[b], N_NEG_PER_IMG)
        anc_pos = anc_base[pos_idx]
        matched = argmax_gt[b][pos_idx]
        gt_match = gt_proj[b][matched]
        cls_match = gt_classes[b][matched]
        pos_l.append(pos_idx.astype(jnp.int32) + b * A)
        neg_l.append(neg_idx.astype(jnp.int32) + b * A)
        off_l.append(bbox_offsets(anc_pos, gt_match))
        cls_l.append(cls_match)
        coord_l.append(anc_pos)
        sep_l.append(jnp.full((N_POS_PER_IMG,), b, dtype=jnp.int32))
    return (jnp.concatenate(pos_l), jnp.concatenate(neg_l),
            jnp.concatenate(off_l), jnp.concatenate(cls_l),
            jnp.concatenate(coord_l), jnp.concatenate(sep_l))


# ======================= model =======================

def init_params(key):
    keys = jax.random.split(key, 6)

    def lin(k, fan_in, shape):
        return (jax.random.normal(k, shape, jnp.float32)
                * (1.0 / jnp.sqrt(float(fan_in))))

    p = {}
    # backbone stand-in (TODO(synk): ResNet50[:7] replaced by one strided conv)
    p["bb_w"] = lin(keys[0], 3 * 3 * 3, (3, 3, 3, OUT_CHANNELS))
    p["bb_b"] = jnp.zeros((OUT_CHANNELS,), jnp.float32)
    # ProposalModule
    p["pm_conv_w"] = lin(keys[1], 3 * 3 * OUT_CHANNELS,
                         (3, 3, OUT_CHANNELS, HIDDEN_DIM))
    p["pm_conv_b"] = jnp.zeros((HIDDEN_DIM,), jnp.float32)
    p["conf_w"] = lin(keys[2], HIDDEN_DIM, (HIDDEN_DIM, N_ANC))
    p["conf_b"] = jnp.zeros((N_ANC,), jnp.float32)
    p["reg_w"] = lin(keys[3], HIDDEN_DIM, (HIDDEN_DIM, N_ANC * 4))
    p["reg_b"] = jnp.zeros((N_ANC * 4,), jnp.float32)
    # ClassificationModule
    p["fc_w"] = lin(keys[4], OUT_CHANNELS, (OUT_CHANNELS, HIDDEN_DIM))
    p["fc_b"] = jnp.zeros((HIDDEN_DIM,), jnp.float32)
    p["cls_w"] = lin(keys[5], HIDDEN_DIM, (HIDDEN_DIM, N_CLASSES))
    p["cls_b"] = jnp.zeros((N_CLASSES,), jnp.float32)
    return p


def two_stage_detector_forward(params, images_nchw, gt_bboxes, gt_classes):
    B = images_nchw.shape[0]
    x = jnp.transpose(images_nchw, (0, 2, 3, 1))      # NCHW -> NHWC
    M = B * OUT_H * OUT_W                             # 128 rows
    tm = M // 2 if M % 2 == 0 and M >= 16 else M      # >=2 grid steps for v7x

    # --- FeatureExtractor: strided 3x3 conv via im2col + fused Pallas matmul ---
    stride = IMG_H // OUT_H
    cols, Ho, Wo = im2col(x, 3, 3, stride=stride, pad=1)
    fm_flat = conv_matmul_bias_relu(
        cols.reshape(M, -1).astype(jnp.bfloat16),
        params["bb_w"].reshape(-1, OUT_CHANNELS).astype(jnp.bfloat16),
        params["bb_b"], tm=tm)                        # (B*H*W, C) f32
    feature_map = fm_flat.reshape(B, Ho, Wo, OUT_CHANNELS)

    # --- RPN anchor targets (glue) ---
    anc_base = gen_anchor_base(OUT_H, OUT_W)
    wsf, hsf = IMG_W // OUT_W, IMG_H // OUT_H
    gt_proj = gt_bboxes / jnp.array([wsf, hsf, wsf, hsf], jnp.float32)
    (pos_ind, neg_ind, gt_offsets, gt_class_pos,
     pos_anc_coords, pos_ind_sep) = get_req_anchors(anc_base, gt_proj, gt_classes)

    # --- ProposalModule: ONE fused kernel (conv+ReLU -> merged conf/reg head) ---
    colsp, _, _ = im2col(feature_map, 3, 3, stride=1, pad=1)
    whead = jnp.concatenate([params["conf_w"], params["reg_w"]], axis=1)  # (512,150)
    n_real = N_ANC + 4 * N_ANC
    whead = jnp.pad(whead, ((0, 0), (0, HEAD_N_PAD - n_real)))
    bhead = jnp.pad(jnp.concatenate([params["conf_b"], params["reg_b"]]),
                    (0, HEAD_N_PAD - n_real))
    head = proposal_module(
        colsp.reshape(M, -1).astype(jnp.bfloat16),
        params["pm_conv_w"].reshape(-1, HIDDEN_DIM).astype(jnp.bfloat16),
        params["pm_conv_b"],
        whead.astype(jnp.bfloat16), bhead, tm=tm)     # (B*H*W, 256) f32
    conf = head[:, :N_ANC]                            # (B*H*W, 30)
    reg = head[:, N_ANC:n_real]                       # (B*H*W, 120)

    conf_flat = conf.reshape(-1)                      # flat index = (b, cell, anc)
    reg_flat = reg.reshape(-1, 4)                     # same ordering
    conf_pos = conf_flat[pos_ind]
    conf_neg = conf_flat[neg_ind]
    offsets_pos = reg_flat[pos_ind]
    proposals = generate_proposals(pos_anc_coords, offsets_pos)

    # --- ROI boxes (integer, inclusive) ---
    x1 = jnp.clip(jnp.floor(proposals[:, 0]), 0, OUT_W - 1).astype(jnp.int32)
    y1 = jnp.clip(jnp.floor(proposals[:, 1]), 0, OUT_H - 1).astype(jnp.int32)
    x2 = jnp.clip(jnp.ceil(proposals[:, 2]) - 1, 0, OUT_W - 1).astype(jnp.int32)
    y2 = jnp.clip(jnp.ceil(proposals[:, 3]) - 1, 0, OUT_H - 1).astype(jnp.int32)
    x2 = jnp.maximum(x2, x1)
    y2 = jnp.maximum(y2, y1)

    # ROI membership mask (NP, B*H*W): ROI avg-pool becomes one MXU matmul.
    HW = OUT_H * OUT_W
    cell = jnp.arange(B * HW, dtype=jnp.int32)
    b_of = cell // HW
    rem = cell % HW
    row = rem // OUT_W
    col = rem % OUT_W
    in_box = ((row[None, :] >= y1[:, None]) & (row[None, :] <= y2[:, None]) &
              (col[None, :] >= x1[:, None]) & (col[None, :] <= x2[:, None]) &
              (b_of[None, :] == pos_ind_sep[:, None]))
    maskf = in_box.astype(jnp.float32)                            # (NP, B*H*W)
    inv_cnt = 1.0 / jnp.maximum(jnp.sum(maskf, axis=1, keepdims=True), 1.0)

    gt_onehot = jax.nn.one_hot(gt_class_pos.astype(jnp.int32), N_CLASSES,
                               dtype=jnp.float32)

    cls_w_pad = jnp.pad(params["cls_w"], ((0, 0), (0, CLS_N_PAD - N_CLASSES)))
    cls_b_pad = jnp.pad(params["cls_b"], (0, CLS_N_PAD - N_CLASSES))

    # --- fused ROI-pool + FC + cls head + all losses (one Pallas kernel) ---
    total = pl.pallas_call(
        functools.partial(_cls_loss_kernel, batch_size=float(B)),
        out_shape=jax.ShapeDtypeStruct((1, 1), jnp.float32),
    )(maskf.astype(jnp.bfloat16), inv_cnt, fm_flat.astype(jnp.bfloat16),
      params["fc_w"].astype(jnp.bfloat16), params["fc_b"].reshape(1, -1),
      cls_w_pad.astype(jnp.bfloat16), cls_b_pad.reshape(1, -1),
      conf_pos.reshape(1, -1), conf_neg.reshape(1, -1),
      offsets_pos, gt_offsets, gt_onehot)
    return total[0, 0]


if __name__ == "__main__":
    key = jax.random.PRNGKey(0)
    pkey, ikey = jax.random.split(key)
    params = init_params(pkey)
    images = jax.random.normal(ikey, (2, 3, IMG_H, IMG_W), jnp.float32)
    gt_bboxes = jnp.array([[[2.0, 2.0, 14.0, 14.0], [16.0, 18.0, 30.0, 28.0]],
                           [[4.0, 6.0, 20.0, 26.0], [10.0, 2.0, 28.0, 12.0]]],
                          jnp.float32)
    gt_classes = jnp.array([[1, 2], [3, 0]], jnp.int32)

    loss = jax.jit(two_stage_detector_forward)(params, images, gt_bboxes, gt_classes)
    jax.block_until_ready(loss)
    assert bool(jnp.isfinite(loss))
    print("KERNEL_OK")
</pallas_src>

<mosaic_0001>
module attributes {stable_mosaic.version = 11 : i64} {
  func.func @_conv_mm_kernel(%arg0: i32, %arg1: memref<64x27xbf16, #tpu.memory_space<vmem>>, %arg2: memref<27x128xbf16, #tpu.memory_space<vmem>>, %arg3: memref<1x128xf32, #tpu.memory_space<vmem>>, %arg4: memref<64x128xf32, #tpu.memory_space<vmem>>) attributes {dimension_semantics = [#tpu.dimension_semantics<parallel>], iteration_bounds = array<i64: 2>, scalar_prefetch = 0 : i64, scratch_operands = 0 : i64, tpu.core_type = #tpu.core_type<tc>, window_params = [{transform_indices = @transform_0, window_bounds = array<i64: 64, 27>}, {pipeline_mode = #tpu.pipeline_mode<synchronous>, transform_indices = @transform_1, window_bounds = array<i64: 27, 128>}, {pipeline_mode = #tpu.pipeline_mode<synchronous>, transform_indices = @transform_2, window_bounds = array<i64: 1, 128>}, {transform_indices = @transform_3, window_bounds = array<i64: 64, 128>}]} {
    %c0 = arith.constant 0 : index
    %c0_0 = arith.constant 0 : index
    %0 = vector.load %arg1[%c0, %c0_0] : memref<64x27xbf16, #tpu.memory_space<vmem>>, vector<64x27xbf16>
    %c0_1 = arith.constant 0 : index
    %c0_2 = arith.constant 0 : index
    %1 = vector.load %arg2[%c0_1, %c0_2] : memref<27x128xbf16, #tpu.memory_space<vmem>>, vector<27x128xbf16>
    %cst = arith.constant dense<0.000000e+00> : vector<64x128xf32>
    %2 = tpu.matmul %0, %1, %cst {dimension_numbers = #tpu.dot_dimension_numbers<[1], [0], [0], [1], [0, 0, 1, 1], [], []>} : vector<64x27xbf16>, vector<27x128xbf16>, vector<64x128xf32> -> vector<64x128xf32>
    %c0_3 = arith.constant 0 : index
    %c0_4 = arith.constant 0 : index
    %3 = vector.load %arg3[%c0_3, %c0_4] : memref<1x128xf32, #tpu.memory_space<vmem>>, vector<1x128xf32>
    %4 = vector.broadcast %3 : vector<1x128xf32> to vector<64x128xf32>
    %5 = arith.addf %2, %4 : vector<64x128xf32>
    %cst_5 = arith.constant 0.000000e+00 : f32
    %6 = vector.broadcast %cst_5 : f32 to vector<64x128xf32>
    %7 = arith.maximumf %5, %6 : vector<64x128xf32>
    %c0_6 = arith.constant 0 : index
    %c0_7 = arith.constant 0 : index
    %8 = vector.load %arg4[%c0_6, %c0_7] : memref<64x128xf32, #tpu.memory_space<vmem>>, vector<64x128xf32>
    tpu.vector_store %arg4[%c0_6, %c0_7], %7 {strides = array<i32>} : memref<64x128xf32, #tpu.memory_space<vmem>>, vector<64x128xf32>,
    return
  }
  func.func @transform_0(%arg0: i32) -> (i32, i32) {
    %c0_i32 = arith.constant 0 : i32
    %c0_i32_0 = arith.constant 0 : i32
    return %arg0, %c0_i32 : i32, i32
  }
  func.func @transform_1(%arg0: i32) -> (i32, i32) {
    %c0_i32 = arith.constant 0 : i32
    %c0_i32_0 = arith.constant 0 : i32
    %c0_i32_1 = arith.constant 0 : i32
    return %c0_i32, %c0_i32_0 : i32, i32
  }
  func.func @transform_2(%arg0: i32) -> (i32, i32) {
    %c0_i32 = arith.constant 0 : i32
    %c0_i32_0 = arith.constant 0 : i32
    %c0_i32_1 = arith.constant 0 : i32
    return %c0_i32, %c0_i32_0 : i32, i32
  }
  func.func @transform_3(%arg0: i32) -> (i32, i32) {
    %c0_i32 = arith.constant 0 : i32
    %c0_i32_0 = arith.constant 0 : i32
    return %arg0, %c0_i32 : i32, i32
  }
}

module attributes {stable_mosaic.version = 11 : i64} {
  func.func @_proposal_kernel(%arg0: i32, %arg1: memref<64x1152xbf16, #tpu.memory_space<vmem>>, %arg2: memref<1152x512xbf16, #tpu.memory_space<vmem>>, %arg3: memref<1x512xf32, #tpu.memory_space<vmem>>, %arg4: memref<512x256xbf16, #tpu.memory_space<vmem>>, %arg5: memref<1x256xf32, #tpu.memory_space<vmem>>, %arg6: memref<64x256xf32, #tpu.memory_space<vmem>>) attributes {dimension_semantics = [#tpu.dimension_semantics<parallel>], iteration_bounds = array<i64: 2>, scalar_prefetch = 0 : i64, scratch_operands = 0 : i64, tpu.core_type = #tpu.core_type<tc>, window_params = [{transform_indices = @transform_0, window_bounds = array<i64: 64, 1152>}, {pipeline_mode = #tpu.pipeline_mode<synchronous>, transform_indices = @transform_1, window_bounds = array<i64: 1152, 512>}, {pipeline_mode = #tpu.pipeline_mode<synchronous>, transform_indices = @transform_2, window_bounds = array<i64: 1, 512>}, {pipeline_mode = #tpu.pipeline_mode<synchronous>, transform_indices = @transform_3, window_bounds = array<i64: 512, 256>}, {pipeline_mode = #tpu.pipeline_mode<synchronous>, transform_indices = @transform_4, window_bounds = array<i64: 1, 256>}, {transform_indices = @transform_5, window_bounds = array<i64: 64, 256>}]} {
    %c0 = arith.constant 0 : index
    %c0_0 = arith.constant 0 : index
    %0 = vector.load %arg1[%c0, %c0_0] : memref<64x1152xbf16, #tpu.memory_space<vmem>>, vector<64x1152xbf16>
    %c0_1 = arith.constant 0 : index
    %c0_2 = arith.constant 0 : index
    %1 = vector.load %arg2[%c0_1, %c0_2] : memref<1152x512xbf16, #tpu.memory_space<vmem>>, vector<1152x512xbf16>
    %cst = arith.constant dense<0.000000e+00> : vector<64x512xf32>
    %2 = tpu.matmul %0, %1, %cst {dimension_numbers = #tpu.dot_dimension_numbers<[1], [0], [0], [1], [0, 0, 1, 1], [], []>} : vector<64x1152xbf16>, vector<1152x512xbf16>, vector<64x512xf32> -> vector<64x512xf32>
    %c0_3 = arith.constant 0 : index
    %c0_4 = arith.constant 0 : index
    %3 = vector.load %arg3[%c0_3, %c0_4] : memref<1x512xf32, #tpu.memory_space<vmem>>, vector<1x512xf32>
    %4 = vector.broadcast %3 : vector<1x512xf32> to vector<64x512xf32>
    %5 = arith.addf %2, %4 : vector<64x512xf32>
    %cst_5 = arith.constant 0.000000e+00 : f32
    %6 = vector.broadcast %cst_5 : f32 to vector<64x512xf32>
    %7 = arith.maximumf %5, %6 : vector<64x512xf32>
    %8 = arith.truncf %7 : vector<64x512xf32> to vector<64x512xbf16>
    %c0_6 = arith.constant 0 : index
    %c0_7 = arith.constant 0 : index
    %9 = vector.load %arg4[%c0_6, %c0_7] : memref<512x256xbf16, #tpu.memory_space<vmem>>, vector<512x256xbf16>
    %cst_8 = arith.constant dense<0.000000e+00> : vector<64x256xf32>
    %10 = tpu.matmul %8, %9, %cst_8 {dimension_numbers = #tpu.dot_dimension_numbers<[1], [0], [0], [1], [0, 0, 1, 1], [], []>} : vector<64x512xbf16>, vector<512x256xbf16>, vector<64x256xf32> -> vector<64x256xf32>
    %c0_9 = arith.constant 0 : index
    %c0_10 = arith.constant 0 : index
    %11 = vector.load %arg5[%c0_9, %c0_10] : memref<1x256xf32, #tpu.memory_space<vmem>>, vector<1x256xf32>
    %12 = vector.broadcast %11 : vector<1x256xf32> to vector<64x256xf32>
    %13 = arith.addf %10, %12 : vector<64x256xf32>
    %c0_11 = arith.constant 0 : index
    %c0_12 = arith.constant 0 : index
    %14 = vector.load %arg6[%c0_11, %c0_12] : memref<64x256xf32, #tpu.memory_space<vmem>>, vector<64x256xf32>
    tpu.vector_store %arg6[%c0_11, %c0_12], %13 {strides = array<i32>} : memref<64x256xf32, #tpu.memory_space<vmem>>, vector<64x256xf32>,
    return
  }
  func.func @transform_0(%arg0: i32) -> (i32, i32) {
    %c0_i32 = arith.constant 0 : i32
    %c0_i32_0 = arith.constant 0 : i32
    return %arg0, %c0_i32 : i32, i32
  }
  func.func @transform_1(%arg0: i32) -> (i32, i32) {
    %c0_i32 = arith.constant 0 : i32
    %c0_i32_0 = arith.constant 0 : i32
    %c0_i32_1 = arith.constant 0 : i32
    return %c0_i32, %c0_i32_0 : i32, i32
  }
  func.func @transform_2(%arg0: i32) -> (i32, i32) {
    %c0_i32 = arith.constant 0 : i32
    %c0_i32_0 = arith.constant 0 : i32
    %c0_i32_1 = arith.constant 0 : i32
    return %c0_i32, %c0_i32_0 : i32, i32
  }
  func.func @transform_3(%arg0: i32) -> (i32, i32) {
    %c0_i32 = arith.constant 0 : i32
    %c0_i32_0 = arith.constant 0 : i32
    %c0_i32_1 = arith.constant 0 : i32
    return %c0_i32, %c0_i32_0 : i32, i32
  }
  func.func @transform_4(%arg0: i32) -> (i32, i32) {
    %c0_i32 = arith.constant 0 : i32
    %c0_i32_0 = arith.constant 0 : i32
    %c0_i32_1 = arith.constant 0 : i32
    return %c0_i32, %c0_i32_0 : i32, i32
  }
  func.func @transform_5(%arg0: i32) -> (i32, i32) {
    %c0_i32 = arith.constant 0 : i32
    %c0_i32_0 = arith.constant 0 : i32
    return %arg0, %c0_i32 : i32, i32
  }
}

module attributes {stable_mosaic.version = 11 : i64} {
  func.func @_cls_loss_kernel(%arg0: memref<16x128xbf16, #tpu.memory_space<vmem>>, %arg1: memref<16x1xf32, #tpu.memory_space<vmem>>, %arg2: memref<128x128xbf16, #tpu.memory_space<vmem>>, %arg3: memref<128x512xbf16, #tpu.memory_space<vmem>>, %arg4: memref<1x512xf32, #tpu.memory_space<vmem>>, %arg5: memref<512x128xbf16, #tpu.memory_space<vmem>>, %arg6: memref<1x128xf32, #tpu.memory_space<vmem>>, %arg7: memref<1x16xf32, #tpu.memory_space<vmem>>, %arg8: memref<1x16xf32, #tpu.memory_space<vmem>>, %arg9: memref<16x4xf32, #tpu.memory_space<vmem>>, %arg10: memref<16x4xf32, #tpu.memory_space<vmem>>, %arg11: memref<16x4xf32, #tpu.memory_space<vmem>>, %arg12: memref<1x1xf32, #tpu.memory_space<vmem>>) attributes {dimension_semantics = [], scalar_prefetch = 0 : i64, scratch_operands = 0 : i64, tpu.core_type = #tpu.core_type<tc>} {
    %c0 = arith.constant 0 : index
    %c0_0 = arith.constant 0 : index
    %0 = vector.load %arg0[%c0, %c0_0] : memref<16x128xbf16, #tpu.memory_space<vmem>>, vector<16x128xbf16>
    %c0_1 = arith.constant 0 : index
    %c0_2 = arith.constant 0 : index
    %1 = vector.load %arg2[%c0_1, %c0_2] : memref<128x128xbf16, #tpu.memory_space<vmem>>, vector<128x128xbf16>
    %cst = arith.constant dense<0.000000e+00> : vector<16x128xf32>
    %2 = tpu.matmul %0, %1, %cst {dimension_numbers = #tpu.dot_dimension_numbers<[1], [0], [0], [1], [0, 0, 1, 1], [], []>} : vector<16x128xbf16>, vector<128x128xbf16>, vector<16x128xf32> -> vector<16x128xf32>
    %c0_3 = arith.constant 0 : index
    %c0_4 = arith.constant 0 : index
    %3 = vector.load %arg1[%c0_3, %c0_4] : memref<16x1xf32, #tpu.memory_space<vmem>>, vector<16x1xf32>
    %4 = vector.broadcast %3 : vector<16x1xf32> to vector<16x128xf32>
    %5 = arith.mulf %2, %4 : vector<16x128xf32>
    %6 = arith.truncf %5 : vector<16x128xf32> to vector<16x128xbf16>
    %c0_5 = arith.constant 0 : index
    %c0_6 = arith.constant 0 : index
    %7 = vector.load %arg3[%c0_5, %c0_6] : memref<128x512xbf16, #tpu.memory_space<vmem>>, vector<128x512xbf16>
    %cst_7 = arith.constant dense<0.000000e+00> : vector<16x512xf32>
    %8 = tpu.matmul %6, %7, %cst_7 {dimension_numbers = #tpu.dot_dimension_numbers<[1], [0], [0], [1], [0, 0, 1, 1], [], []>} : vector<16x128xbf16>, vector<128x512xbf16>, vector<16x512xf32> -> vector<16x512xf32>
    %c0_8 = arith.constant 0 : index
    %c0_9 = arith.constant 0 : index
    %9 = vector.load %arg4[%c0_8, %c0_9] : memref<1x512xf32, #tpu.memory_space<vmem>>, vector<1x512xf32>
    %10 = vector.broadcast %9 : vector<1x512xf32> to vector<16x512xf32>
    %11 = arith.addf %8, %10 : vector<16x512xf32>
    %cst_10 = arith.constant 0.000000e+00 : f32
    %12 = vector.broadcast %cst_10 : f32 to vector<16x512xf32>
    %13 = arith.maximumf %11, %12 : vector<16x512xf32>
    %14 = arith.truncf %13 : vector<16x512xf32> to vector<16x512xbf16>
    %c0_11 = arith.constant 0 : index
    %c0_12 = arith.constant 0 : index
    %15 = vector.load %arg5[%c0_11, %c0_12] : memref<512x128xbf16, #tpu.memory_space<vmem>>, vector<512x128xbf16>
    %cst_13 = arith.constant dense<0.000000e+00> : vector<16x128xf32>
    %16 = tpu.matmul %14, %15, %cst_13 {dimension_numbers = #tpu.dot_dimension_numbers<[1], [0], [0], [1], [0, 0, 1, 1], [], []>} : vector<16x512xbf16>, vector<512x128xbf16>, vector<16x128xf32> -> vector<16x128xf32>
    %c0_14 = arith.constant 0 : index
    %c0_15 = arith.constant 0 : index
    %17 = vector.load %arg6[%c0_14, %c0_15] : memref<1x128xf32, #tpu.memory_space<vmem>>, vector<1x128xf32>
    %18 = vector.broadcast %17 : vector<1x128xf32> to vector<16x128xf32>
    %19 = arith.addf %16, %18 : vector<16x128xf32>
    %20 = vector.extract_strided_slice %19 {offsets = [0, 0], sizes = [16, 4], strides = [1, 1]} : vector<16x128xf32> to vector<16x4xf32>
    %c0_16 = arith.constant 0 : index
    %c0_17 = arith.constant 0 : index
    %21 = vector.load %arg7[%c0_16, %c0_17] : memref<1x16xf32, #tpu.memory_space<vmem>>, vector<1x16xf32>
    %c0_18 = arith.constant 0 : index
    %c0_19 = arith.constant 0 : index
    %22 = vector.load %arg8[%c0_18, %c0_19] : memref<1x16xf32, #tpu.memory_space<vmem>>, vector<1x16xf32>
    %cst_20 = arith.constant 1.000000e+00 : f32
    %23 = vector.broadcast %cst_20 : f32 to vector<1x16xf32>
    %cst_21 = arith.constant 0.000000e+00 : f32
    %24 = vector.broadcast %cst_21 : f32 to vector<1x16xf32>
    %25 = arith.maximumf %21, %24 : vector<1x16xf32>
    %26 = arith.mulf %21, %23 : vector<1x16xf32>
    %27 = arith.subf %25, %26 : vector<1x16xf32>
    %28 = math.absf %21 : vector<1x16xf32>
    %cst_22 = arith.constant 0.000000e+00 : f32
    %29 = vector.broadcast %cst_22 : f32 to vector<1x16xf32>
    %30 = arith.subf %29, %28 : vector<1x16xf32>
    %31 = math.exp %30 : vector<1x16xf32>
    %cst_23 = arith.constant 1.000000e+00 : f32
    %32 = vector.broadcast %cst_23 : f32 to vector<1x16xf32>
    %33 = arith.addf %32, %31 : vector<1x16xf32>
    %34 = math.log %33 : vector<1x16xf32>
    %35 = arith.addf %27, %34 : vector<1x16xf32>
    %36 = vector.shape_cast %35 : vector<1x16xf32> to vector<1x1x16xf32>
    %cst_24 = arith.constant dense<0.000000e+00> : vector<1xf32>
    %37 = vector.multi_reduction <add>, %36, %cst_24 [1, 2] : vector<1x1x16xf32> to vector<1xf32>
    %38 = vector.shape_cast %37 : vector<1xf32> to vector<1x1x1xf32>
    %39 = vector.extract %38[0, 0, 0] : f32 from vector<1x1x1xf32>
    %cst_25 = arith.constant 0.000000e+00 : f32
    %40 = vector.broadcast %cst_25 : f32 to vector<1x16xf32>
    %cst_26 = arith.constant 0.000000e+00 : f32
    %41 = vector.broadcast %cst_26 : f32 to vector<1x16xf32>
    %42 = arith.maximumf %22, %41 : vector<1x16xf32>
    %43 = arith.mulf %22, %40 : vector<1x16xf32>
    %44 = arith.subf %42, %43 : vector<1x16xf32>
    %45 = math.absf %22 : vector<1x16xf32>
    %cst_27 = arith.constant 0.000000e+00 : f32
    %46 = vector.broadcast %cst_27 : f32 to vector<1x16xf32>
    %47 = arith.subf %46, %45 : vector<1x16xf32>
    %48 = math.exp %47 : vector<1x16xf32>
    %cst_28 = arith.constant 1.000000e+00 : f32
    %49 = vector.broadcast %cst_28 : f32 to vector<1x16xf32>
    %50 = arith.addf %49, %48 : vector<1x16xf32>
    %51 = math.log %50 : vector<1x16xf32>
    %52 = arith.addf %44, %51 : vector<1x16xf32>
    %53 = vector.shape_cast %52 : vector<1x16xf32> to vector<1x1x16xf32>
    %cst_29 = arith.constant dense<0.000000e+00> : vector<1xf32>
    %54 = vector.multi_reduction <add>, %53, %cst_29 [1, 2] : vector<1x1x16xf32> to vector<1xf32>
    %55 = vector.shape_cast %54 : vector<1xf32> to vector<1x1x1xf32>
    %56 = vector.extract %55[0, 0, 0] : f32 from vector<1x1x1xf32>
    %57 = arith.addf %39, %56 : f32
    %cst_30 = arith.constant 2.000000e+00 : f32
    %58 = arith.divf %57, %cst_30 : f32
    %c0_31 = arith.constant 0 : index
    %c0_32 = arith.constant 0 : index
    %59 = vector.load %arg9[%c0_31, %c0_32] : memref<16x4xf32, #tpu.memory_space<vmem>>, vector<16x4xf32>
    %c0_33 = arith.constant 0 : index
    %c0_34 = arith.constant 0 : index
    %60 = vector.load %arg10[%c0_33, %c0_34] : memref<16x4xf32, #tpu.memory_space<vmem>>, vector<16x4xf32>
    %61 = arith.subf %59, %60 : vector<16x4xf32>
    %62 = math.absf %61 : vector<16x4xf32>
    %cst_35 = arith.constant 1.000000e+00 : f32
    %63 = vector.broadcast %cst_35 : f32 to vector<16x4xf32>
    %64 = arith.cmpf olt, %62, %63 : vector<16x4xf32>
    %cst_36 = arith.constant 5.000000e-01 : f32
    %65 = vector.broadcast %cst_36 : f32 to vector<16x4xf32>
    %66 = arith.mulf %65, %61 : vector<16x4xf32>
    %67 = arith.mulf %66, %61 : vector<16x4xf32>
    %cst_37 = arith.constant 5.000000e-01 : f32
    %68 = vector.broadcast %cst_37 : f32 to vector<16x4xf32>
    %69 = arith.subf %62, %68 : vector<16x4xf32>
    %70 = arith.select %64, %67, %69 : vector<16x4xi1>, vector<16x4xf32>
    %71 = vector.shape_cast %70 : vector<16x4xf32> to vector<1x16x4xf32>
    %cst_38 = arith.constant dense<0.000000e+00> : vector<1xf32>
    %72 = vector.multi_reduction <add>, %71, %cst_38 [1, 2] : vector<1x16x4xf32> to vector<1xf32>
    %73 = vector.shape_cast %72 : vector<1xf32> to vector<1x1x1xf32>
    %74 = vector.extract %73[0, 0, 0] : f32 from vector<1x1x1xf32>
    %cst_39 = arith.constant 2.000000e+00 : f32
    %75 = arith.divf %74, %cst_39 : f32
    %cst_40 = arith.constant dense<0xFF800000> : vector<16xf32>
    %76 = vector.multi_reduction <maximumf>, %20, %cst_40 [1] : vector<16x4xf32> to vector<16xf32>
    %77 = vector.shape_cast %76 : vector<16xf32> to vector<16x1xf32>
    %78 = vector.broadcast %77 : vector<16x1xf32> to vector<16x4xf32>
    %79 = arith.subf %20, %78 : vector<16x4xf32>
    %80 = math.exp %79 : vector<16x4xf32>
    %cst_41 = arith.constant dense<0.000000e+00> : vector<16xf32>
    %81 = vector.multi_reduction <add>, %80, %cst_41 [1] : vector<16x4xf32> to vector<16xf32>
    %82 = vector.shape_cast %81 : vector<16xf32> to vector<16x1xf32>
    %83 = math.log %82 : vector<16x1xf32>
    %84 = arith.addf %77, %83 : vector<16x1xf32>
    %c0_42 = arith.constant 0 : index
    %c0_43 = arith.constant 0 : index
    %85 = vector.load %arg11[%c0_42, %c0_43] : memref<16x4xf32, #tpu.memory_space<vmem>>, vector<16x4xf32>
    %86 = vector.broadcast %84 : vector<16x1xf32> to vector<16x4xf32>
    %87 = arith.subf %20, %86 : vector<16x4xf32>
    %88 = arith.mulf %85, %87 : vector<16x4xf32>
    %89 = vector.shape_cast %88 : vector<16x4xf32> to vector<1x16x4xf32>
    %cst_44 = arith.constant dense<0.000000e+00> : vector<1xf32>
    %90 = vector.multi_reduction <add>, %89, %cst_44 [1, 2] : vector<1x16x4xf32> to vector<1xf32>
    %91 = vector.shape_cast %90 : vector<1xf32> to vector<1x1x1xf32>
    %92 = vector.extract %91[0, 0, 0] : f32 from vector<1x1x1xf32>
    %cst_45 = arith.constant 0.000000e+00 : f32
    %93 = arith.subf %cst_45, %92 : f32
    %cst_46 = arith.constant 1.600000e+01 : f32
    %94 = arith.divf %93, %cst_46 : f32
    %cst_47 = arith.constant 1.000000e+00 : f32
    %95 = arith.mulf %cst_47, %58 : f32
    %cst_48 = arith.constant 5.000000e+00 : f32
    %96 = arith.mulf %cst_48, %75 : f32
    %97 = arith.addf %95, %96 : f32
    %98 = arith.addf %97, %94 : f32
    %99 = vector.broadcast %98 : f32 to vector<1x1xf32>
    %c0_49 = arith.constant 0 : index
    %c0_50 = arith.constant 0 : index
    %100 = vector.load %arg12[%c0_49, %c0_50] : memref<1x1xf32, #tpu.memory_space<vmem>>, vector<1x1xf32>
    tpu.vector_store %arg12[%c0_49, %c0_50], %99 {strides = array<i32>} : memref<1x1xf32, #tpu.memory_space<vmem>>, vector<1x1xf32>,
    return
  }
}

</mosaic_0001>

<llo_original>
// kernel: two_stage_detector_forward.3
$region0: #{two_stage_detector_forward.3}
  #allocation0 [shape = 'u32[]', space=smem, size = 0x4, offset = 0x4, fixed_abs, tag = 'smem constant byte address 0x4 - core index']
  #allocation1 [shape = 'u32[72,128]{1,0:T(1,128)}', space=vmem, size = 0x9000, scoped, tag = 'internal scratch']
  %s0 = inlined_call_operand.vmem [shape: bf16[128,27], index: 0, kind: input, shape index: {}]
  %s1 = inlined_call_operand.vmem [shape: bf16[27,128], index: 1, kind: input, shape index: {}]
  %s2 = inlined_call_operand.vmem [shape: f32[1,128], index: 2, kind: input, shape index: {}]
  %s3 = inlined_call_operand.vmem [shape: f32[128,128], index: 3, kind: output, shape index: {}]
  %s4 = sld [smem:[#allocation0]]
  $region45: #{two_stage_detector_forward.3} parent=0
    _
  %s6 = ssub.s32 1, %s4
  %s7 = scalar_select 0, %s6, %s4
  loop: start=0, step=1, limit=4
  $region2: #{two_stage_detector_forward.3} parent=0 // loop_pre_header
    _
  $region3: #{two_stage_detector_forward.3} parent=0 // loop_header
    %s9 = sphi 0, %s13
    %p10 = scmp.ge.s32.totalorder %s9, 4
    %s19 = sphi 0, %s21
    %s22 = sphi 0, %s19
    %s23 = sphi 0, %s22
    %s39 = sphi 0, %s23
    %s43 = sphi 0, %s43
    %s45 = sphi 0, %s43
    %s46 = sphi 0, %s45
    %s60 = sphi 0, %s46
    %s64 = sphi 0, %s64
    %s66 = sphi 0, %s64
    %s67 = sphi 0, %s66
    %s81 = sphi 0, %s67
    %s87 = sphi 0, %s89
    %s90 = sphi 0, %s87
    %s91 = sphi 0, %s90
    %s107 = sphi 0, %s91
  $region4: #{two_stage_detector_forward.3} parent=0 // loop_header_branch
    %12 = sbr.rel (%p10) target = $region8
  $region5: #{two_stage_detector_forward.3} parent=0 // loop_body
    %s14 = ssub.s32 %s9, 1
    %s15 = ssub.s32 %s9, 2
    %s16 = sadd.s32 %s9, 1
    %s17 = ssub.s32 %s9, %s16
    %p18 = scmp.eq.s32.totalorder %s17, 0
    %s20 = sadd.s32 %s19, 1
    %s21 = scalar_select %p18, %s19, %s20
    %p24 = pneg %p18
    %p25 = scmp.eq.s32.totalorder %s9, 1
    %p26 = por %p24, %p25
    %p27 = scmp.ne.s32.totalorder %s19, %s22
    %p28 = scmp.eq.s32.totalorder %s9, 0
    %p29 = por %p27, %p28
    %p30 = scmp.ne.s32.totalorder %s19, %s22
    %p31 = scmp.eq.s32.totalorder %s14, 1
    %p32 = por %p30, %p31
    %p33 = scmp.ne.s32.totalorder %s22, %s23
    %p34 = scmp.eq.s32.totalorder %s14, 0
    %p35 = por %p33, %p34
    %p36 = scmp.ne.s32.totalorder %s22, %s23
    %p37 = scmp.eq.s32.totalorder %s15, 1
    %p38 = por %p36, %p37
    %p40 = scmp.ne.s32.totalorder %s23, %s39
    %p41 = scmp.eq.s32.totalorder %s15, 0
    %p42 = por %p40, %p41
    %s44 = sadd.s32 %s43, 1
    %p47 = scmp.eq.s32.totalorder %s9, 1
    %p48 = scmp.ne.s32.totalorder %s43, %s45
    %p49 = scmp.eq.s32.totalorder %s9, 0
    %p50 = por %p48, %p49
    %p51 = scmp.ne.s32.totalorder %s43, %s45
    %p52 = scmp.eq.s32.totalorder %s14, 1
    %p53 = por %p51, %p52
    %p54 = scmp.ne.s32.totalorder %s45, %s46
    %p55 = scmp.eq.s32.totalorder %s14, 0
    %p56 = por %p54, %p55
    %p57 = scmp.ne.s32.totalorder %s45, %s46
    %p58 = scmp.eq.s32.totalorder %s15, 1
    %p59 = por %p57, %p58
    %p61 = scmp.ne.s32.totalorder %s46, %s60
    %p62 = scmp.eq.s32.totalorder %s15, 0
    %p63 = por %p61, %p62
    %s65 = sadd.s32 %s64, 1
    %p68 = scmp.eq.s32.totalorder %s9, 1
    %p69 = scmp.ne.s32.totalorder %s64, %s66
    %p70 = scmp.eq.s32.totalorder %s9, 0
    %p71 = por %p69, %p70
    %p72 = scmp.ne.s32.totalorder %s64, %s66
    %p73 = scmp.eq.s32.totalorder %s14, 1
    %p74 = por %p72, %p73
    %p75 = scmp.ne.s32.totalorder %s66, %s67
    %p76 = scmp.eq.s32.totalorder %s14, 0
    %p77 = por %p75, %p76
    %p78 = scmp.ne.s32.totalorder %s66, %s67
    %p79 = scmp.eq.s32.totalorder %s15, 1
    %p80 = por %p78, %p79
    %p82 = scmp.ne.s32.totalorder %s67, %s81
    %p83 = scmp.eq.s32.totalorder %s15, 0
    %p84 = por %p82, %p83
    %s85 = ssub.s32 %s9, %s16
    %p86 = scmp.eq.s32.totalorder %s85, 0
    %s88 = sadd.s32 %s87, 1
    %s89 = scalar_select %p86, %s87, %s88
    %p92 = pneg %p86
    %p93 = scmp.eq.s32.totalorder %s9, 1
    %p94 = por %p92, %p93
    %p95 = scmp.ne.s32.totalorder %s87, %s90
    %p96 = scmp.eq.s32.totalorder %s9, 0
    %p97 = por %p95, %p96
    %p98 = scmp.ne.s32.totalorder %s87, %s90
    %p99 = scmp.eq.s32.totalorder %s14, 1
    %p100 = por %p98, %p99
    %p101 = scmp.ne.s32.totalorder %s90, %s91
    %p102 = scmp.eq.s32.totalorder %s14, 0
    %p103 = por %p101, %p102
    %p104 = scmp.ne.s32.totalorder %s90, %s91
    %p105 = scmp.eq.s32.totalorder %s15, 1
    %p106 = por %p104, %p105
    %p108 = scmp.ne.s32.totalorder %s91, %s107
    %p109 = scmp.eq.s32.totalorder %s15, 0
    %p110 = por %p108, %p109
    %p111 = scmp.le.s32.totalorder 1, %s9
    %p112 = scmp.lt.s32.totalorder %s9, 3
    %p113 = pnand %p111, %p112
    %p114 = pneg %p113
    // Predicated region
    $region9: #{two_stage_detector_forward.3} parent=5 // pred_check
      _
    $region10: #{two_stage_detector_forward.3} parent=5 // pred_check_branch
      %116 = sbr.rel (%p113) target = $region12
    $region11: #{two_stage_detector_forward.3} parent=5 // pred_region
      %s117 = ssub.s32 %s9, 1
      // Predicated region
      $region13: #{two_stage_detector_forward.3} parent=11 // pred_check
        %p118 = pneg %p56
      $region14: #{two_stage_detector_forward.3} parent=11 // pred_check_branch
        %120 = sbr.rel (%p118) target = $region16
      $region15: #{two_stage_detector_forward.3} parent=11 // pred_region
        _
      $region16: #{two_stage_detector_forward.3} parent=11 // pred_fallthru
        _
      // Predicated region
      $region17: #{two_stage_detector_forward.3} parent=11 // pred_check
        %p121 = pneg %p77
      $region18: #{two_stage_detector_forward.3} parent=11 // pred_check_branch
        %123 = sbr.rel (%p121) target = $region20
      $region19: #{two_stage_detector_forward.3} parent=11 // pred_region
        _
      $region20: #{two_stage_detector_forward.3} parent=11 // pred_fallthru
        _
    $region12: #{two_stage_detector_forward.3} parent=5 // pred_fallthru
      _
    %p124 = scmp.lt.s32.totalorder %s9, 2
    // Predicated region
    $region21: #{two_stage_detector_forward.3} parent=5 // pred_check
      %p125 = pneg %p124
    $region22: #{two_stage_detector_forward.3} parent=5 // pred_check_branch
      %127 = sbr.rel (%p125) target = $region24
    $region23: #{two_stage_detector_forward.3} parent=5 // pred_region
      // Predicated region
      $region25: #{two_stage_detector_forward.3} parent=23 // pred_check
        %p128 = pneg %p29
      $region26: #{two_stage_detector_forward.3} parent=23 // pred_check_branch
        %130 = sbr.rel (%p128) target = $region28
      $region27: #{two_stage_detector_forward.3} parent=23 // pred_region
        %s131 = smul.u32 8, %s9
        %p132 = scmp.lt.s32.totalorder %s131, 15
        %s133 = scalar_select %p132, %s131, 15
        %s134 = smul.addr %s133, 4
        %s135 = scalar_lea.vmem %s0, %s134
        %s136 = smul.u32 8, %s9
      $region28: #{two_stage_detector_forward.3} parent=23 // pred_fallthru
        _
    $region24: #{two_stage_detector_forward.3} parent=5 // pred_fallthru
      _
    %p137 = scmp.le.s32.totalorder 1, %s9
    %p138 = scmp.lt.s32.totalorder %s9, 3
    %p139 = pnand %p137, %p138
    %p140 = pneg %p139
    // Predicated region
    $region29: #{two_stage_detector_forward.3} parent=5 // pred_check
      _
    $region30: #{two_stage_detector_forward.3} parent=5 // pred_check_branch
      %142 = sbr.rel (%p139) target = $region32
    $region31: #{two_stage_detector_forward.3} parent=5 // pred_region
      %s143 = ssub.s32 %s9, 1
      %s144 = smul.u32 8, %s14
      %p145 = scmp.lt.s32.totalorder %s144, 15
      %s146 = scalar_select %p145, %s144, 15
      %s147 = smul.addr %s146, 4
      %s148 = scalar_lea.vmem %s0, %s147
      %p149 = pneg %p35
      %p150 = pneg %p32
      %p151 = pneg %p56
      %p152 = pneg %p53
      %p153 = pneg %p77
      %p154 = pneg %p74
      %p155 = pneg %p103
      %p156 = pneg %p100
      %s157 = smul.u32 8, %s14
      %p158 = scmp.lt.s32.totalorder %s157, 15
      %s159 = scalar_select %p158, %s157, 15
      %s160 = smul.addr %s159, 8
      %s161 = scalar_lea.vmem %s3, %s160
      %s162 = smul.u32 8, %s14
      %p163 = scmp.lt.s32.totalorder %s162, 15
      %s164 = scalar_select %p163, %s162, 15
      %s165 = smul.addr %s164, 4
      %s166 = scalar_lea.vmem %s0, %s165
      %s167 = smul.u32 8, %s14
      %s168 = smul.u32 8, %s14
      %p169 = scmp.lt.s32.totalorder %s168, 15
      %s170 = scalar_select %p169, %s168, 15
      %s171 = smul.addr %s170, 8
      %s172 = scalar_lea.vmem %s3, %s171
      %s173 = smul.u32 8, %s14
      %v175 = vld [vmem:[%s166] sm:$0xf]
      %v176 = vld [vmem:[%s166 + $0x4] sm:$0xf]
      %v177 = vld [vmem:[%s166 + $0x8] sm:$0xf]
      %v178 = vld [vmem:[%s166 + $0xc] sm:$0xf]
      %v179 = vld [vmem:[%s166 + $0x10] sm:$0xf]
      %v180 = vld [vmem:[%s166 + $0x14] sm:$0xf]
      %v181 = vld [vmem:[%s166 + $0x18] sm:$0xf]
      %v182 = vld [vmem:[%s166 + $0x1c] sm:$0xf]
      %v183 = vld [vmem:[%s1] sm:$0xf]
      %v184 = vld [vmem:[%s1 + $0x4] sm:$0xf]
      %v185 = vld [vmem:[%s1 + $0x8] sm:$0xf]
      %v186 = vld [vmem:[%s1 + $0xc] sm:$0x3]
      %v187 = vld [vmem:[%s2] sm:$0x1]
      %v189 = vperm.slane %v187, 0
      %v199 = vunpack.c.l.b16 %v175
      %v200 = vunpack.c.l.b16 %v176
      %v201 = vunpack.c.l.b16 %v177
      %v202 = vunpack.c.l.b16 %v178
      %v203 = vunpack.c.l.b16 %v179
      %v204 = vunpack.c.l.b16 %v180
      %v205 = vunpack.c.l.b16 %v181
      %v206 = vunpack.c.l.b16 %v182
      %v207 = vpack.c.b16 %v200, %v199
      %v208 = vpack.c.b16 %v202, %v201
      %v209 = vpack.c.b16 %v204, %v203
      %v210 = vpack.c.b16 %v206, %v205
      %v215 = vunpack.c.l.b16 %v183
      %v216 = vunpack.c.l.b16 %v184
      %v217 = vunpack.c.l.b16 %v185
      %v218 = vunpack.c.l.b16 %v186
      %v219 = vpack.c.b16 %v216, %v215
      %v220 = vpack.c.b16 %v218, %v217
      %vm222 = vcmask 220160
      %v224 = vsel %vm222, %v207, 0
      %v227 = vsel %vm222, %v208, 0
      %v230 = vsel %vm222, %v209, 0
      %v233 = vsel %vm222, %v210, 0
      %vm235 = vcmask 1044480
      %vm236 = vcmask 1045504
      %v237 = vsel %vm235, 4294967295, 65535
      %v238 = vsel %vm236, %v237, 0
      %v240 = vand.u32 %v220, %v238
      %242 = vmatpush.bf16.msra.mxu0 0
      %243 = vmatpush.bf16.msra.mxu0 0
      %244 = vmatpush.bf16.msra.mxu0 0
      %245 = vmatpush.bf16.msra.mxu0 0
      %246 = vmatpush.bf16.msra.mxu0 0
      %247 = vmatpush.bf16.msra.mxu0 0
      %248 = vmatpush.bf16.msra.mxu0 %v240
      %249 = vmatpush.bf16.msra.mxu0 %v219
      %250 = vmatmul.bf16.gmra.mxu0 %v224
      %v251 = vpop.f32.mrf.mxu0
      %v252 = vadd.f32 %v189, %v251
      %v253 = vpop.f32.mrf.mxu0
      %v254 = vadd.f32 %v189, %v253
      %255 = vmatmul.bf16.gmra.mxu0 %v227
      %v256 = vpop.f32.mrf.mxu0
      %v257 = vadd.f32 %v189, %v256
      %v258 = vpop.f32.mrf.mxu0
      %v259 = vadd.f32 %v189, %v258
      %260 = vmatmul.bf16.gmra.mxu0 %v230
      %v261 = vpop.f32.mrf.mxu0
      %v262 = vadd.f32 %v189, %v261
      %v263 = vpop.f32.mrf.mxu0
      %v264 = vadd.f32 %v189, %v263
      %265 = vmatmul.bf16.gmra.mxu0 %v233
      %v266 = vpop.f32.mrf.mxu0
      %v267 = vadd.f32 %v189, %v266
      %v268 = vpop.f32.mrf.mxu0
      %v269 = vadd.f32 %v189, %v268
      %270 = vdwg.mxu0
      %v271 = vmax.f32 %v252, 0.0
      %v272 = vmax.f32 %v254, 0.0
      %v273 = vmax.f32 %v257, 0.0
      %v274 = vmax.f32 %v259, 0.0
      %v275 = vmax.f32 %v262, 0.0
      %v276 = vmax.f32 %v264, 0.0
      %v277 = vmax.f32 %v267, 0.0
      %v278 = vmax.f32 %v269, 0.0
      %279 = vst [vmem:[%s172] sm:$0xff] %v271
      %280 = vst [vmem:[%s172 + $0x8] sm:$0xff] %v272
      %281 = vst [vmem:[%s172 + $0x10] sm:$0xff] %v273
      %282 = vst [vmem:[%s172 + $0x18] sm:$0xff] %v274
      %283 = vst [vmem:[%s172 + $0x20] sm:$0xff] %v275
      %284 = vst [vmem:[%s172 + $0x28] sm:$0xff] %v276
      %285 = vst [vmem:[%s172 + $0x30] sm:$0xff] %v277
      %286 = vst [vmem:[%s172 + $0x38] sm:$0xff] %v278
      %s287 = smul.u32 8, %s14
      %p288 = scmp.lt.s32.totalorder %s287, 15
      %s289 = scalar_select %p288, %s287, 15
      %s290 = smul.addr %s289, 8
      %s291 = scalar_lea.vmem %s3, %s290
      // Predicated region
      $region33: #{two_stage_detector_forward.3} parent=31 // pred_check
        %p292 = pneg %p100
      $region34: #{two_stage_detector_forward.3} parent=31 // pred_check_branch
        %294 = sbr.rel (%p292) target = $region36
      $region35: #{two_stage_detector_forward.3} parent=31 // pred_region
        %s295 = smul.u32 8, %s14
      $region36: #{two_stage_detector_forward.3} parent=31 // pred_fallthru
        _
    $region32: #{two_stage_detector_forward.3} parent=5 // pred_fallthru
      _
    %p296 = scmp.le.s32.totalorder 2, %s9
    // Predicated region
    $region37: #{two_stage_detector_forward.3} parent=5 // pred_check
      %p297 = pneg %p296
    $region38: #{two_stage_detector_forward.3} parent=5 // pred_check_branch
      %299 = sbr.rel (%p297) target = $region40
    $region39: #{two_stage_detector_forward.3} parent=5 // pred_region
      %s300 = ssub.s32 %s9, 2
      // Predicated region
      $region41: #{two_stage_detector_forward.3} parent=39 // pred_check
        %p301 = pneg %p106
      $region42: #{two_stage_detector_forward.3} parent=39 // pred_check_branch
        %303 = sbr.rel (%p301) target = $region44
      $region43: #{two_stage_detector_forward.3} parent=39 // pred_region
        %s304 = smul.u32 8, %s15
        %p305 = scmp.lt.s32.totalorder %s304, 15
        %s306 = scalar_select %p305, %s304, 15
        %s307 = smul.addr %s306, 8
        %s308 = scalar_lea.vmem %s3, %s307
      $region44: #{two_stage_detector_forward.3} parent=39 // pred_fallthru
        _
    $region40: #{two_stage_detector_forward.3} parent=5 // pred_fallthru
      _
  $region6: #{two_stage_detector_forward.3} parent=0 // loop_footer
    %s13 = sadd.s32 1, %s9
  $region7: #{two_stage_detector_forward.3} parent=0 // loop_footer_branch
    %8 = sbr.rel target = $region3
  $region8: #{two_stage_detector_forward.3} parent=0 // loop_exit
    _

// kernel: neg.3
$region0: #{neg.3}
  #allocation0 [shape = 's32[1]{0}', space=sflag, size = 0x4, scoped, tag = 'scoped memory for neg.3']
  %s0 = inlined_call_operand.vmem [shape: f32[1920], index: 0, kind: input, shape index: {}]
  %s1 = inlined_call_operand.vmem [shape: f32[1920], index: 1, kind: output, shape index: {}]
  %v2 = vld [vmem:[%s0] sm:$0xff]
  %3 = xla_tuple %v2
  %4 = xla_tuple %3
  %v5 = vxor.u32 %v2, 2147483648
  %6 = xla_tuple %v5
  %7 = vst [vmem:[%s1] sm:$0xff] %v5
  %s8 = scalar_lea.vmem %s0, 8
  %v9 = vld [vmem:[%s8] sm:$0xff]
  %10 = xla_tuple %v9
  %11 = xla_tuple %10
  %v12 = vxor.u32 %v9, 2147483648
  %13 = xla_tuple %v12
  %s14 = scalar_lea.vmem %s1, 8
  %15 = vst [vmem:[%s14] sm:$0xff] %v12

// kernel: two_stage_detector_forward.4
$region0: #{two_stage_detector_forward.4}
  #allocation0 [shape = 'u32[]', space=smem, size = 0x4, offset = 0x4, fixed_abs, tag = 'smem constant byte address 0x4 - core index']
  #allocation1 [shape = 'u32[72,128]{1,0:T(1,128)}', space=vmem, size = 0x9000, scoped, tag = 'internal scratch']
  %s0 = inlined_call_operand.vmem [shape: bf16[128,1152], index: 0, kind: input, shape index: {}]
  %s1 = inlined_call_operand.vmem [shape: bf16[1152,512], index: 1, kind: input, shape index: {}]
  %s2 = inlined_call_operand.vmem [shape: f32[1,512], index: 2, kind: input, shape index: {}]
  %s3 = inlined_call_operand.vmem [shape: bf16[512,256], index: 3, kind: input, shape index: {}]
  %s4 = inlined_call_operand.vmem [shape: f32[1,256], index: 4, kind: input, shape index: {}]
  %s5 = inlined_call_operand.vmem [shape: f32[128,256], index: 5, kind: output, shape index: {}]
  %s6 = sld [smem:[#allocation0]]
  $region53: #{two_stage_detector_forward.4} parent=0
    _
  %s8 = ssub.s32 1, %s6
  %s9 = scalar_select 0, %s8, %s6
  loop: start=0, step=1, limit=4
  $region2: #{two_stage_detector_forward.4} parent=0 // loop_pre_header
    _
  $region3: #{two_stage_detector_forward.4} parent=0 // loop_header
    %s11 = sphi 0, %s15
    %p12 = scmp.ge.s32.totalorder %s11, 4
    %s21 = sphi 0, %s23
    %s24 = sphi 0, %s21
    %s25 = sphi 0, %s24
    %s41 = sphi 0, %s25
    %s45 = sphi 0, %s45
    %s47 = sphi 0, %s45
    %s48 = sphi 0, %s47
    %s62 = sphi 0, %s48
    %s66 = sphi 0, %s66
    %s68 = sphi 0, %s66
    %s69 = sphi 0, %s68
    %s83 = sphi 0, %s69
    %s87 = sphi 0, %s87
    %s89 = sphi 0, %s87
    %s90 = sphi 0, %s89
    %s104 = sphi 0, %s90
    %s108 = sphi 0, %s108
    %s110 = sphi 0, %s108
    %s111 = sphi 0, %s110
    %s125 = sphi 0, %s111
    %s131 = sphi 0, %s133
    %s134 = sphi 0, %s131
    %s135 = sphi 0, %s134
    %s151 = sphi 0, %s135
  $region4: #{two_stage_detector_forward.4} parent=0 // loop_header_branch
    %14 = sbr.rel (%p12) target = $region8
  $region5: #{two_stage_detector_forward.4} parent=0 // loop_body
    %s16 = ssub.s32 %s11, 1
    %s17 = ssub.s32 %s11, 2
    %s18 = sadd.s32 %s11, 1
    %s19 = ssub.s32 %s11, %s18
    %p20 = scmp.eq.s32.totalorder %s19, 0
    %s22 = sadd.s32 %s21, 1
    %s23 = scalar_select %p20, %s21, %s22
    %p26 = pneg %p20
    %p27 = scmp.eq.s32.totalorder %s11, 1
    %p28 = por %p26, %p27
    %p29 = scmp.ne.s32.totalorder %s21, %s24
    %p30 = scmp.eq.s32.totalorder %s11, 0
    %p31 = por %p29, %p30
    %p32 = scmp.ne.s32.totalorder %s21, %s24
    %p33 = scmp.eq.s32.totalorder %s16, 1
    %p34 = por %p32, %p33
    %p35 = scmp.ne.s32.totalorder %s24, %s25
    %p36 = scmp.eq.s32.totalorder %s16, 0
    %p37 = por %p35, %p36
    %p38 = scmp.ne.s32.totalorder %s24, %s25
    %p39 = scmp.eq.s32.totalorder %s17, 1
    %p40 = por %p38, %p39
    %p42 = scmp.ne.s32.totalorder %s25, %s41
    %p43 = scmp.eq.s32.totalorder %s17, 0
    %p44 = por %p42, %p43
    %s46 = sadd.s32 %s45, 1
    %p49 = scmp.eq.s32.totalorder %s11, 1
    %p50 = scmp.ne.s32.totalorder %s45, %s47
    %p51 = scmp.eq.s32.totalorder %s11, 0
    %p52 = por %p50, %p51
    %p53 = scmp.ne.s32.totalorder %s45, %s47
    %p54 = scmp.eq.s32.totalorder %s16, 1
    %p55 = por %p53, %p54
    %p56 = scmp.ne.s32.totalorder %s47, %s48
    %p57 = scmp.eq.s32.totalorder %s16, 0
    %p58 = por %p56, %p57
    %p59 = scmp.ne.s32.totalorder %s47, %s48
    %p60 = scmp.eq.s32.totalorder %s17, 1
    %p61 = por %p59, %p60
    %p63 = scmp.ne.s32.totalorder %s48, %s62
    %p64 = scmp.eq.s32.totalorder %s17, 0
    %p65 = por %p63, %p64
    %s67 = sadd.s32 %s66, 1
    %p70 = scmp.eq.s32.totalorder %s11, 1
    %p71 = scmp.ne.s32.totalorder %s66, %s68
    %p72 = scmp.eq.s32.totalorder %s11, 0
    %p73 = por %p71, %p72
    %p74 = scmp.ne.s32.totalorder %s66, %s68
    %p75 = scmp.eq.s32.totalorder %s16, 1
    %p76 = por %p74, %p75
    %p77 = scmp.ne.s32.totalorder %s68, %s69
    %p78 = scmp.eq.s32.totalorder %s16, 0
    %p79 = por %p77, %p78
    %p80 = scmp.ne.s32.totalorder %s68, %s69
    %p81 = scmp.eq.s32.totalorder %s17, 1
    %p82 = por %p80, %p81
    %p84 = scmp.ne.s32.totalorder %s69, %s83
    %p85 = scmp.eq.s32.totalorder %s17, 0
    %p86 = por %p84, %p85
    %s88 = sadd.s32 %s87, 1
    %p91 = scmp.eq.s32.totalorder %s11, 1
    %p92 = scmp.ne.s32.totalorder %s87, %s89
    %p93 = scmp.eq.s32.totalorder %s11, 0
    %p94 = por %p92, %p93
    %p95 = scmp.ne.s32.totalorder %s87, %s89
    %p96 = scmp.eq.s32.totalorder %s16, 1
    %p97 = por %p95, %p96
    %p98 = scmp.ne.s32.totalorder %s89, %s90
    %p99 = scmp.eq.s32.totalorder %s16, 0
    %p100 = por %p98, %p99
    %p101 = scmp.ne.s32.totalorder %s89, %s90
    %p102 = scmp.eq.s32.totalorder %s17, 1
    %p103 = por %p101, %p102
    %p105 = scmp.ne.s32.totalorder %s90, %s104
    %p106 = scmp.eq.s32.totalorder %s17, 0
    %p107 = por %p105, %p106
    %s109 = sadd.s32 %s108, 1
    %p112 = scmp.eq.s32.totalorder %s11, 1
    %p113 = scmp.ne.s32.totalorder %s108, %s110
    %p114 = scmp.eq.s32.totalorder %s11, 0
    %p115 = por %p113, %p114
    %p116 = scmp.ne.s32.totalorder %s108, %s110
    %p117 = scmp.eq.s32.totalorder %s16, 1
    %p118 = por %p116, %p117
    %p119 = scmp.ne.s32.totalorder %s110, %s111
    %p120 = scmp.eq.s32.totalorder %s16, 0
    %p121 = por %p119, %p120
    %p122 = scmp.ne.s32.totalorder %s110, %s111
    %p123 = scmp.eq.s32.totalorder %s17, 1
    %p124 = por %p122, %p123
    %p126 = scmp.ne.s32.totalorder %s111, %s125
    %p127 = scmp.eq.s32.totalorder %s17, 0
    %p128 = por %p126, %p127
    %s129 = ssub.s32 %s11, %s18
    %p130 = scmp.eq.s32.totalorder %s129, 0
    %s132 = sadd.s32 %s131, 1
    %s133 = scalar_select %p130, %s131, %s132
    %p136 = pneg %p130
    %p137 = scmp.eq.s32.totalorder %s11, 1
    %p138 = por %p136, %p137
    %p139 = scmp.ne.s32.totalorder %s131, %s134
    %p140 = scmp.eq.s32.totalorder %s11, 0
    %p141 = por %p139, %p140
    %p142 = scmp.ne.s32.totalorder %s131, %s134
    %p143 = scmp.eq.s32.totalorder %s16, 1
    %p144 = por %p142, %p143
    %p145 = scmp.ne.s32.totalorder %s134, %s135
    %p146 = scmp.eq.s32.totalorder %s16, 0
    %p147 = por %p145, %p146
    %p148 = scmp.ne.s32.totalorder %s134, %s135
    %p149 = scmp.eq.s32.totalorder %s17, 1
    %p150 = por %p148, %p149
    %p152 = scmp.ne.s32.totalorder %s135, %s151
    %p153 = scmp.eq.s32.totalorder %s17, 0
    %p154 = por %p152, %p153
    %p155 = scmp.le.s32.totalorder 1, %s11
    %p156 = scmp.lt.s32.totalorder %s11, 3
    %p157 = pnand %p155, %p156
    %p158 = pneg %p157
    // Predicated region
    $region9: #{two_stage_detector_forward.4} parent=5 // pred_check
      _
    $region10: #{two_stage_detector_forward.4} parent=5 // pred_check_branch
      %160 = sbr.rel (%p157) target = $region12
    $region11: #{two_stage_detector_forward.4} parent=5 // pred_region
      %s161 = ssub.s32 %s11, 1
      // Predicated region
      $region13: #{two_stage_detector_forward.4} parent=11 // pred_check
        %p162 = pneg %p58
      $region14: #{two_stage_detector_forward.4} parent=11 // pred_check_branch
        %164 = sbr.rel (%p162) target = $region16
      $region15: #{two_stage_detector_forward.4} parent=11 // pred_region
        _
      $region16: #{two_stage_detector_forward.4} parent=11 // pred_fallthru
        _
      // Predicated region
      $region17: #{two_stage_detector_forward.4} parent=11 // pred_check
        %p165 = pneg %p79
      $region18: #{two_stage_detector_forward.4} parent=11 // pred_check_branch
        %167 = sbr.rel (%p165) target = $region20
      $region19: #{two_stage_detector_forward.4} parent=11 // pred_region
        _
      $region20: #{two_stage_detector_forward.4} parent=11 // pred_fallthru
        _
      // Predicated region
      $region21: #{two_stage_detector_forward.4} parent=11 // pred_check
        %p168 = pneg %p100
      $region22: #{two_stage_detector_forward.4} parent=11 // pred_check_branch
        %170 = sbr.rel (%p168) target = $region24
      $region23: #{two_stage_detector_forward.4} parent=11 // pred_region
        _
      $region24: #{two_stage_detector_forward.4} parent=11 // pred_fallthru
        _
      // Predicated region
      $region25: #{two_stage_detector_forward.4} parent=11 // pred_check
        %p171 = pneg %p121
      $region26: #{two_stage_detector_forward.4} parent=11 // pred_check_branch
        %173 = sbr.rel (%p171) target = $region28
      $region27: #{two_stage_detector_forward.4} parent=11 // pred_region
        _
      $region28: #{two_stage_detector_forward.4} parent=11 // pred_fallthru
        _
    $region12: #{two_stage_detector_forward.4} parent=5 // pred_fallthru
      _
    %p174 = scmp.lt.s32.totalorder %s11, 2
    // Predicated region
    $region29: #{two_stage_detector_forward.4} parent=5 // pred_check
      %p175 = pneg %p174
    $region30: #{two_stage_detector_forward.4} parent=5 // pred_check_branch
      %177 = sbr.rel (%p175) target = $region32
    $region31: #{two_stage_detector_forward.4} parent=5 // pred_region
      // Predicated region
      $region33: #{two_stage_detector_forward.4} parent=31 // pred_check
        %p178 = pneg %p31
      $region34: #{two_stage_detector_forward.4} parent=31 // pred_check_branch
        %180 = sbr.rel (%p178) target = $region36
      $region35: #{two_stage_detector_forward.4} parent=31 // pred_region
        %s181 = smul.u32 8, %s11
        %p182 = scmp.lt.s32.totalorder %s181, 15
        %s183 = scalar_select %p182, %s181, 15
        %s184 = smul.addr %s183, 9
        %s185 = smul.addr %s184, 4
        %s186 = scalar_lea.vmem %s0, %s185
        %s187 = smul.u32 8, %s11
      $region36: #{two_stage_detector_forward.4} parent=31 // pred_fallthru
        _
    $region32: #{two_stage_detector_forward.4} parent=5 // pred_fallthru
      _
    %p188 = scmp.le.s32.totalorder 1, %s11
    %p189 = scmp.lt.s32.totalorder %s11, 3
    %p190 = pnand %p188, %p189
    %p191 = pneg %p190
    // Predicated region
    $region37: #{two_stage_detector_forward.4} parent=5 // pred_check
      _
    $region38: #{two_stage_detector_forward.4} parent=5 // pred_check_branch
      %193 = sbr.rel (%p190) target = $region40
    $region39: #{two_stage_detector_forward.4} parent=5 // pred_region
      %s194 = ssub.s32 %s11, 1
      %s195 = smul.u32 8, %s16
      %p196 = scmp.lt.s32.totalorder %s195, 15
      %s197 = scalar_select %p196, %s195, 15
      %s198 = smul.addr %s197, 9
      %s199 = smul.addr %s198, 4
      %s200 = scalar_lea.vmem %s0, %s199
      %p201 = pneg %p37
      %p202 = pneg %p34
      %p203 = pneg %p58
      %p204 = pneg %p55
      %p205 = pneg %p79
      %p206 = pneg %p76
      %p207 = pneg %p100
      %p208 = pneg %p97
      %p209 = pneg %p121
      %p210 = pneg %p118
      %p211 = pneg %p147
      %p212 = pneg %p144
      %s213 = smul.u32 8, %s16
      %p214 = scmp.lt.s32.totalorder %s213, 15
      %s215 = scalar_select %p214, %s213, 15
      %s216 = smul.addr %s215, 2
      %s217 = smul.addr %s216, 8
      %s218 = scalar_lea.vmem %s5, %s217
      %s219 = smul.u32 8, %s16
      %p220 = scmp.lt.s32.totalorder %s219, 15
      %s221 = scalar_select %p220, %s219, 15
      %s222 = smul.addr %s221, 9
      %s223 = smul.addr %s222, 4
      %s224 = scalar_lea.vmem %s0, %s223
      %s225 = smul.u32 8, %s16
      %s226 = smul.u32 8, %s16
      %p227 = scmp.lt.s32.totalorder %s226, 15
      %s228 = scalar_select %p227, %s226, 15
      %s229 = smul.addr %s228, 2
      %s230 = smul.addr %s229, 8
      %s231 = scalar_lea.vmem %s5, %s230
      %s232 = smul.u32 8, %s16
      %v233 = vld [vmem:[%s224] sm:$0xff]
      %v234 = vld [vmem:[%s224 + $0x8] sm:$0xff]
      %v235 = vld [vmem:[%s224 + $0x10] sm:$0xff]
      %v236 = vld [vmem:[%s224 + $0x18] sm:$0xff]
      %v237 = vld [vmem:[%s224 + $0x20] sm:$0xf]
      %v238 = vld [vmem:[%s224 + $0x24] sm:$0xff]
      %v239 = vld [vmem:[%s224 + $0x2c] sm:$0xff]
      %v240 = vld [vmem:[%s224 + $0x34] sm:$0xff]
      %v241 = vld [vmem:[%s224 + $0x3c] sm:$0xff]
      %v242 = vld [vmem:[%s224 + $0x44] sm:$0xf]
      %v243 = vld [vmem:[%s224 + $0x48] sm:$0xff]
      %v244 = vld [vmem:[%s224 + $0x50] sm:$0xff]
      %v245 = vld [vmem:[%s224 + $0x58] sm:$0xff]
      %v246 = vld [vmem:[%s224 + $0x60] sm:$0xff]
      %v247 = vld [vmem:[%s224 + $0x68] sm:$0xf]
      %v248 = vld [vmem:[%s224 + $0x6c] sm:$0xff]
      %v249 = vld [vmem:[%s224 + $0x74] sm:$0xff]
      %v250 = vld [vmem:[%s224 + $0x7c] sm:$0xff]
      %v251 = vld [vmem:[%s224 + $0x84] sm:$0xff]
      %v252 = vld [vmem:[%s224 + $0x8c] sm:$0xf]
      %v253 = vld [vmem:[%s224 + $0x90] sm:$0xff]
      %v254 = vld [vmem:[%s224 + $0x98] sm:$0xff]
      %v255 = vld [vmem:[%s224 + $0xa0] sm:$0xff]
      %v256 = vld [vmem:[%s224 + $0xa8] sm:$0xff]
      %v257 = vld [vmem:[%s224 + $0xb0] sm:$0xf]
      %v258 = vld [vmem:[%s224 + $0xb4] sm:$0xff]
      %v259 = vld [vmem:[%s224 + $0xbc] sm:$0xff]
      %v260 = vld [vmem:[%s224 + $0xc4] sm:$0xff]
      %v261 = vld [vmem:[%s224 + $0xcc] sm:$0xff]
      %v262 = vld [vmem:[%s224 + $0xd4] sm:$0xf]
      %v263 = vld [vmem:[%s224 + $0xd8] sm:$0xff]
      %v264 = vld [vmem:[%s224 + $0xe0] sm:$0xff]
      %v265 = vld [vmem:[%s224 + $0xe8] sm:$0xff]
      %v266 = vld [vmem:[%s224 + $0xf0] sm:$0xff]
      %v267 = vld [vmem:[%s224 + $0xf8] sm:$0xf]
      %v268 = vld [vmem:[%s224 + $0xfc] sm:$0xff]
      %v269 = vld [vmem:[%s224 + $0x104] sm:$0xff]
      %v270 = vld [vmem:[%s224 + $0x10c] sm:$0xff]
      %v271 = vld [vmem:[%s224 + $0x114] sm:$0xff]
      %v272 = vld [vmem:[%s224 + $0x11c] sm:$0xf]
      %v273 = vld [vmem:[%s1] sm:$0xff]
      %v274 = vld [vmem:[%s1 + $0x8] sm:$0xff]
      %v275 = vld [vmem:[%s1 + $0x10] sm:$0xff]
      %v276 = vld [vmem:[%s1 + $0x18] sm:$0xff]
      %v277 = vld [vmem:[%s1 + $0x20] sm:$0xff]
      %v278 = vld [vmem:[%s1 + $0x28] sm:$0xff]
      %v279 = vld [vmem:[%s1 + $0x30] sm:$0xff]
      %v280 = vld [vmem:[%s1 + $0x38] sm:$0xff]
      %v281 = vld [vmem:[%s1 + $0x40] sm:$0xff]
      %v282 = vld [vmem:[%s1 + $0x48] sm:$0xff]
      %v283 = vld [vmem:[%s1 + $0x50] sm:$0xff]
      %v284 = vld [vmem:[%s1 + $0x58] sm:$0xff]
      %v285 = vld [vmem:[%s1 + $0x60] sm:$0xff]
      %v286 = vld [vmem:[%s1 + $0x68] sm:$0xff]
      %v287 = vld [vmem:[%s1 + $0x70] sm:$0xff]
      %v288 = vld [vmem:[%s1 + $0x78] sm:$0xff]
      %v289 = vld [vmem:[%s1 + $0x80] sm:$0xff]
      %v290 = vld [vmem:[%s1 + $0x88] sm:$0xff]
      %v291 = vld [vmem:[%s1 + $0x90] sm:$0xff]
      %v292 = vld [vmem:[%s1 + $0x98] sm:$0xff]
      %v293 = vld [vmem:[%s1 + $0xa0] sm:$0xff]
      %v294 = vld [vmem:[%s1 + $0xa8] sm:$0xff]
      %v295 = vld [vmem:[%s1 + $0xb0] sm:$0xff]
      %v296 = vld [vmem:[%s1 + $0xb8] sm:$0xff]
      %v297 = vld [vmem:[%s1 + $0xc0] sm:$0xff]
      %v298 = vld [vmem:[%s1 + $0xc8] sm:$0xff]
      %v299 = vld [vmem:[%s1 + $0xd0] sm:$0xff]
      %v300 = vld [vmem:[%s1 + $0xd8] sm:$0xff]
      %v301 = vld [vmem:[%s1 + $0xe0] sm:$0xff]
      %v302 = vld [vmem:[%s1 + $0xe8] sm:$0xff]
      %v303 = vld [vmem:[%s1 + $0xf0] sm:$0xff]
      %v304 = vld [vmem:[%s1 + $0xf8] sm:$0xff]
      %v305 = vld [vmem:[%s1 + $0x100] sm:$0xff]
      %v306 = vld [vmem:[%s1 + $0x108] sm:$0xff]
      %v307 = vld [vmem:[%s1 + $0x110] sm:$0xff]
      %v308 = vld [vmem:[%s1 + $0x118] sm:$0xff]
      %v309 = vld [vmem:[%s1 + $0x120] sm:$0xff]
      %v310 = vld [vmem:[%s1 + $0x128] sm:$0xff]
      %v311 = vld [vmem:[%s1 + $0x130] sm:$0xff]
      %v312 = vld [vmem:[%s1 + $0x138] sm:$0xff]
      %v313 = vld [vmem:[%s1 + $0x140] sm:$0xff]
      %v314 = vld [vmem:[%s1 + $0x148] sm:$0xff]
      %v315 = vld [vmem:[%s1 + $0x150] sm:$0xff]
      %v316 = vld [vmem:[%s1 + $0x158] sm:$0xff]
      %v317 = vld [vmem:[%s1 + $0x160] sm:$0xff]
      %v318 = vld [vmem:[%s1 + $0x168] sm:$0xff]
      %v319 = vld [vmem:[%s1 + $0x170] sm:$0xff]
      %v320 = vld [vmem:[%s1 + $0x178] sm:$0xff]
      %v321 = vld [vmem:[%s1 + $0x180] sm:$0xff]
      %v322 = vld [vmem:[%s1 + $0x188] sm:$0xff]
      %v323 = vld [vmem:[%s1 + $0x190] sm:$0xff]
      %v324 = vld [vmem:[%s1 + $0x198] sm:$0xff]
      %v325 = vld [vmem:[%s1 + $0x1a0] sm:$0xff]
      %v326 = vld [vmem:[%s1 + $0x1a8] sm:$0xff]
      %v327 = vld [vmem:[%s1 + $0x1b0] sm:$0xff]
      %v328 = vld [vmem:[%s1 + $0x1b8] sm:$0xff]
      %v329 = vld [vmem:[%s1 + $0x1c0] sm:$0xff]
      %v330 = vld [vmem:[%s1 + $0x1c8] sm:$0xff]
      %v331 = vld [vmem:[%s1 + $0x1d0] sm:$0xff]
      %v332 = vld [vmem:[%s1 + $0x1d8] sm:$0xff]
      %v333 = vld [vmem:[%s1 + $0x1e0] sm:$0xff]
      %v334 = vld [vmem:[%s1 + $0x1e8] sm:$0xff]
      %v335 = vld [vmem:[%s1 + $0x1f0] sm:$0xff]
      %v336 = vld [vmem:[%s1 + $0x1f8] sm:$0xff]
      %v337 = vld [vmem:[%s1 + $0x200] sm:$0xff]
      %v338 = vld [vmem:[%s1 + $0x208] sm:$0xff]
      %v339 = vld [vmem:[%s1 + $0x210] sm:$0xff]
      %v340 = vld [vmem:[%s1 + $0x218] sm:$0xff]
      %v341 = vld [vmem:[%s1 + $0x220] sm:$0xff]
      %v342 = vld [vmem:[%s1 + $0x228] sm:$0xff]
      %v343 = vld [vmem:[%s1 + $0x230] sm:$0xff]
      %v344 = vld [vmem:[%s1 + $0x238] sm:$0xff]
      %v345 = vld [vmem:[%s1 + $0x240] sm:$0xff]
      %v346 = vld [vmem:[%s1 + $0x248] sm:$0xff]
      %v347 = vld [vmem:[%s1 + $0x250] sm:$0xff]
      %v348 = vld [vmem:[%s1 + $0x258] sm:$0xff]
      %v349 = vld [vmem:[%s1 + $0x260] sm:$0xff]
      %v350 = vld [vmem:[%s1 + $0x268] sm:$0xff]
      %v351 = vld [vmem:[%s1 + $0x270] sm:$0xff]
      %v352 = vld [vmem:[%s1 + $0x278] sm:$0xff]
      %v353 = vld [vmem:[%s1 + $0x280] sm:$0xff]
      %v354 = vld [vmem:[%s1 + $0x288] sm:$0xff]
      %v355 = vld [vmem:[%s1 + $0x290] sm:$0xff]
      %v356 = vld [vmem:[%s1 + $0x298] sm:$0xff]
      %v357 = vld [vmem:[%s1 + $0x2a0] sm:$0xff]
      %v358 = vld [vmem:[%s1 + $0x2a8] sm:$0xff]
      %v359 = vld [vmem:[%s1 + $0x2b0] sm:$0xff]
      %v360 = vld [vmem:[%s1 + $0x2b8] sm:$0xff]
      %v361 = vld [vmem:[%s1 + $0x2c0] sm:$0xff]
      %v362 = vld [vmem:[%s1 + $0x2c8] sm:$0xff]
      %v363 = vld [vmem:[%s1 + $0x2d0] sm:$0xff]
      %v364 = vld [vmem:[%s1 + $0x2d8] sm:$0xff]
      %v365 = vld [vmem:[%s1 + $0x2e0] sm:$0xff]
      %v366 = vld [vmem:[%s1 + $0x2e8] sm:$0xff]
      %v367 = vld [vmem:[%s1 + $0x2f0] sm:$0xff]
      %v368 = vld [vmem:[%s1 + $0x2f8] sm:$0xff]
      %v369 = vld [vmem:[%s1 + $0x300] sm:$0xff]
      %v370 = vld [vmem:[%s1 + $0x308] sm:$0xff]
      %v371 = vld [vmem:[%s1 + $0x310] sm:$0xff]
      %v372 = vld [vmem:[%s1 + $0x318] sm:$0xff]
      %v373 = vld [vmem:[%s1 + $0x320] sm:$0xff]
      %v374 = vld [vmem:[%s1 + $0x328] sm:$0xff]
      %v375 = vld [vmem:[%s1 + $0x330] sm:$0xff]
      %v376 = vld [vmem:[%s1 + $0x338] sm:$0xff]
      %v377 = vld [vmem:[%s1 + $0x340] sm:$0xff]
      %v378 = vld [vmem:[%s1 + $0x348] sm:$0xff]
      %v379 = vld [vmem:[%s1 + $0x350] sm:$0xff]
      %v380 = vld [vmem:[%s1 + $0x358] sm:$0xff]
      %v381 = vld [vmem:[%s1 + $0x360] sm:$0xff]
      %v382 = vld [vmem:[%s1 + $0x368] sm:$0xff]
      %v383 = vld [vmem:[%s1 + $0x370] sm:$0xff]
      %v384 = vld [vmem:[%s1 + $0x378] sm:$0xff]
      %v385 = vld [vmem:[%s1 + $0x380] sm:$0xff]
      %v386 = vld [vmem:[%s1 + $0x388] sm:$0xff]
      %v387 = vld [vmem:[%s1 + $0x390] sm:$0xff]
      %v388 = vld [vmem:[%s1 + $0x398] sm:$0xff]
      %v389 = vld [vmem:[%s1 + $0x3a0] sm:$0xff]
      %v390 = vld [vmem:[%s1 + $0x3a8] sm:$0xff]
      %v391 = vld [vmem:[%s1 + $0x3b0] sm:$0xff]
      %v392 = vld [vmem:[%s1 + $0x3b8] sm:$0xff]
      %v393 = vld [vmem:[%s1 + $0x3c0] sm:$0xff]
      %v394 = vld [vmem:[%s1 + $0x3c8] sm:$0xff]
      %v395 = vld [vmem:[%s1 + $0x3d0] sm:$0xff]
      %v396 = vld [vmem:[%s1 + $0x3d8] sm:$0xff]
      %v397 = vld [vmem:[%s1 + $0x3e0] sm:$0xff]
      %v398 = vld [vmem:[%s1 + $0x3e8] sm:$0xff]
      %v399 = vld [vmem:[%s1 + $0x3f0] sm:$0xff]
      %v400 = vld [vmem:[%s1 + $0x3f8] sm:$0xff]
      %v401 = vld [vmem:[%s1 + $0x400] sm:$0xff]
      %v402 = vld [vmem:[%s1 + $0x408] sm:$0xff]
      %v403 = vld [vmem:[%s1 + $0x410] sm:$0xff]
      %v404 = vld [vmem:[%s1 + $0x418] sm:$0xff]
      %v405 = vld [vmem:[%s1 + $0x420] sm:$0xff]
      %v406 = vld [vmem:[%s1 + $0x428] sm:$0xff]
      %v407 = vld [vmem:[%s1 + $0x430] sm:$0xff]
      %v408 = vld [vmem:[%s1 + $0x438] sm:$0xff]
      %v409 = vld [vmem:[%s1 + $0x440] sm:$0xff]
      %v410 = vld [vmem:[%s1 + $0x448] sm:$0xff]
      %v411 = vld [vmem:[%s1 + $0x450] sm:$0xff]
      %v412 = vld [vmem:[%s1 + $0x458] sm:$0xff]
      %v413 = vld [vmem:[%s1 + $0x460] sm:$0xff]
      %v414 = vld [vmem:[%s1 + $0x468] sm:$0xff]
      %v415 = vld [vmem:[%s1 + $0x470] sm:$0xff]
      %v416 = vld [vmem:[%s1 + $0x478] sm:$0xff]
      %v417 = vld [vmem:[%s1 + $0x480] sm:$0xff]
      %v418 = vld [vmem:[%s1 + $0x488] sm:$0xff]
      %v419 = vld [vmem:[%s1 + $0x490] sm:$0xff]
      %v420 = vld [vmem:[%s1 + $0x498] sm:$0xff]
      %v421 = vld [vmem:[%s1 + $0x4a0] sm:$0xff]
      %v422 = vld [vmem:[%s1 + $0x4a8] sm:$0xff]
      %v423 = vld [vmem:[%s1 + $0x4b0] sm:$0xff]
      %v424 = vld [vmem:[%s1 + $0x4b8] sm:$0xff]
      %v425 = vld [vmem:[%s1 + $0x4c0] sm:$0xff]
      %v426 = vld [vmem:[%s1 + $0x4c8] sm:$0xff]
      %v427 = vld [vmem:[%s1 + $0x4d0] sm:$0xff]
      %v428 = vld [vmem:[%s1 + $0x4d8] sm:$0xff]
      %v429 = vld [vmem:[%s1 + $0x4e0] sm:$0xff]
      %v430 = vld [vmem:[%s1 + $0x4e8] sm:$0xff]
      %v431 = vld [vmem:[%s1 + $0x4f0] sm:$0xff]
      %v432 = vld [vmem:[%s1 + $0x4f8] sm:$0xff]
      %v433 = vld [vmem:[%s1 + $0x500] sm:$0xff]
      %v434 = vld [vmem:[%s1 + $0x508] sm:$0xff]
      %v435 = vld [vmem:[%s1 + $0x510] sm:$0xff]
      %v436 = vld [vmem:[%s1 + $0x518] sm:$0xff]
      %v437 = vld [vmem:[%s1 + $0x520] sm:$0xff]
      %v438 = vld [vmem:[%s1 + $0x528] sm:$0xff]
      %v439 = vld [vmem:[%s1 + $0x530] sm:$0xff]
      %v440 = vld [vmem:[%s1 + $0x538] sm:$0xff]
      %v441 = vld [vmem:[%s1 + $0x540] sm:$0xff]
      %v442 = vld [vmem:[%s1 + $0x548] sm:$0xff]
      %v443 = vld [vmem:[%s1 + $0x550] sm:$0xff]
      %v444 = vld [vmem:[%s1 + $0x558] sm:$0xff]
      %v445 = vld [vmem:[%s1 + $0x560] sm:$0xff]
      %v446 = vld [vmem:[%s1 + $0x568] sm:$0xff]
      %v447 = vld [vmem:[%s1 + $0x570] sm:$0xff]
      %v448 = vld [vmem:[%s1 + $0x578] sm:$0xff]
      %v449 = vld [vmem:[%s1 + $0x580] sm:$0xff]
      %v450 = vld [vmem:[%s1 + $0x588] sm:$0xff]
      %v451 = vld [vmem:[%s1 + $0x590] sm:$0xff]
      %v452 = vld [vmem:[%s1 + $0x598] sm:$0xff]
      %v453 = vld [vmem:[%s1 + $0x5a0] sm:$0xff]
      %v454 = vld [vmem:[%s1 + $0x5a8] sm:$0xff]
      %v455 = vld [vmem:[%s1 + $0x5b0] sm:$0xff]
      %v456 = vld [vmem:[%s1 + $0x5b8] sm:$0xff]
      %v457 = vld [vmem:[%s1 + $0x5c0] sm:$0xff]
      %v458 = vld [vmem:[%s1 + $0x5c8] sm:$0xff]
      %v459 = vld [vmem:[%s1 + $0x5d0] sm:$0xff]
      %v460 = vld [vmem:[%s1 + $0x5d8] sm:$0xff]
      %v461 = vld [vmem:[%s1 + $0x5e0] sm:$0xff]
      %v462 = vld [vmem:[%s1 + $0x5e8] sm:$0xff]
      %v463 = vld [vmem:[%s1 + $0x5f0] sm:$0xff]
      %v464 = vld [vmem:[%s1 + $0x5f8] sm:$0xff]
      %v465 = vld [vmem:[%s1 + $0x600] sm:$0xff]
      %v466 = vld [vmem:[%s1 + $0x608] sm:$0xff]
      %v467 = vld [vmem:[%s1 + $0x610] sm:$0xff]
      %v468 = vld [vmem:[%s1 + $0x618] sm:$0xff]
      %v469 = vld [vmem:[%s1 + $0x620] sm:$0xff]
      %v470 = vld [vmem:[%s1 + $0x628] sm:$0xff]
      %v471 = vld [vmem:[%s1 + $0x630] sm:$0xff]
      %v472 = vld [vmem:[%s1 + $0x638] sm:$0xff]
      %v473 = vld [vmem:[%s1 + $0x640] sm:$0xff]
      %v474 = vld [vmem:[%s1 + $0x648] sm:$0xff]
      %v475 = vld [vmem:[%s1 + $0x650] sm:$0xff]
      %v476 = vld [vmem:[%s1 + $0x658] sm:$0xff]
      %v477 = vld [vmem:[%s1 + $0x660] sm:$0xff]
      %v478 = vld [vmem:[%s1 + $0x668] sm:$0xff]
      %v479 = vld [vmem:[%s1 + $0x670] sm:$0xff]
      %v480 = vld [vmem:[%s1 + $0x678] sm:$0xff]
      %v481 = vld [vmem:[%s1 + $0x680] sm:$0xff]
      %v482 = vld [vmem:[%s1 + $0x688] sm:$0xff]
      %v483 = vld [vmem:[%s1 + $0x690] sm:$0xff]
      %v484 = vld [vmem:[%s1 + $0x698] sm:$0xff]
      %v485 = vld [vmem:[%s1 + $0x6a0] sm:$0xff]
      %v486 = vld [vmem:[%s1 + $0x6a8] sm:$0xff]
      %v487 = vld [vmem:[%s1 + $0x6b0] sm:$0xff]
      %v488 = vld [vmem:[%s1 + $0x6b8] sm:$0xff]
      %v489 = vld [vmem:[%s1 + $0x6c0] sm:$0xff]
      %v490 = vld [vmem:[%s1 + $0x6c8] sm:$0xff]
      %v491 = vld [vmem:[%s1 + $0x6d0] sm:$0xff]
      %v492 = vld [vmem:[%s1 + $0x6d8] sm:$0xff]
      %v493 = vld [vmem:[%s1 + $0x6e0] sm:$0xff]
      %v494 = vld [vmem:[%s1 + $0x6e8] sm:$0xff]
      %v495 = vld [vmem:[%s1 + $0x6f0] sm:$0xff]
      %v496 = vld [vmem:[%s1 + $0x6f8] sm:$0xff]
      %v497 = vld [vmem:[%s1 + $0x700] sm:$0xff]
      %v498 = vld [vmem:[%s1 + $0x708] sm:$0xff]
      %v499 = vld [vmem:[%s1 + $0x710] sm:$0xff]
      %v500 = vld [vmem:[%s1 + $0x718] sm:$0xff]
      %v501 = vld [vmem:[%s1 + $0x720] sm:$0xff]
      %v502 = vld [vmem:[%s1 + $0x728] sm:$0xff]
      %v503 = vld [vmem:[%s1 + $0x730] sm:$0xff]
      %v504 = vld [vmem:[%s1 + $0x738] sm:$0xff]
      %v505 = vld [vmem:[%s1 + $0x740] sm:$0xff]
      %v506 = vld [vmem:[%s1 + $0x748] sm:$0xff]
      %v507 = vld [vmem:[%s1 + $0x750] sm:$0xff]
      %v508 = vld [vmem:[%s1 + $0x758] sm:$0xff]
      %v509 = vld [vmem:[%s1 + $0x760] sm:$0xff]
      %v510 = vld [vmem:[%s1 + $0x768] sm:$0xff]
      %v511 = vld [vmem:[%s1 + $0x770] sm:$0xff]
      %v512 = vld [vmem:[%s1 + $0x778] sm:$0xff]
      %v513 = vld [vmem:[%s1 + $0x780] sm:$0xff]
      %v514 = vld [vmem:[%s1 + $0x788] sm:$0xff]
      %v515 = vld [vmem:[%s1 + $0x790] sm:$0xff]
      %v516 = vld [vmem:[%s1 + $0x798] sm:$0xff]
      %v517 = vld [vmem:[%s1 + $0x7a0] sm:$0xff]
      %v518 = vld [vmem:[%s1 + $0x7a8] sm:$0xff]
      %v519 = vld [vmem:[%s1 + $0x7b0] sm:$0xff]
      %v520 = vld [vmem:[%s1 + $0x7b8] sm:$0xff]
      %v521 = vld [vmem:[%s1 + $0x7c0] sm:$0xff]
      %v522 = vld [vmem:[%s1 + $0x7c8] sm:$0xff]
      %v523 = vld [vmem:[%s1 + $0x7d0] sm:$0xff]
      %v524 = vld [vmem:[%s1 + $0x7d8] sm:$0xff]
      %v525 = vld [vmem:[%s1 + $0x7e0] sm:$0xff]
      %v526 = vld [vmem:[%s1 + $0x7e8] sm:$0xff]
      %v527 = vld [vmem:[%s1 + $0x7f0] sm:$0xff]
      %v528 = vld [vmem:[%s1 + $0x7f8] sm:$0xff]
      %v529 = vld [vmem:[%s1 + $0x800] sm:$0xff]
      %v530 = vld [vmem:[%s1 + $0x808] sm:$0xff]
      %v531 = vld [vmem:[%s1 + $0x810] sm:$0xff]
      %v532 = vld [vmem:[%s1 + $0x818] sm:$0xff]
      %v533 = vld [vmem:[%s1 + $0x820] sm:$0xff]
      %v534 = vld [vmem:[%s1 + $0x828] sm:$0xff]
      %v535 = vld [vmem:[%s1 + $0x830] sm:$0xff]
      %v536 = vld [vmem:[%s1 + $0x838] sm:$0xff]
      %v537 = vld [vmem:[%s1 + $0x840] sm:$0xff]
      %v538 = vld [vmem:[%s1 + $0x848] sm:$0xff]
      %v539 = vld [vmem:[%s1 + $0x850] sm:$0xff]
      %v540 = vld [vmem:[%s1 + $0x858] sm:$0xff]
      %v541 = vld [vmem:[%s1 + $0x860] sm:$0xff]
      %v542 = vld [vmem:[%s1 + $0x868] sm:$0xff]
      %v543 = vld [vmem:[%s1 + $0x870] sm:$0xff]
      %v544 = vld [vmem:[%s1 + $0x878] sm:$0xff]
      %v545 = vld [vmem:[%s1 + $0x880] sm:$0xff]
      %v546 = vld [vmem:[%s1 + $0x888] sm:$0xff]
      %v547 = vld [vmem:[%s1 + $0x890] sm:$0xff]
      %v548 = vld [vmem:[%s1 + $0x898] sm:$0xff]
      %v549 = vld [vmem:[%s1 + $0x8a0] sm:$0xff]
      %v550 = vld [vmem:[%s1 + $0x8a8] sm:$0xff]
      %v551 = vld [vmem:[%s1 + $0x8b0] sm:$0xff]
      %v552 = vld [vmem:[%s1 + $0x8b8] sm:$0xff]
      %v553 = vld [vmem:[%s1 + $0x8c0] sm:$0xff]
      %v554 = vld [vmem:[%s1 + $0x8c8] sm:$0xff]
      %v555 = vld [vmem:[%s1 + $0x8d0] sm:$0xff]
      %v556 = vld [vmem:[%s1 + $0x8d8] sm:$0xff]
      %v557 = vld [vmem:[%s1 + $0x8e0] sm:$0xff]
      %v558 = vld [vmem:[%s1 + $0x8e8] sm:$0xff]
      %v559 = vld [vmem:[%s1 + $0x8f0] sm:$0xff]
      %v560 = vld [vmem:[%s1 + $0x8f8] sm:$0xff]
      %v561 = vld [vmem:[%s2] sm:$0xf]
      %v563 = vperm.slane %v561, 0
      %v564 = vperm.slane %v561, 1
      %v565 = vperm.slane %v561, 2
      %v566 = vperm.slane %v561, 3
      %v611 = vunpack.c.l.b16 %v233
      %v612 = vunpack.c.h.b16 %v233
      %v613 = vunpack.c.l.b16 %v234
      %v614 = vunpack.c.h.b16 %v234
      %v615 = vunpack.c.l.b16 %v235
      %v616 = vunpack.c.h.b16 %v235
      %v617 = vunpack.c.l.b16 %v236
      %v618 = vunpack.c.h.b16 %v236
      %v619 = vunpack.c.l.b16 %v237
      %v620 = vunpack.c.l.b16 %v238
      %v621 = vunpack.c.h.b16 %v238
      %v622 = vunpack.c.l.b16 %v239
      %v623 = vunpack.c.h.b16 %v239
      %v624 = vunpack.c.l.b16 %v240
      %v625 = vunpack.c.h.b16 %v240
      %v626 = vunpack.c.l.b16 %v241
      %v627 = vunpack.c.h.b16 %v241
      %v628 = vunpack.c.l.b16 %v242
      %v629 = vunpack.c.l.b16 %v243
      %v630 = vunpack.c.h.b16 %v243
      %v631 = vunpack.c.l.b16 %v244
      %v632 = vunpack.c.h.b16 %v244
      %v633 = vunpack.c.l.b16 %v245
      %v634 = vunpack.c.h.b16 %v245
      %v635 = vunpack.c.l.b16 %v246
      %v636 = vunpack.c.h.b16 %v246
      %v637 = vunpack.c.l.b16 %v247
      %v638 = vunpack.c.l.b16 %v248
      %v639 = vunpack.c.h.b16 %v248
      %v640 = vunpack.c.l.b16 %v249
      %v641 = vunpack.c.h.b16 %v249
      %v642 = vunpack.c.l.b16 %v250
      %v643 = vunpack.c.h.b16 %v250
      %v644 = vunpack.c.l.b16 %v251
      %v645 = vunpack.c.h.b16 %v251
      %v646 = vunpack.c.l.b16 %v252
      %v647 = vunpack.c.l.b16 %v253
      %v648 = vunpack.c.h.b16 %v253
      %v649 = vunpack.c.l.b16 %v254
      %v650 = vunpack.c.h.b16 %v254
      %v651 = vunpack.c.l.b16 %v255
      %v652 = vunpack.c.h.b16 %v255
      %v653 = vunpack.c.l.b16 %v256
      %v654 = vunpack.c.h.b16 %v256
      %v655 = vunpack.c.l.b16 %v257
      %v656 = vunpack.c.l.b16 %v258
      %v657 = vunpack.c.h.b16 %v258
      %v658 = vunpack.c.l.b16 %v259
      %v659 = vunpack.c.h.b16 %v259
      %v660 = vunpack.c.l.b16 %v260
      %v661 = vunpack.c.h.b16 %v260
      %v662 = vunpack.c.l.b16 %v261
      %v663 = vunpack.c.h.b16 %v261
      %v664 = vunpack.c.l.b16 %v262
      %v665 = vunpack.c.l.b16 %v263
      %v666 = vunpack.c.h.b16 %v263
      %v667 = vunpack.c.l.b16 %v264
      %v668 = vunpack.c.h.b16 %v264
      %v669 = vunpack.c.l.b16 %v265
      %v670 = vunpack.c.h.b16 %v265
      %v671 = vunpack.c.l.b16 %v266
      %v672 = vunpack.c.h.b16 %v266
      %v673 = vunpack.c.l.b16 %v267
      %v674 = vunpack.c.l.b16 %v268
      %v675 = vunpack.c.h.b16 %v268
      %v676 = vunpack.c.l.b16 %v269
      %v677 = vunpack.c.h.b16 %v269
      %v678 = vunpack.c.l.b16 %v270
      %v679 = vunpack.c.h.b16 %v270
      %v680 = vunpack.c.l.b16 %v271
      %v681 = vunpack.c.h.b16 %v271
      %v682 = vunpack.c.l.b16 %v272
      %v683 = vpack.c.b16 %v620, %v611
      %v684 = vpack.c.b16 %v621, %v612
      %v685 = vpack.c.b16 %v622, %v613
      %v686 = vpack.c.b16 %v623, %v614
      %v687 = vpack.c.b16 %v624, %v615
      %v688 = vpack.c.b16 %v625, %v616
      %v689 = vpack.c.b16 %v626, %v617
      %v690 = vpack.c.b16 %v627, %v618
      %v691 = vpack.c.b16 %v628, %v619
      %v692 = vpack.c.b16 %v638, %v629
      %v693 = vpack.c.b16 %v639, %v630
      %v694 = vpack.c.b16 %v640, %v631
      %v695 = vpack.c.b16 %v641, %v632
      %v696 = vpack.c.b16 %v642, %v633
      %v697 = vpack.c.b16 %v643, %v634
      %v698 = vpack.c.b16 %v644, %v635
      %v699 = vpack.c.b16 %v645, %v636
      %v700 = vpack.c.b16 %v646, %v637
      %v701 = vpack.c.b16 %v656, %v647
      %v702 = vpack.c.b16 %v657, %v648
      %v703 = vpack.c.b16 %v658, %v649
      %v704 = vpack.c.b16 %v659, %v650
      %v705 = vpack.c.b16 %v660, %v651
      %v706 = vpack.c.b16 %v661, %v652
      %v707 = vpack.c.b16 %v662, %v653
      %v708 = vpack.c.b16 %v663, %v654
      %v709 = vpack.c.b16 %v664, %v655
      %v710 = vpack.c.b16 %v674, %v665
      %v711 = vpack.c.b16 %v675, %v666
      %v712 = vpack.c.b16 %v676, %v667
      %v713 = vpack.c.b16 %v677, %v668
      %v714 = vpack.c.b16 %v678, %v669
      %v715 = vpack.c.b16 %v679, %v670
      %v716 = vpack.c.b16 %v680, %v671
      %v717 = vpack.c.b16 %v681, %v672
      %v718 = vpack.c.b16 %v682, %v673
      %v1043 = vunpack.c.l.b16 %v273
      %v1044 = vunpack.c.h.b16 %v273
      %v1045 = vunpack.c.l.b16 %v274
      %v1046 = vunpack.c.h.b16 %v274
      %v1047 = vunpack.c.l.b16 %v275
      %v1048 = vunpack.c.h.b16 %v275
      %v1049 = vunpack.c.l.b16 %v276
      %v1050 = vunpack.c.h.b16 %v276
      %v1051 = vunpack.c.l.b16 %v277
      %v1052 = vunpack.c.h.b16 %v277
      %v1053 = vunpack.c.l.b16 %v278
      %v1054 = vunpack.c.h.b16 %v278
      %v1055 = vunpack.c.l.b16 %v279
      %v1056 = vunpack.c.h.b16 %v279
      %v1057 = vunpack.c.l.b16 %v280
      %v1058 = vunpack.c.h.b16 %v280
      %v1059 = vunpack.c.l.b16 %v281
      %v1060 = vunpack.c.h.b16 %v281
      %v1061 = vunpack.c.l.b16 %v282
      %v1062 = vunpack.c.h.b16 %v282
      %v1063 = vunpack.c.l.b16 %v283
      %v1064 = vunpack.c.h.b16 %v283
      %v1065 = vunpack.c.l.b16 %v284
      %v1066 = vunpack.c.h.b16 %v284
      %v1067 = vunpack.c.l.b16 %v285
      %v1068 = vunpack.c.h.b16 %v285
      %v1069 = vunpack.c.l.b16 %v286
      %v1070 = vunpack.c.h.b16 %v286
      %v1071 = vunpack.c.l.b16 %v287
      %v1072 = vunpack.c.h.b16 %v287
      %v1073 = vunpack.c.l.b16 %v288
      %v1074 = vunpack.c.h.b16 %v288
      %v1075 = vunpack.c.l.b16 %v289
      %v1076 = vunpack.c.h.b16 %v289
      %v1077 = vunpack.c.l.b16 %v290
      %v1078 = vunpack.c.h.b16 %v290
      %v1079 = vunpack.c.l.b16 %v291
      %v1080 = vunpack.c.h.b16 %v291
      %v1081 = vunpack.c.l.b16 %v292
      %v1082 = vunpack.c.h.b16 %v292
      %v1083 = vunpack.c.l.b16 %v293
      %v1084 = vunpack.c.h.b16 %v293
      %v1085 = vunpack.c.l.b16 %v294
      %v1086 = vunpack.c.h.b16 %v294
      %v1087 = vunpack.c.l.b16 %v295
      %v1088 = vunpack.c.h.b16 %v295
      %v1089 = vunpack.c.l.b16 %v296
      %v1090 = vunpack.c.h.b16 %v296
      %v1091 = vunpack.c.l.b16 %v297
      %v1092 = vunpack.c.h.b16 %v297
      %v1093 = vunpack.c.l.b16 %v298
      %v1094 = vunpack.c.h.b16 %v298
      %v1095 = vunpack.c.l.b16 %v299
      %v1096 = vunpack.c.h.b16 %v299
      %v1097 = vunpack.c.l.b16 %v300
      %v1098 = vunpack.c.h.b16 %v300
      %v1099 = vunpack.c.l.b16 %v301
      %v1100 = vunpack.c.h.b16 %v301
      %v1101 = vunpack.c.l.b16 %v302
      %v1102 = vunpack.c.h.b16 %v302
      %v1103 = vunpack.c.l.b16 %v303
      %v1104 = vunpack.c.h.b16 %v303
      %v1105 = vunpack.c.l.b16 %v304
      %v1106 = vunpack.c.h.b16 %v304
      %v1107 = vunpack.c.l.b16 %v305
      %v1108 = vunpack.c.h.b16 %v305
      %v1109 = vunpack.c.l.b16 %v306
      %v1110 = vunpack.c.h.b16 %v306
      %v1111 = vunpack.c.l.b16 %v307
      %v1112 = vunpack.c.h.b16 %v307
      %v1113 = vunpack.c.l.b16 %v308
      %v1114 = vunpack.c.h.b16 %v308
      %v1115 = vunpack.c.l.b16 %v309
      %v1116 = vunpack.c.h.b16 %v309
      %v1117 = vunpack.c.l.b16 %v310
      %v1118 = vunpack.c.h.b16 %v310
      %v1119 = vunpack.c.l.b16 %v311
      %v1120 = vunpack.c.h.b16 %v311
      %v1121 = vunpack.c.l.b16 %v312
      %v1122 = vunpack.c.h.b16 %v312
      %v1123 = vunpack.c.l.b16 %v313
      %v1124 = vunpack.c.h.b16 %v313
      %v1125 = vunpack.c.l.b16 %v314
      %v1126 = vunpack.c.h.b16 %v314
      %v1127 = vunpack.c.l.b16 %v315
      %v1128 = vunpack.c.h.b16 %v315
      %v1129 = vunpack.c.l.b16 %v316
      %v1130 = vunpack.c.h.b16 %v316
      %v1131 = vunpack.c.l.b16 %v317
      %v1132 = vunpack.c.h.b16 %v317
      %v1133 = vunpack.c.l.b16 %v318
      %v1134 = vunpack.c.h.b16 %v318
      %v1135 = vunpack.c.l.b16 %v319
      %v1136 = vunpack.c.h.b16 %v319
      %v1137 = vunpack.c.l.b16 %v320
      %v1138 = vunpack.c.h.b16 %v320
      %v1139 = vunpack.c.l.b16 %v321
      %v1140 = vunpack.c.h.b16 %v321
      %v1141 = vunpack.c.l.b16 %v322
      %v1142 = vunpack.c.h.b16 %v322
      %v1143 = vunpack.c.l.b16 %v323
      %v1144 = vunpack.c.h.b16 %v323
      %v1145 = vunpack.c.l.b16 %v324
      %v1146 = vunpack.c.h.b16 %v324
      %v1147 = vunpack.c.l.b16 %v325
      %v1148 = vunpack.c.h.b16 %v325
      %v1149 = vunpack.c.l.b16 %v326
      %v1150 = vunpack.c.h.b16 %v326
      %v1151 = vunpack.c.l.b16 %v327
      %v1152 = vunpack.c.h.b16 %v327
      %v1153 = vunpack.c.l.b16 %v328
      %v1154 = vunpack.c.h.b16 %v328
      %v1155 = vunpack.c.l.b16 %v329
      %v1156 = vunpack.c.h.b16 %v329
      %v1157 = vunpack.c.l.b16 %v330
      %v1158 = vunpack.c.h.b16 %v330
      %v1159 = vunpack.c.l.b16 %v331
      %v1160 = vunpack.c.h.b16 %v331
      %v1161 = vunpack.c.l.b16 %v332
      %v1162 = vunpack.c.h.b16 %v332
      %v1163 = vunpack.c.l.b16 %v333
      %v1164 = vunpack.c.h.b16 %v333
      %v1165 = vunpack.c.l.b16 %v334
      %v1166 = vunpack.c.h.b16 %v334
      %v1167 = vunpack.c.l.b16 %v335
      %v1168 = vunpack.c.h.b16 %v335
      %v1169 = vunpack.c.l.b16 %v336
      %v1170 = vunpack.c.h.b16 %v336
      %v1171 = vunpack.c.l.b16 %v337
      %v1172 = vunpack.c.h.b16 %v337
      %v1173 = vunpack.c.l.b16 %v338
      %v1174 = vunpack.c.h.b16 %v338
      %v1175 = vunpack.c.l.b16 %v339
      %v1176 = vunpack.c.h.b16 %v339
      %v1177 = vunpack.c.l.b16 %v340
      %v1178 = vunpack.c.h.b16 %v340
      %v1179 = vunpack.c.l.b16 %v341
      %v1180 = vunpack.c.h.b16 %v341
      %v1181 = vunpack.c.l.b16 %v342
      %v1182 = vunpack.c.h.b16 %v342
      %v1183 = vunpack.c.l.b16 %v343
      %v1184 = vunpack.c.h.b16 %v343
      %v1185 = vunpack.c.l.b16 %v344
      %v1186 = vunpack.c.h.b16 %v344
      %v1187 = vunpack.c.l.b16 %v345
      %v1188 = vunpack.c.h.b16 %v345
      %v1189 = vunpack.c.l.b16 %v346
      %v1190 = vunpack.c.h.b16 %v346
      %v1191 = vunpack.c.l.b16 %v347
      %v1192 = vunpack.c.h.b16 %v347
      %v1193 = vunpack.c.l.b16 %v348
      %v1194 = vunpack.c.h.b16 %v348
      %v1195 = vunpack.c.l.b16 %v349
      %v1196 = vunpack.c.h.b16 %v349
      %v1197 = vunpack.c.l.b16 %v350
      %v1198 = vunpack.c.h.b16 %v350
      %v1199 = vunpack.c.l.b16 %v351
      %v1200 = vunpack.c.h.b16 %v351
      %v1201 = vunpack.c.l.b16 %v352
      %v1202 = vunpack.c.h.b16 %v352
      %v1203 = vunpack.c.l.b16 %v353
      %v1204 = vunpack.c.h.b16 %v353
      %v1205 = vunpack.c.l.b16 %v354
      %v1206 = vunpack.c.h.b16 %v354
      %v1207 = vunpack.c.l.b16 %v355
      %v1208 = vunpack.c.h.b16 %v355
      %v1209 = vunpack.c.l.b16 %v356
      %v1210 = vunpack.c.h.b16 %v356
      %v1211 = vunpack.c.l.b16 %v357
      %v1212 = vunpack.c.h.b16 %v357
      %v1213 = vunpack.c.l.b16 %v358
      %v1214 = vunpack.c.h.b16 %v358
      %v1215 = vunpack.c.l.b16 %v359
      %v1216 = vunpack.c.h.b16 %v359
      %v1217 = vunpack.c.l.b16 %v360
      %v1218 = vunpack.c.h.b16 %v360
      %v1219 = vunpack.c.l.b16 %v361
      %v1220 = vunpack.c.h.b16 %v361
      %v1221 = vunpack.c.l.b16 %v362
      %v1222 = vunpack.c.h.b16 %v362
      %v1223 = vunpack.c.l.b16 %v363
      %v1224 = vunpack.c.h.b16 %v363
      %v1225 = vunpack.c.l.b16 %v364
      %v1226 = vunpack.c.h.b16 %v364
      %v1227 = vunpack.c.l.b16 %v365
      %v1228 = vunpack.c.h.b16 %v365
      %v1229 = vunpack.c.l.b16 %v366
      %v1230 = vunpack.c.h.b16 %v366
      %v1231 = vunpack.c.l.b16 %v367
      %v1232 = vunpack.c.h.b16 %v367
      %v1233 = vunpack.c.l.b16 %v368
      %v1234 = vunpack.c.h.b16 %v368
      %v1235 = vunpack.c.l.b16 %v369
      %v1236 = vunpack.c.h.b16 %v369
      %v1237 = vunpack.c.l.b16 %v370
      %v1238 = vunpack.c.h.b16 %v370
      %v1239 = vunpack.c.l.b16 %v371
      %v1240 = vunpack.c.h.b16 %v371
      %v1241 = vunpack.c.l.b16 %v372
      %v1242 = vunpack.c.h.b16 %v372
      %v1243 = vunpack.c.l.b16 %v373
      %v1244 = vunpack.c.h.b16 %v373
      %v1245 = vunpack.c.l.b16 %v374
      %v1246 = vunpack.c.h.b16 %v374
      %v1247 = vunpack.c.l.b16 %v375
      %v1248 = vunpack.c.h.b16 %v375
      %v1249 = vunpack.c.l.b16 %v376
      %v1250 = vunpack.c.h.b16 %v376
      %v1251 = vunpack.c.l.b16 %v377
      %v1252 = vunpack.c.h.b16 %v377
      %v1253 = vunpack.c.l.b16 %v378
      %v1254 = vunpack.c.h.b16 %v378
      %v1255 = vunpack.c.l.b16 %v379
      %v1256 = vunpack.c.h.b16 %v379
      %v1257 = vunpack.c.l.b16 %v380
      %v1258 = vunpack.c.h.b16 %v380
      %v1259 = vunpack.c.l.b16 %v381
      %v1260 = vunpack.c.h.b16 %v381
      %v1261 = vunpack.c.l.b16 %v382
      %v1262 = vunpack.c.h.b16 %v382
      %v1263 = vunpack.c.l.b16 %v383
      %v1264 = vunpack.c.h.b16 %v383
      %v1265 = vunpack.c.l.b16 %v384
      %v1266 = vunpack.c.h.b16 %v384
      %v1267 = vunpack.c.l.b16 %v385
      %v1268 = vunpack.c.h.b16 %v385
      %v1269 = vunpack.c.l.b16 %v386
      %v1270 = vunpack.c.h.b16 %v386
      %v1271 = vunpack.c.l.b16 %v387
      %v1272 = vunpack.c.h.b16 %v387
      %v1273 = vunpack.c.l.b16 %v388
      %v1274 = vunpack.c.h.b16 %v388
      %v1275 = vunpack.c.l.b16 %v389
      %v1276 = vunpack.c.h.b16 %v389
      %v1277 = vunpack.c.l.b16 %v390
      %v1278 = vunpack.c.h.b16 %v390
      %v1279 = vunpack.c.l.b16 %v391
      %v1280 = vunpack.c.h.b16 %v391
      %v1281 = vunpack.c.l.b16 %v392
      %v1282 = vunpack.c.h.b16 %v392
      %v1283 = vunpack.c.l.b16 %v393
      %v1284 = vunpack.c.h.b16 %v393
      %v1285 = vunpack.c.l.b16 %v394
      %v1286 = vunpack.c.h.b16 %v394
      %v1287 = vunpack.c.l.b16 %v395
      %v1288 = vunpack.c.h.b16 %v395
      %v1289 = vunpack.c.l.b16 %v396
      %v1290 = vunpack.c.h.b16 %v396
      %v1291 = vunpack.c.l.b16 %v397
      %v1292 = vunpack.c.h.b16 %v397
      %v1293 = vunpack.c.l.b16 %v398
      %v1294 = vunpack.c.h.b16 %v398
      %v1295 = vunpack.c.l.b16 %v399
      %v1296 = vunpack.c.h.b16 %v399
      %v1297 = vunpack.c.l.b16 %v400
      %v1298 = vunpack.c.h.b16 %v400
      %v1299 = vunpack.c.l.b16 %v401
      %v1300 = vunpack.c.h.b16 %v401
      %v1301 = vunpack.c.l.b16 %v402
      %v1302 = vunpack.c.h.b16 %v402
      %v1303 = vunpack.c.l.b16 %v403
      %v1304 = vunpack.c.h.b16 %v403
      %v1305 = vunpack.c.l.b16 %v404
      %v1306 = vunpack.c.h.b16 %v404
      %v1307 = vunpack.c.l.b16 %v405
      %v1308 = vunpack.c.h.b16 %v405
      %v1309 = vunpack.c.l.b16 %v406
      %v1310 = vunpack.c.h.b16 %v406
      %v1311 = vunpack.c.l.b16 %v407
      %v1312 = vunpack.c.h.b16 %v407
      %v1313 = vunpack.c.l.b16 %v408
      %v1314 = vunpack.c.h.b16 %v408
      %v1315 = vunpack.c.l.b16 %v409
      %v1316 = vunpack.c.h.b16 %v409
      %v1317 = vunpack.c.l.b16 %v410
      %v1318 = vunpack.c.h.b16 %v410
      %v1319 = vunpack.c.l.b16 %v411
      %v1320 = vunpack.c.h.b16 %v411
      %v1321 = vunpack.c.l.b16 %v412
      %v1322 = vunpack.c.h.b16 %v412
      %v1323 = vunpack.c.l.b16 %v413
      %v1324 = vunpack.c.h.b16 %v413
      %v1325 = vunpack.c.l.b16 %v414
      %v1326 = vunpack.c.h.b16 %v414
      %v1327 = vunpack.c.l.b16 %v415
      %v1328 = vunpack.c.h.b16 %v415
      %v1329 = vunpack.c.l.b16 %v416
      %v1330 = vunpack.c.h.b16 %v416
      %v1331 = vunpack.c.l.b16 %v417
      %v1332 = vunpack.c.h.b16 %v417
      %v1333 = vunpack.c.l.b16 %v418
      %v1334 = vunpack.c.h.b16 %v418
      %v1335 = vunpack.c.l.b16 %v419
      %v1336 = vunpack.c.h.b16 %v419
      %v1337 = vunpack.c.l.b16 %v420
      %v1338 = vunpack.c.h.b16 %v420
      %v1339 = vunpack.c.l.b16 %v421
      %v1340 = vunpack.c.h.b16 %v421
      %v1341 = vunpack.c.l.b16 %v422
      %v1342 = vunpack.c.h.b16 %v422
      %v1343 = vunpack.c.l.b16 %v423
      %v1344 = vunpack.c.h.b16 %v423
      %v1345 = vunpack.c.l.b16 %v424
      %v1346 = vunpack.c.h.b16 %v424
      %v1347 = vunpack.c.l.b16 %v425
      %v1348 = vunpack.c.h.b16 %v425
      %v1349 = vunpack.c.l.b16 %v426
      %v1350 = vunpack.c.h.b16 %v426
      %v1351 = vunpack.c.l.b16 %v427
      %v1352 = vunpack.c.h.b16 %v427
      %v1353 = vunpack.c.l.b16 %v428
      %v1354 = vunpack.c.h.b16 %v428
      %v1355 = vunpack.c.l.b16 %v429
      %v1356 = vunpack.c.h.b16 %v429
      %v1357 = vunpack.c.l.b16 %v430
      %v1358 = vunpack.c.h.b16 %v430
      %v1359 = vunpack.c.l.b16 %v431
      %v1360 = vunpack.c.h.b16 %v431
      %v1361 = vunpack.c.l.b16 %v432
      %v1362 = vunpack.c.h.b16 %v432
      %v1363 = vunpack.c.l.b16 %v433
      %v1364 = vunpack.c.h.b16 %v433
      %v1365 = vunpack.c.l.b16 %v434
      %v1366 = vunpack.c.h.b16 %v434
      %v1367 = vunpack.c.l.b16 %v435
      %v1368 = vunpack.c.h.b16 %v435
      %v1369 = vunpack.c.l.b16 %v436
      %v1370 = vunpack.c.h.b16 %v436
      %v1371 = vunpack.c.l.b16 %v437
      %v1372 = vunpack.c.h.b16 %v437
      %v1373 = vunpack.c.l.b16 %v438
      %v1374 = vunpack.c.h.b16 %v438
      %v1375 = vunpack.c.l.b16 %v439
      %v1376 = vunpack.c.h.b16 %v439
      %v1377 = vunpack.c.l.b16 %v440
      %v1378 = vunpack.c.h.b16 %v440
      %v1379 = vunpack.c.l.b16 %v441
      %v1380 = vunpack.c.h.b16 %v441
      %v1381 = vunpack.c.l.b16 %v442
      %v1382 = vunpack.c.h.b16 %v442
      %v1383 = vunpack.c.l.b16 %v443
      %v1384 = vunpack.c.h.b16 %v443
      %v1385 = vunpack.c.l.b16 %v444
      %v1386 = vunpack.c.h.b16 %v444
      %v1387 = vunpack.c.l.b16 %v445
      %v1388 = vunpack.c.h.b16 %v445
      %v1389 = vunpack.c.l.b16 %v446
      %v1390 = vunpack.c.h.b16 %v446
      %v1391 = vunpack.c.l.b16 %v447
      %v1392 = vunpack.c.h.b16 %v447
      %v1393 = vunpack.c.l.b16 %v448
      %v1394 = vunpack.c.h.b16 %v448
      %v1395 = vunpack.c.l.b16 %v449
      %v1396 = vunpack.c.h.b16 %v449
      %v1397 = vunpack.c.l.b16 %v450
      %v1398 = vunpack.c.h.b16 %v450
      %v1399 = vunpack.c.l.b16 %v451
      %v1400 = vunpack.c.h.b16 %v451
      %v1401 = vunpack.c.l.b16 %v452
      %v1402 = vunpack.c.h.b16 %v452
      %v1403 = vunpack.c.l.b16 %v453
      %v1404 = vunpack.c.h.b16 %v453
      %v1405 = vunpack.c.l.b16 %v454
      %v1406 = vunpack.c.h.b16 %v454
      %v1407 = vunpack.c.l.b16 %v455
      %v1408 = vunpack.c.h.b16 %v455
      %v1409 = vunpack.c.l.b16 %v456
      %v1410 = vunpack.c.h.b16 %v456
      %v1411 = vunpack.c.l.b16 %v457
      %v1412 = vunpack.c.h.b16 %v457
      %v1413 = vunpack.c.l.b16 %v458
      %v1414 = vunpack.c.h.b16 %v458
      %v1415 = vunpack.c.l.b16 %v459
      %v1416 = vunpack.c.h.b16 %v459
      %v1417 = vunpack.c.l.b16 %v460
      %v1418 = vunpack.c.h.b16 %v460
      %v1419 = vunpack.c.l.b16 %v461
      %v1420 = vunpack.c.h.b16 %v461
      %v1421 = vunpack.c.l.b16 %v462
      %v1422 = vunpack.c.h.b16 %v462
      %v1423 = vunpack.c.l.b16 %v463
      %v1424 = vunpack.c.h.b16 %v463
      %v1425 = vunpack.c.l.b16 %v464
      %v1426 = vunpack.c.h.b16 %v464
      %v1427 = vunpack.c.l.b16 %v465
      %v1428 = vunpack.c.h.b16 %v465
      %v1429 = vunpack.c.l.b16 %v466
      %v1430 = vunpack.c.h.b16 %v466
      %v1431 = vunpack.c.l.b16 %v467
      %v1432 = vunpack.c.h.b16 %v467
      %v1433 = vunpack.c.l.b16 %v468
      %v1434 = vunpack.c.h.b16 %v468
      %v1435 = vunpack.c.l.b16 %v469
      %v1436 = vunpack.c.h.b16 %v469
      %v1437 = vunpack.c.l.b16 %v470
      %v1438 = vunpack.c.h.b16 %v470
      %v1439 = vunpack.c.l.b16 %v471
      %v1440 = vunpack.c.h.b16 %v471
      %v1441 = vunpack.c.l.b16 %v472
      %v1442 = vunpack.c.h.b16 %v472
      %v1443 = vunpack.c.l.b16 %v473
      %v1444 = vunpack.c.h.b16 %v473
      %v1445 = vunpack.c.l.b16 %v474
      %v1446 = vunpack.c.h.b16 %v474
      %v1447 = vunpack.c.l.b16 %v475
      %v1448 = vunpack.c.h.b16 %v475
      %v1449 = vunpack.c.l.b16 %v476
      %v1450 = vunpack.c.h.b16 %v476
      %v1451 = vunpack.c.l.b16 %v477
      %v1452 = vunpack.c.h.b16 %v477
      %v1453 = vunpack.c.l.b16 %v478
      %v1454 = vunpack.c.h.b16 %v478
      %v1455 = vunpack.c.l.b16 %v479
      %v1456 = vunpack.c.h.b16 %v479
      %v1457 = vunpack.c.l.b16 %v480
      %v1458 = vunpack.c.h.b16 %v480
      %v1459 = vunpack.c.l.b16 %v481
      %v1460 = vunpack.c.h.b16 %v481
      %v1461 = vunpack.c.l.b16 %v482
      %v1462 = vunpack.c.h.b16 %v482
      %v1463 = vunpack.c.l.b16 %v483
      %v1464 = vunpack.c.h.b16 %v483
      %v1465 = vunpack.c.l.b16 %v484
      %v1466 = vunpack.c.h.b16 %v484
      %v1467 = vunpack.c.l.b16 %v485
      %v1468 = vunpack.c.h.b16 %v485
      %v1469 = vunpack.c.l.b16 %v486
      %v1470 = vunpack.c.h.b16 %v486
      %v1471 = vunpack.c.l.b16 %v487
      %v1472 = vunpack.c.h.b16 %v487
      %v1473 = vunpack.c.l.b16 %v488
      %v1474 = vunpack.c.h.b16 %v488
      %v1475 = vunpack.c.l.b16 %v489
      %v1476 = vunpack.c.h.b16 %v489
      %v1477 = vunpack.c.l.b16 %v490
      %v1478 = vunpack.c.h.b16 %v490
      %v1479 = vunpack.c.l.b16 %v491
      %v1480 = vunpack.c.h.b16 %v491
      %v1481 = vunpack.c.l.b16 %v492
      %v1482 = vunpack.c.h.b16 %v492
      %v1483 = vunpack.c.l.b16 %v493
      %v1484 = vunpack.c.h.b16 %v493
      %v1485 = vunpack.c.l.b16 %v494
      %v1486 = vunpack.c.h.b16 %v494
      %v1487 = vunpack.c.l.b16 %v495
      %v1488 = vunpack.c.h.b16 %v495
      %v1489 = vunpack.c.l.b16 %v496
      %v1490 = vunpack.c.h.b16 %v496
      %v1491 = vunpack.c.l.b16 %v497
      %v1492 = vunpack.c.h.b16 %v497
      %v1493 = vunpack.c.l.b16 %v498
      %v1494 = vunpack.c.h.b16 %v498
      %v1495 = vunpack.c.l.b16 %v499
      %v1496 = vunpack.c.h.b16 %v499
      %v1497 = vunpack.c.l.b16 %v500
      %v1498 = vunpack.c.h.b16 %v500
      %v1499 = vunpack.c.l.b16 %v501
      %v1500 = vunpack.c.h.b16 %v501
      %v1501 = vunpack.c.l.b16 %v502
      %v1502 = vunpack.c.h.b16 %v502
      %v1503 = vunpack.c.l.b16 %v503
      %v1504 = vunpack.c.h.b16 %v503
      %v1505 = vunpack.c.l.b16 %v504
      %v1506 = vunpack.c.h.b16 %v504
      %v1507 = vunpack.c.l.b16 %v505
      %v1508 = vunpack.c.h.b16 %v505
      %v1509 = vunpack.c.l.b16 %v506
      %v1510 = vunpack.c.h.b16 %v506
      %v1511 = vunpack.c.l.b16 %v507
      %v1512 = vunpack.c.h.b16 %v507
      %v1513 = vunpack.c.l.b16 %v508
      %v1514 = vunpack.c.h.b16 %v508
      %v1515 = vunpack.c.l.b16 %v509
      %v1516 = vunpack.c.h.b16 %v509
      %v1517 = vunpack.c.l.b16 %v510
      %v1518 = vunpack.c.h.b16 %v510
      %v1519 = vunpack.c.l.b16 %v511
      %v1520 = vunpack.c.h.b16 %v511
      %v1521 = vunpack.c.l.b16 %v512
      %v1522 = vunpack.c.h.b16 %v512
      %v1523 = vunpack.c.l.b16 %v513
      %v1524 = vunpack.c.h.b16 %v513
      %v1525 = vunpack.c.l.b16 %v514
      %v1526 = vunpack.c.h.b16 %v514
      %v1527 = vunpack.c.l.b16 %v515
      %v1528 = vunpack.c.h.b16 %v515
      %v1529 = vunpack.c.l.b16 %v516
      %v1530 = vunpack.c.h.b16 %v516
      %v1531 = vunpack.c.l.b16 %v517
      %v1532 = vunpack.c.h.b16 %v517
      %v1533 = vunpack.c.l.b16 %v518
      %v1534 = vunpack.c.h.b16 %v518
      %v1535 = vunpack.c.l.b16 %v519
      %v1536 = vunpack.c.h.b16 %v519
      %v1537 = vunpack.c.l.b16 %v520
      %v1538 = vunpack.c.h.b16 %v520
      %v1539 = vunpack.c.l.b16 %v521
      %v1540 = vunpack.c.h.b16 %v521
      %v1541 = vunpack.c.l.b16 %v522
      %v1542 = vunpack.c.h.b16 %v522
      %v1543 = vunpack.c.l.b16 %v523
      %v1544 = vunpack.c.h.b16 %v523
      %v1545 = vunpack.c.l.b16 %v524
      %v1546 = vunpack.c.h.b16 %v524
      %v1547 = vunpack.c.l.b16 %v525
      %v1548 = vunpack.c.h.b16 %v525
      %v1549 = vunpack.c.l.b16 %v526
      %v1550 = vunpack.c.h.b16 %v526
      %v1551 = vunpack.c.l.b16 %v527
      %v1552 = vunpack.c.h.b16 %v527
      %v1553 = vunpack.c.l.b16 %v528
      %v1554 = vunpack.c.h.b16 %v528
      %v1555 = vunpack.c.l.b16 %v529
      %v1556 = vunpack.c.h.b16 %v529
      %v1557 = vunpack.c.l.b16 %v530
      %v1558 = vunpack.c.h.b16 %v530
      %v1559 = vunpack.c.l.b16 %v531
      %v1560 = vunpack.c.h.b16 %v531
      %v1561 = vunpack.c.l.b16 %v532
      %v1562 = vunpack.c.h.b16 %v532
      %v1563 = vunpack.c.l.b16 %v533
      %v1564 = vunpack.c.h.b16 %v533
      %v1565 = vunpack.c.l.b16 %v534
      %v1566 = vunpack.c.h.b16 %v534
      %v1567 = vunpack.c.l.b16 %v535
      %v1568 = vunpack.c.h.b16 %v535
      %v1569 = vunpack.c.l.b16 %v536
      %v1570 = vunpack.c.h.b16 %v536
      %v1571 = vunpack.c.l.b16 %v537
      %v1572 = vunpack.c.h.b16 %v537
      %v1573 = vunpack.c.l.b16 %v538
      %v1574 = vunpack.c.h.b16 %v538
      %v1575 = vunpack.c.l.b16 %v539
      %v1576 = vunpack.c.h.b16 %v539
      %v1577 = vunpack.c.l.b16 %v540
      %v1578 = vunpack.c.h.b16 %v540
      %v1579 = vunpack.c.l.b16 %v541
      %v1580 = vunpack.c.h.b16 %v541
      %v1581 = vunpack.c.l.b16 %v542
      %v1582 = vunpack.c.h.b16 %v542
      %v1583 = vunpack.c.l.b16 %v543
      %v1584 = vunpack.c.h.b16 %v543
      %v1585 = vunpack.c.l.b16 %v544
      %v1586 = vunpack.c.h.b16 %v544
      %v1587 = vunpack.c.l.b16 %v545
      %v1588 = vunpack.c.h.b16 %v545
      %v1589 = vunpack.c.l.b16 %v546
      %v1590 = vunpack.c.h.b16 %v546
      %v1591 = vunpack.c.l.b16 %v547
      %v1592 = vunpack.c.h.b16 %v547
      %v1593 = vunpack.c.l.b16 %v548
      %v1594 = vunpack.c.h.b16 %v548
      %v1595 = vunpack.c.l.b16 %v549
      %v1596 = vunpack.c.h.b16 %v549
      %v1597 = vunpack.c.l.b16 %v550
      %v1598 = vunpack.c.h.b16 %v550
      %v1599 = vunpack.c.l.b16 %v551
      %v1600 = vunpack.c.h.b16 %v551
      %v1601 = vunpack.c.l.b16 %v552
      %v1602 = vunpack.c.h.b16 %v552
      %v1603 = vunpack.c.l.b16 %v553
      %v1604 = vunpack.c.h.b16 %v553
      %v1605 = vunpack.c.l.b16 %v554
      %v1606 = vunpack.c.h.b16 %v554
      %v1607 = vunpack.c.l.b16 %v555
      %v1608 = vunpack.c.h.b16 %v555
      %v1609 = vunpack.c.l.b16 %v556
      %v1610 = vunpack.c.h.b16 %v556
      %v1611 = vunpack.c.l.b16 %v557
      %v1612 = vunpack.c.h.b16 %v557
      %v1613 = vunpack.c.l.b16 %v558
      %v1614 = vunpack.c.h.b16 %v558
      %v1615 = vunpack.c.l.b16 %v559
      %v1616 = vunpack.c.h.b16 %v559
      %v1617 = vunpack.c.l.b16 %v560
      %v1618 = vunpack.c.h.b16 %v560
      %v1619 = vpack.c.b16 %v1047, %v1043
      %v1620 = vpack.c.b16 %v1048, %v1044
      %v1621 = vpack.c.b16 %v1049, %v1045
      %v1622 = vpack.c.b16 %v1050, %v1046
      %v1623 = vpack.c.b16 %v1055, %v1051
      %v1624 = vpack.c.b16 %v1056, %v1052
      %v1625 = vpack.c.b16 %v1057, %v1053
      %v1626 = vpack.c.b16 %v1058, %v1054
      %v1627 = vpack.c.b16 %v1063, %v1059
      %v1628 = vpack.c.b16 %v1064, %v1060
      %v1629 = vpack.c.b16 %v1065, %v1061
      %v1630 = vpack.c.b16 %v1066, %v1062
      %v1631 = vpack.c.b16 %v1071, %v1067
      %v1632 = vpack.c.b16 %v1072, %v1068
      %v1633 = vpack.c.b16 %v1073, %v1069
      %v1634 = vpack.c.b16 %v1074, %v1070
      %v1635 = vpack.c.b16 %v1079, %v1075
      %v1636 = vpack.c.b16 %v1080, %v1076
      %v1637 = vpack.c.b16 %v1081, %v1077
      %v1638 = vpack.c.b16 %v1082, %v1078
      %v1639 = vpack.c.b16 %v1087, %v1083
      %v1640 = vpack.c.b16 %v1088, %v1084
      %v1641 = vpack.c.b16 %v1089, %v1085
      %v1642 = vpack.c.b16 %v1090, %v1086
      %v1643 = vpack.c.b16 %v1095, %v1091
      %v1644 = vpack.c.b16 %v1096, %v1092
      %v1645 = vpack.c.b16 %v1097, %v1093
      %v1646 = vpack.c.b16 %v1098, %v1094
      %v1647 = vpack.c.b16 %v1103, %v1099
      %v1648 = vpack.c.b16 %v1104, %v1100
      %v1649 = vpack.c.b16 %v1105, %v1101
      %v1650 = vpack.c.b16 %v1106, %v1102
      %v1651 = vpack.c.b16 %v1111, %v1107
      %v1652 = vpack.c.b16 %v1112, %v1108
      %v1653 = vpack.c.b16 %v1113, %v1109
      %v1654 = vpack.c.b16 %v1114, %v1110
      %v1655 = vpack.c.b16 %v1119, %v1115
      %v1656 = vpack.c.b16 %v1120, %v1116
      %v1657 = vpack.c.b16 %v1121, %v1117
      %v1658 = vpack.c.b16 %v1122, %v1118
      %v1659 = vpack.c.b16 %v1127, %v1123
      %v1660 = vpack.c.b16 %v1128, %v1124
      %v1661 = vpack.c.b16 %v1129, %v1125
      %v1662 = vpack.c.b16 %v1130, %v1126
      %v1663 = vpack.c.b16 %v1135, %v1131
      %v1664 = vpack.c.b16 %v1136, %v1132
      %v1665 = vpack.c.b16 %v1137, %v1133
      %v1666 = vpack.c.b16 %v1138, %v1134
      %v1667 = vpack.c.b16 %v1143, %v1139
      %v1668 = vpack.c.b16 %v1144, %v1140
      %v1669 = vpack.c.b16 %v1145, %v1141
      %v1670 = vpack.c.b16 %v1146, %v1142
      %v1671 = vpack.c.b16 %v1151, %v1147
      %v1672 = vpack.c.b16 %v1152, %v1148
      %v1673 = vpack.c.b16 %v1153, %v1149
      %v1674 = vpack.c.b16 %v1154, %v1150
      %v1675 = vpack.c.b16 %v1159, %v1155
      %v1676 = vpack.c.b16 %v1160, %v1156
      %v1677 = vpack.c.b16 %v1161, %v1157
      %v1678 = vpack.c.b16 %v1162, %v1158
      %v1679 = vpack.c.b16 %v1167, %v1163
      %v1680 = vpack.c.b16 %v1168, %v1164
      %v1681 = vpack.c.b16 %v1169, %v1165
      %v1682 = vpack.c.b16 %v1170, %v1166
      %v1683 = vpack.c.b16 %v1175, %v1171
      %v1684 = vpack.c.b16 %v1176, %v1172
      %v1685 = vpack.c.b16 %v1177, %v1173
      %v1686 = vpack.c.b16 %v1178, %v1174
      %v1687 = vpack.c.b16 %v1183, %v1179
      %v1688 = vpack.c.b16 %v1184, %v1180
      %v1689 = vpack.c.b16 %v1185, %v1181
      %v1690 = vpack.c.b16 %v1186, %v1182
      %v1691 = vpack.c.b16 %v1191, %v1187
      %v1692 = vpack.c.b16 %v1192, %v1188
      %v1693 = vpack.c.b16 %v1193, %v1189
      %v1694 = vpack.c.b16 %v1194, %v1190
      %v1695 = vpack.c.b16 %v1199, %v1195
      %v1696 = vpack.c.b16 %v1200, %v1196
      %v1697 = vpack.c.b16 %v1201, %v1197
      %v1698 = vpack.c.b16 %v1202, %v1198
      %v1699 = vpack.c.b16 %v1207, %v1203
      %v1700 = vpack.c.b16 %v1208, %v1204
      %v1701 = vpack.c.b16 %v1209, %v1205
      %v1702 = vpack.c.b16 %v1210, %v1206
      %v1703 = vpack.c.b16 %v1215, %v1211
      %v1704 = vpack.c.b16 %v1216, %v1212
      %v1705 = vpack.c.b16 %v1217, %v1213
      %v1706 = vpack.c.b16 %v1218, %v1214
      %v1707 = vpack.c.b16 %v1223, %v1219
      %v1708 = vpack.c.b16 %v1224, %v1220
      %v1709 = vpack.c.b16 %v1225, %v1221
      %v1710 = vpack.c.b16 %v1226, %v1222
      %v1711 = vpack.c.b16 %v1231, %v1227
      %v1712 = vpack.c.b16 %v1232, %v1228
      %v1713 = vpack.c.b16 %v1233, %v1229
      %v1714 = vpack.c.b16 %v1234, %v1230
      %v1715 = vpack.c.b16 %v1239, %v1235
      %v1716 = vpack.c.b16 %v1240, %v1236
      %v1717 = vpack.c.b16 %v1241, %v1237
      %v1718 = vpack.c.b16 %v1242, %v1238
      %v1719 = vpack.c.b16 %v1247, %v1243
      %v1720 = vpack.c.b16 %v1248, %v1244
      %v1721 = vpack.c.b16 %v1249, %v1245
      %v1722 = vpack.c.b16 %v1250, %v1246
      %v1723 = vpack.c.b16 %v1255, %v1251
      %v1724 = vpack.c.b16 %v1256, %v1252
      %v1725 = vpack.c.b16 %v1257, %v1253
      %v1726 = vpack.c.b16 %v1258, %v1254
      %v1727 = vpack.c.b16 %v1263, %v1259
      %v1728 = vpack.c.b16 %v1264, %v1260
      %v1729 = vpack.c.b16 %v1265, %v1261
      %v1730 = vpack.c.b16 %v1266, %v1262
      %v1731 = vpack.c.b16 %v1271, %v1267
      %v1732 = vpack.c.b16 %v1272, %v1268
      %v1733 = vpack.c.b16 %v1273, %v1269
      %v1734 = vpack.c.b16 %v1274, %v1270
      %v1735 = vpack.c.b16 %v1279, %v1275
      %v1736 = vpack.c.b16 %v1280, %v1276
      %v1737 = vpack.c.b16 %v1281, %v1277
      %v1738 = vpack.c.b16 %v1282, %v1278
      %v1739 = vpack.c.b16 %v1287, %v1283
      %v1740 = vpack.c.b16 %v1288, %v1284
      %v1741 = vpack.c.b16 %v1289, %v1285
      %v1742 = vpack.c.b16 %v1290, %v1286
      %v1743 = vpack.c.b16 %v1295, %v1291
      %v1744 = vpack.c.b16 %v1296, %v1292
      %v1745 = vpack.c.b16 %v1297, %v1293
      %v1746 = vpack.c.b16 %v1298, %v1294
      %v1747 = vpack.c.b16 %v1303, %v1299
      %v1748 = vpack.c.b16 %v1304, %v1300
      %v1749 = vpack.c.b16 %v1305, %v1301
      %v1750 = vpack.c.b16 %v1306, %v1302
      %v1751 = vpack.c.b16 %v1311, %v1307
      %v1752 = vpack.c.b16 %v1312, %v1308
      %v1753 = vpack.c.b16 %v1313, %v1309
      %v1754 = vpack.c.b16 %v1314, %v1310
      %v1755 = vpack.c.b16 %v1319, %v1315
      %v1756 = vpack.c.b16 %v1320, %v1316
      %v1757 = vpack.c.b16 %v1321, %v1317
      %v1758 = vpack.c.b16 %v1322, %v1318
      %v1759 = vpack.c.b16 %v1327, %v1323
      %v1760 = vpack.c.b16 %v1328, %v1324
      %v1761 = vpack.c.b16 %v1329, %v1325
      %v1762 = vpack.c.b16 %v1330, %v1326
      %v1763 = vpack.c.b16 %v1335, %v1331
      %v1764 = vpack.c.b16 %v1336, %v1332
      %v1765 = vpack.c.b16 %v1337, %v1333
      %v1766 = vpack.c.b16 %v1338, %v1334
      %v1767 = vpack.c.b16 %v1343, %v1339
      %v1768 = vpack.c.b16 %v1344, %v1340
      %v1769 = vpack.c.b16 %v1345, %v1341
      %v1770 = vpack.c.b16 %v1346, %v1342
      %v1771 = vpack.c.b16 %v1351, %v1347
      %v1772 = vpack.c.b16 %v1352, %v1348
      %v1773 = vpack.c.b16 %v1353, %v1349
      %v1774 = vpack.c.b16 %v1354, %v1350
      %v1775 = vpack.c.b16 %v1359, %v1355
      %v1776 = vpack.c.b16 %v1360, %v1356
      %v1777 = vpack.c.b16 %v1361, %v1357
      %v1778 = vpack.c.b16 %v1362, %v1358
      %v1779 = vpack.c.b16 %v1367, %v1363
      %v1780 = vpack.c.b16 %v1368, %v1364
      %v1781 = vpack.c.b16 %v1369, %v1365
      %v1782 = vpack.c.b16 %v1370, %v1366
      %v1783 = vpack.c.b16 %v1375, %v1371
      %v1784 = vpack.c.b16 %v1376, %v1372
      %v1785 = vpack.c.b16 %v1377, %v1373
      %v1786 = vpack.c.b16 %v1378, %v1374
      %v1787 = vpack.c.b16 %v1383, %v1379
      %v1788 = vpack.c.b16 %v1384, %v1380
      %v1789 = vpack.c.b16 %v1385, %v1381
      %v1790 = vpack.c.b16 %v1386, %v1382
      %v1791 = vpack.c.b16 %v1391, %v1387
      %v1792 = vpack.c.b16 %v1392, %v1388
      %v1793 = vpack.c.b16 %v1393, %v1389
      %v1794 = vpack.c.b16 %v1394, %v1390
      %v1795 = vpack.c.b16 %v1399, %v1395
      %v1796 = vpack.c.b16 %v1400, %v1396
      %v1797 = vpack.c.b16 %v1401, %v1397
      %v1798 = vpack.c.b16 %v1402, %v1398
      %v1799 = vpack.c.b16 %v1407, %v1403
      %v1800 = vpack.c.b16 %v1408, %v1404
      %v1801 = vpack.c.b16 %v1409, %v1405
      %v1802 = vpack.c.b16 %v1410, %v1406
      %v1803 = vpack.c.b16 %v1415, %v1411
      %v1804 = vpack.c.b16 %v1416, %v1412
      %v1805 = vpack.c.b16 %v1417, %v1413
      %v1806 = vpack.c.b16 %v1418, %v1414
      %v1807 = vpack.c.b16 %v1423, %v1419
      %v1808 = vpack.c.b16 %v1424, %v1420
      %v1809 = vpack.c.b16 %v1425, %v1421
      %v1810 = vpack.c.b16 %v1426, %v1422
      %v1811 = vpack.c.b16 %v1431, %v1427
      %v1812 = vpack.c.b16 %v1432, %v1428
      %v1813 = vpack.c.b16 %v1433, %v1429
      %v1814 = vpack.c.b16 %v1434, %v1430
      %v1815 = vpack.c.b16 %v1439, %v1435
      %v1816 = vpack.c.b16 %v1440, %v1436
      %v1817 = vpack.c.b16 %v1441, %v1437
      %v1818 = vpack.c.b16 %v1442, %v1438
      %v1819 = vpack.c.b16 %v1447, %v1443
      %v1820 = vpack.c.b16 %v1448, %v1444
      %v1821 = vpack.c.b16 %v1449, %v1445
      %v1822 = vpack.c.b16 %v1450, %v1446
      %v1823 = vpack.c.b16 %v1455, %v1451
      %v1824 = vpack.c.b16 %v1456, %v1452
      %v1825 = vpack.c.b16 %v1457, %v1453
      %v1826 = vpack.c.b16 %v1458, %v1454
      %v1827 = vpack.c.b16 %v1463, %v1459
      %v1828 = vpack.c.b16 %v1464, %v1460
      %v1829 = vpack.c.b16 %v1465, %v1461
      %v1830 = vpack.c.b16 %v1466, %v1462
      %v1831 = vpack.c.b16 %v1471, %v1467
      %v1832 = vpack.c.b16 %v1472, %v1468
      %v1833 = vpack.c.b16 %v1473, %v1469
      %v1834 = vpack.c.b16 %v1474, %v1470
      %v1835 = vpack.c.b16 %v1479, %v1475
      %v1836 = vpack.c.b16 %v1480, %v1476
      %v1837 = vpack.c.b16 %v1481, %v1477
      %v1838 = vpack.c.b16 %v1482, %v1478
      %v1839 = vpack.c.b16 %v1487, %v1483
      %v1840 = vpack.c.b16 %v1488, %v1484
      %v1841 = vpack.c.b16 %v1489, %v1485
      %v1842 = vpack.c.b16 %v1490, %v1486
      %v1843 = vpack.c.b16 %v1495, %v1491
      %v1844 = vpack.c.b16 %v1496, %v1492
      %v1845 = vpack.c.b16 %v1497, %v1493
      %v1846 = vpack.c.b16 %v1498, %v1494
      %v1847 = vpack.c.b16 %v1503, %v1499
      %v1848 = vpack.c.b16 %v1504, %v1500
      %v1849 = vpack.c.b16 %v1505, %v1501
      %v1850 = vpack.c.b16 %v1506, %v1502
      %v1851 = vpack.c.b16 %v1511, %v1507
      %v1852 = vpack.c.b16 %v1512, %v1508
      %v1853 = vpack.c.b16 %v1513, %v1509
      %v1854 = vpack.c.b16 %v1514, %v1510
      %v1855 = vpack.c.b16 %v1519, %v1515
      %v1856 = vpack.c.b16 %v1520, %v1516
      %v1857 = vpack.c.b16 %v1521, %v1517
      %v1858 = vpack.c.b16 %v1522, %v1518
      %v1859 = vpack.c.b16 %v1527, %v1523
      %v1860 = vpack.c.b16 %v1528, %v1524
      %v1861 = vpack.c.b16 %v1529, %v1525
      %v1862 = vpack.c.b16 %v1530, %v1526
      %v1863 = vpack.c.b16 %v1535, %v1531
      %v1864 = vpack.c.b16 %v1536, %v1532
      %v1865 = vpack.c.b16 %v1537, %v1533
      %v1866 = vpack.c.b16 %v1538, %v1534
      %v1867 = vpack.c.b16 %v1543, %v1539
      %v1868 = vpack.c.b16 %v1544, %v1540
      %v1869 = vpack.c.b16 %v1545, %v1541
      %v1870 = vpack.c.b16 %v1546, %v1542
      %v1871 = vpack.c.b16 %v1551, %v1547
      %v1872 = vpack.c.b16 %v1552, %v1548
      %v1873 = vpack.c.b16 %v1553, %v1549
      %v1874 = vpack.c.b16 %v1554, %v1550
      %v1875 = vpack.c.b16 %v1559, %v1555
      %v1876 = vpack.c.b16 %v1560, %v1556
      %v1877 = vpack.c.b16 %v1561, %v1557
      %v1878 = vpack.c.b16 %v1562, %v1558
      %v1879 = vpack.c.b16 %v1567, %v1563
      %v1880 = vpack.c.b16 %v1568, %v1564
      %v1881 = vpack.c.b16 %v1569, %v1565
      %v1882 = vpack.c.b16 %v1570, %v1566
      %v1883 = vpack.c.b16 %v1575, %v1571
      %v1884 = vpack.c.b16 %v1576, %v1572
      %v1885 = vpack.c.b16 %v1577, %v1573
      %v1886 = vpack.c.b16 %v1578, %v1574
      %v1887 = vpack.c.b16 %v1583, %v1579
      %v1888 = vpack.c.b16 %v1584, %v1580
      %v1889 = vpack.c.b16 %v1585, %v1581
      %v1890 = vpack.c.b16 %v1586, %v1582
      %v1891 = vpack.c.b16 %v1591, %v1587
      %v1892 = vpack.c.b16 %v1592, %v1588
      %v1893 = vpack.c.b16 %v1593, %v1589
      %v1894 = vpack.c.b16 %v1594, %v1590
      %v1895 = vpack.c.b16 %v1599, %v1595
      %v1896 = vpack.c.b16 %v1600, %v1596
      %v1897 = vpack.c.b16 %v1601, %v1597
      %v1898 = vpack.c.b16 %v1602, %v1598
      %v1899 = vpack.c.b16 %v1607, %v1603
      %v1900 = vpack.c.b16 %v1608, %v1604
      %v1901 = vpack.c.b16 %v1609, %v1605
      %v1902 = vpack.c.b16 %v1610, %v1606
      %v1903 = vpack.c.b16 %v1615, %v1611
      %v1904 = vpack.c.b16 %v1616, %v1612
      %v1905 = vpack.c.b16 %v1617, %v1613
      %v1906 = vpack.c.b16 %v1618, %v1614
      %2195 = vmatpush.bf16.msra.mxu0 %v1647
      %2196 = vmatpush.bf16.msra.mxu0 %v1643
      %2197 = vmatpush.bf16.msra.mxu0 %v1639
      %2198 = vmatpush.bf16.msra.mxu0 %v1635
      %2199 = vmatpush.bf16.msra.mxu0 %v1631
      %2200 = vmatpush.bf16.msra.mxu0 %v1627
      %2201 = vmatpush.bf16.msra.mxu0 %v1623
      %2202 = vmatpush.bf16.msra.mxu0 %v1619
      %2203 = vmatmul.bf16.gmra.mxu0 %v683
      %v2204 = vpop.f32.mrf.mxu0
      %v2205 = vadd.f32 %v563, %v2204
      %v2206 = vpop.f32.mrf.mxu0
      %v2207 = vadd.f32 %v563, %v2206
      %2208 = vmatmul.bf16.gmra.mxu0 %v692
      %v2209 = vpop.f32.mrf.mxu0
      %v2210 = vadd.f32 %v563, %v2209
      %v2211 = vpop.f32.mrf.mxu0
      %v2212 = vadd.f32 %v563, %v2211
      %2213 = vmatmul.bf16.gmra.mxu0 %v701
      %v2214 = vpop.f32.mrf.mxu0
      %v2215 = vadd.f32 %v563, %v2214
      %v2216 = vpop.f32.mrf.mxu0
      %v2217 = vadd.f32 %v563, %v2216
      %2218 = vmatmul.bf16.gmra.mxu0 %v710
      %v2219 = vpop.f32.mrf.mxu0
      %v2220 = vadd.f32 %v563, %v2219
      %v2221 = vpop.f32.mrf.mxu0
      %v2222 = vadd.f32 %v563, %v2221
      %2223 = vdwg.mxu0
      %2224 = vmatpush.bf16.msra.mxu0 %v1679
      %2225 = vmatpush.bf16.msra.mxu0 %v1675
      %2226 = vmatpush.bf16.msra.mxu0 %v1671
      %2227 = vmatpush.bf16.msra.mxu0 %v1667
      %2228 = vmatpush.bf16.msra.mxu0 %v1663
      %2229 = vmatpush.bf16.msra.mxu0 %v1659
      %2230 = vmatpush.bf16.msra.mxu0 %v1655
      %2231 = vmatpush.bf16.msra.mxu0 %v1651
      %2232 = vmatmul.bf16.gmra.mxu0 %v684
      %v2233 = vpop.f32.mrf.mxu0
      %v2234 = vadd.f32 %v2205, %v2233
      %v2235 = vpop.f32.mrf.mxu0
      %v2236 = vadd.f32 %v2207, %v2235
      %2237 = vmatmul.bf16.gmra.mxu0 %v693
      %v2238 = vpop.f32.mrf.mxu0
      %v2239 = vadd.f32 %v2210, %v2238
      %v2240 = vpop.f32.mrf.mxu0
      %v2241 = vadd.f32 %v2212, %v2240
      %2242 = vmatmul.bf16.gmra.mxu0 %v702
      %v2243 = vpop.f32.mrf.mxu0
      %v2244 = vadd.f32 %v2215, %v2243
      %v2245 = vpop.f32.mrf.mxu0
      %v2246 = vadd.f32 %v2217, %v2245
      %2247 = vmatmul.bf16.gmra.mxu0 %v711
      %v2248 = vpop.f32.mrf.mxu0
      %v2249 = vadd.f32 %v2220, %v2248
      %v2250 = vpop.f32.mrf.mxu0
      %v2251 = vadd.f32 %v2222, %v2250
      %2252 = vdwg.mxu0
      %2253 = vmatpush.bf16.msra.mxu0 %v1711
      %2254 = vmatpush.bf16.msra.mxu0 %v1707
      %2255 = vmatpush.bf16.msra.mxu0 %v1703
      %2256 = vmatpush.bf16.msra.mxu0 %v1699
      %2257 = vmatpush.bf16.msra.mxu0 %v1695
      %2258 = vmatpush.bf16.msra.mxu0 %v1691
      %2259 = vmatpush.bf16.msra.mxu0 %v1687
      %2260 = vmatpush.bf16.msra.mxu0 %v1683
      %2261 = vmatmul.bf16.gmra.mxu0 %v685
      %v2262 = vpop.f32.mrf.mxu0
      %v2263 = vadd.f32 %v2234, %v2262
      %v2264 = vpop.f32.mrf.mxu0
      %v2265 = vadd.f32 %v2236, %v2264
      %2266 = vmatmul.bf16.gmra.mxu0 %v694
      %v2267 = vpop.f32.mrf.mxu0
      %v2268 = vadd.f32 %v2239, %v2267
      %v2269 = vpop.f32.mrf.mxu0
      %v2270 = vadd.f32 %v2241, %v2269
      %2271 = vmatmul.bf16.gmra.mxu0 %v703
      %v2272 = vpop.f32.mrf.mxu0
      %v2273 = vadd.f32 %v2244, %v2272
      %v2274 = vpop.f32.mrf.mxu0
      %v2275 = vadd.f32 %v2246, %v2274
      %2276 = vmatmul.bf16.gmra.mxu0 %v712
      %v2277 = vpop.f32.mrf.mxu0
      %v2278 = vadd.f32 %v2249, %v2277
      %v2279 = vpop.f32.mrf.mxu0
      %v2280 = vadd.f32 %v2251, %v2279
      %2281 = vdwg.mxu0
      %2282 = vmatpush.bf16.msra.mxu0 %v1743
      %2283 = vmatpush.bf16.msra.mxu0 %v1739
      %2284 = vmatpush.bf16.msra.mxu0 %v1735
      %2285 = vmatpush.bf16.msra.mxu0 %v1731
      %2286 = vmatpush.bf16.msra.mxu0 %v1727
      %2287 = vmatpush.bf16.msra.mxu0 %v1723
      %2288 = vmatpush.bf16.msra.mxu0 %v1719
      %2289 = vmatpush.bf16.msra.mxu0 %v1715
      %2290 = vmatmul.bf16.gmra.mxu0 %v686
      %v2291 = vpop.f32.mrf.mxu0
      %v2292 = vadd.f32 %v2263, %v2291
      %v2293 = vpop.f32.mrf.mxu0
      %v2294 = vadd.f32 %v2265, %v2293
      %2295 = vmatmul.bf16.gmra.mxu0 %v695
      %v2296 = vpop.f32.mrf.mxu0
      %v2297 = vadd.f32 %v2268, %v2296
      %v2298 = vpop.f32.mrf.mxu0
      %v2299 = vadd.f32 %v2270, %v2298
      %2300 = vmatmul.bf16.gmra.mxu0 %v704
      %v2301 = vpop.f32.mrf.mxu0
      %v2302 = vadd.f32 %v2273, %v2301
      %v2303 = vpop.f32.mrf.mxu0
      %v2304 = vadd.f32 %v2275, %v2303
      %2305 = vmatmul.bf16.gmra.mxu0 %v713
      %v2306 = vpop.f32.mrf.mxu0
      %v2307 = vadd.f32 %v2278, %v2306
      %v2308 = vpop.f32.mrf.mxu0
      %v2309 = vadd.f32 %v2280, %v2308
      %2310 = vdwg.mxu0
      %2311 = vmatpush.bf16.msra.mxu0 %v1775
      %2312 = vmatpush.bf16.msra.mxu0 %v1771
      %2313 = vmatpush.bf16.msra.mxu0 %v1767
      %2314 = vmatpush.bf16.msra.mxu0 %v1763
      %2315 = vmatpush.bf16.msra.mxu0 %v1759
      %2316 = vmatpush.bf16.msra.mxu0 %v1755
      %2317 = vmatpush.bf16.msra.mxu0 %v1751
      %2318 = vmatpush.bf16.msra.mxu0 %v1747
      %2319 = vmatmul.bf16.gmra.mxu0 %v687
      %v2320 = vpop.f32.mrf.mxu0
      %v2321 = vadd.f32 %v2292, %v2320
      %v2322 = vpop.f32.mrf.mxu0
      %v2323 = vadd.f32 %v2294, %v2322
      %2324 = vmatmul.bf16.gmra.mxu0 %v696
      %v2325 = vpop.f32.mrf.mxu0
      %v2326 = vadd.f32 %v2297, %v2325
      %v2327 = vpop.f32.mrf.mxu0
      %v2328 = vadd.f32 %v2299, %v2327
      %2329 = vmatmul.bf16.gmra.mxu0 %v705
      %v2330 = vpop.f32.mrf.mxu0
      %v2331 = vadd.f32 %v2302, %v2330
      %v2332 = vpop.f32.mrf.mxu0
      %v2333 = vadd.f32 %v2304, %v2332
      %2334 = vmatmul.bf16.gmra.mxu0 %v714
      %v2335 = vpop.f32.mrf.mxu0
      %v2336 = vadd.f32 %v2307, %v2335
      %v2337 = vpop.f32.mrf.mxu0
      %v2338 = vadd.f32 %v2309, %v2337
      %2339 = vdwg.mxu0
      %2340 = vmatpush.bf16.msra.mxu0 %v1807
      %2341 = vmatpush.bf16.msra.mxu0 %v1803
      %2342 = vmatpush.bf16.msra.mxu0 %v1799
      %2343 = vmatpush.bf16.msra.mxu0 %v1795
      %2344 = vmatpush.bf16.msra.mxu0 %v1791
      %2345 = vmatpush.bf16.msra.mxu0 %v1787
      %2346 = vmatpush.bf16.msra.mxu0 %v1783
      %2347 = vmatpush.bf16.msra.mxu0 %v1779
      %2348 = vmatmul.bf16.gmra.mxu0 %v688
      %v2349 = vpop.f32.mrf.mxu0
      %v2350 = vadd.f32 %v2321, %v2349
      %v2351 = vpop.f32.mrf.mxu0
      %v2352 = vadd.f32 %v2323, %v2351
      %2353 = vmatmul.bf16.gmra.mxu0 %v697
      %v2354 = vpop.f32.mrf.mxu0
      %v2355 = vadd.f32 %v2326, %v2354
      %v2356 = vpop.f32.mrf.mxu0
      %v2357 = vadd.f32 %v2328, %v2356
      %2358 = vmatmul.bf16.gmra.mxu0 %v706
      %v2359 = vpop.f32.mrf.mxu0
      %v2360 = vadd.f32 %v2331, %v2359
      %v2361 = vpop.f32.mrf.mxu0
      %v2362 = vadd.f32 %v2333, %v2361
      %2363 = vmatmul.bf16.gmra.mxu0 %v715
      %v2364 = vpop.f32.mrf.mxu0
      %v2365 = vadd.f32 %v2336, %v2364
      %v2366 = vpop.f32.mrf.mxu0
      %v2367 = vadd.f32 %v2338, %v2366
      %2368 = vdwg.mxu0
      %2369 = vmatpush.bf16.msra.mxu0 %v1839
      %2370 = vmatpush.bf16.msra.mxu0 %v1835
      %2371 = vmatpush.bf16.msra.mxu0 %v1831
      %2372 = vmatpush.bf16.msra.mxu0 %v1827
      %2373 = vmatpush.bf16.msra.mxu0 %v1823
      %2374 = vmatpush.bf16.msra.mxu0 %v1819
      %2375 = vmatpush.bf16.msra.mxu0 %v1815
      %2376 = vmatpush.bf16.msra.mxu0 %v1811
      %2377 = vmatmul.bf16.gmra.mxu0 %v689
      %v2378 = vpop.f32.mrf.mxu0
      %v2379 = vadd.f32 %v2350, %v2378
      %v2380 = vpop.f32.mrf.mxu0
      %v2381 = vadd.f32 %v2352, %v2380
      %2382 = vmatmul.bf16.gmra.mxu0 %v698
      %v2383 = vpop.f32.mrf.mxu0
      %v2384 = vadd.f32 %v2355, %v2383
      %v2385 = vpop.f32.mrf.mxu0
      %v2386 = vadd.f32 %v2357, %v2385
      %2387 = vmatmul.bf16.gmra.mxu0 %v707
      %v2388 = vpop.f32.mrf.mxu0
      %v2389 = vadd.f32 %v2360, %v2388
      %v2390 = vpop.f32.mrf.mxu0
      %v2391 = vadd.f32 %v2362, %v2390
      %2392 = vmatmul.bf16.gmra.mxu0 %v716
      %v2393 = vpop.f32.mrf.mxu0
      %v2394 = vadd.f32 %v2365, %v2393
      %v2395 = vpop.f32.mrf.mxu0
      %v2396 = vadd.f32 %v2367, %v2395
      %2397 = vdwg.mxu0
      %2398 = vmatpush.bf16.msra.mxu0 %v1871
      %2399 = vmatpush.bf16.msra.mxu0 %v1867
      %2400 = vmatpush.bf16.msra.mxu0 %v1863
      %2401 = vmatpush.bf16.msra.mxu0 %v1859
      %2402 = vmatpush.bf16.msra.mxu0 %v1855
      %2403 = vmatpush.bf16.msra.mxu0 %v1851
      %2404 = vmatpush.bf16.msra.mxu0 %v1847
      %2405 = vmatpush.bf16.msra.mxu0 %v1843
      %2406 = vmatmul.bf16.gmra.mxu0 %v690
      %v2407 = vpop.f32.mrf.mxu0
      %v2408 = vadd.f32 %v2379, %v2407
      %v2409 = vpop.f32.mrf.mxu0
      %v2410 = vadd.f32 %v2381, %v2409
      %2411 = vmatmul.bf16.gmra.mxu0 %v699
      %v2412 = vpop.f32.mrf.mxu0
      %v2413 = vadd.f32 %v2384, %v2412
      %v2414 = vpop.f32.mrf.mxu0
      %v2415 = vadd.f32 %v2386, %v2414
      %2416 = vmatmul.bf16.gmra.mxu0 %v708
      %v2417 = vpop.f32.mrf.mxu0
      %v2418 = vadd.f32 %v2389, %v2417
      %v2419 = vpop.f32.mrf.mxu0
      %v2420 = vadd.f32 %v2391, %v2419
      %2421 = vmatmul.bf16.gmra.mxu0 %v717
      %v2422 = vpop.f32.mrf.mxu0
      %v2423 = vadd.f32 %v2394, %v2422
      %v2424 = vpop.f32.mrf.mxu0
      %v2425 = vadd.f32 %v2396, %v2424
      %2426 = vdwg.mxu0
      %2427 = vmatpush.bf16.msra.mxu0 %v1903
      %2428 = vmatpush.bf16.msra.mxu0 %v1899
      %2429 = vmatpush.bf16.msra.mxu0 %v1895
      %2430 = vmatpush.bf16.msra.mxu0 %v1891
      %2431 = vmatpush.bf16.msra.mxu0 %v1887
      %2432 = vmatpush.bf16.msra.mxu0 %v1883
      %2433 = vmatpush.bf16.msra.mxu0 %v1879
      %2434 = vmatpush.bf16.msra.mxu0 %v1875
      %2435 = vmatmul.bf16.gmra.mxu0 %v691
      %v2436 = vpop.f32.mrf.mxu0
      %v2437 = vadd.f32 %v2408, %v2436
      %v2438 = vpop.f32.mrf.mxu0
      %v2439 = vadd.f32 %v2410, %v2438
      %2440 = vmatmul.bf16.gmra.mxu0 %v700
      %v2441 = vpop.f32.mrf.mxu0
      %v2442 = vadd.f32 %v2413, %v2441
      %v2443 = vpop.f32.mrf.mxu0
      %v2444 = vadd.f32 %v2415, %v2443
      %2445 = vmatmul.bf16.gmra.mxu0 %v709
      %v2446 = vpop.f32.mrf.mxu0
      %v2447 = vadd.f32 %v2418, %v2446
      %v2448 = vpop.f32.mrf.mxu0
      %v2449 = vadd.f32 %v2420, %v2448
      %2450 = vmatmul.bf16.gmra.mxu0 %v718
      %v2451 = vpop.f32.mrf.mxu0
      %v2452 = vadd.f32 %v2423, %v2451
      %v2453 = vpop.f32.mrf.mxu0
      %v2454 = vadd.f32 %v2425, %v2453
      %2455 = vdwg.mxu0
      %2456 = vmatpush.bf16.msra.mxu0 %v1648
      %2457 = vmatpush.bf16.msra.mxu0 %v1644
      %2458 = vmatpush.bf16.msra.mxu0 %v1640
      %2459 = vmatpush.bf16.msra.mxu0 %v1636
      %2460 = vmatpush.bf16.msra.mxu0 %v1632
      %2461 = vmatpush.bf16.msra.mxu0 %v1628
      %2462 = vmatpush.bf16.msra.mxu0 %v1624
      %2463 = vmatpush.bf16.msra.mxu0 %v1620
      %2464 = vmatmul.bf16.gmra.mxu0 %v683
      %v2465 = vpop.f32.mrf.mxu0
      %v2466 = vadd.f32 %v564, %v2465
      %v2467 = vpop.f32.mrf.mxu0
      %v2468 = vadd.f32 %v564, %v2467
      %2469 = vmatmul.bf16.gmra.mxu0 %v692
      %v2470 = vpop.f32.mrf.mxu0
      %v2471 = vadd.f32 %v564, %v2470
      %v2472 = vpop.f32.mrf.mxu0
      %v2473 = vadd.f32 %v564, %v2472
      %2474 = vmatmul.bf16.gmra.mxu0 %v701
      %v2475 = vpop.f32.mrf.mxu0
      %v2476 = vadd.f32 %v564, %v2475
      %v2477 = vpop.f32.mrf.mxu0
      %v2478 = vadd.f32 %v564, %v2477
      %2479 = vmatmul.bf16.gmra.mxu0 %v710
      %v2480 = vpop.f32.mrf.mxu0
      %v2481 = vadd.f32 %v564, %v2480
      %v2482 = vpop.f32.mrf.mxu0
      %v2483 = vadd.f32 %v564, %v2482
      %2484 = vdwg.mxu0
      %2485 = vmatpush.bf16.msra.mxu0 %v1680
      %2486 = vmatpush.bf16.msra.mxu0 %v1676
      %2487 = vmatpush.bf16.msra.mxu0 %v1672
      %2488 = vmatpush.bf16.msra.mxu0 %v1668
      %2489 = vmatpush.bf16.msra.mxu0 %v1664
      %2490 = vmatpush.bf16.msra.mxu0 %v1660
      %2491 = vmatpush.bf16.msra.mxu0 %v1656
      %2492 = vmatpush.bf16.msra.mxu0 %v1652
      %2493 = vmatmul.bf16.gmra.mxu0 %v684
      %v2494 = vpop.f32.mrf.mxu0
      %v2495 = vadd.f32 %v2466, %v2494
      %v2496 = vpop.f32.mrf.mxu0
      %v2497 = vadd.f32 %v2468, %v2496
      %2498 = vmatmul.bf16.gmra.mxu0 %v693
      %v2499 = vpop.f32.mrf.mxu0
      %v2500 = vadd.f32 %v2471, %v2499
      %v2501 = vpop.f32.mrf.mxu0
      %v2502 = vadd.f32 %v2473, %v2501
      %2503 = vmatmul.bf16.gmra.mxu0 %v702
      %v2504 = vpop.f32.mrf.mxu0
      %v2505 = vadd.f32 %v2476, %v2504
      %v2506 = vpop.f32.mrf.mxu0
      %v2507 = vadd.f32 %v2478, %v2506
      %2508 = vmatmul.bf16.gmra.mxu0 %v711
      %v2509 = vpop.f32.mrf.mxu0
      %v2510 = vadd.f32 %v2481, %v2509
      %v2511 = vpop.f32.mrf.mxu0
      %v2512 = vadd.f32 %v2483, %v2511
      %2513 = vdwg.mxu0
      %2514 = vmatpush.bf16.msra.mxu0 %v1712
      %2515 = vmatpush.bf16.msra.mxu0 %v1708
      %2516 = vmatpush.bf16.msra.mxu0 %v1704
      %2517 = vmatpush.bf16.msra.mxu0 %v1700
      %2518 = vmatpush.bf16.msra.mxu0 %v1696
      %2519 = vmatpush.bf16.msra.mxu0 %v1692
      %2520 = vmatpush.bf16.msra.mxu0 %v1688
      %2521 = vmatpush.bf16.msra.mxu0 %v1684
      %2522 = vmatmul.bf16.gmra.mxu0 %v685
      %v2523 = vpop.f32.mrf.mxu0
      %v2524 = vadd.f32 %v2495, %v2523
      %v2525 = vpop.f32.mrf.mxu0
      %v2526 = vadd.f32 %v2497, %v2525
      %2527 = vmatmul.bf16.gmra.mxu0 %v694
      %v2528 = vpop.f32.mrf.mxu0
      %v2529 = vadd.f32 %v2500, %v2528
      %v2530 = vpop.f32.mrf.mxu0
      %v2531 = vadd.f32 %v2502, %v2530
      %2532 = vmatmul.bf16.gmra.mxu0 %v703
      %v2533 = vpop.f32.mrf.mxu0
      %v2534 = vadd.f32 %v2505, %v2533
      %v2535 = vpop.f32.mrf.mxu0
      %v2536 = vadd.f32 %v2507, %v2535
      %2537 = vmatmul.bf16.gmra.mxu0 %v712
      %v2538 = vpop.f32.mrf.mxu0
      %v2539 = vadd.f32 %v2510, %v2538
      %v2540 = vpop.f32.mrf.mxu0
      %v2541 = vadd.f32 %v2512, %v2540
      %2542 = vdwg.mxu0
      %2543 = vmatpush.bf16.msra.mxu0 %v1744
      %2544 = vmatpush.bf16.msra.mxu0 %v1740
      %2545 = vmatpush.bf16.msra.mxu0 %v1736
      %2546 = vmatpush.bf16.msra.mxu0 %v1732
      %2547 = vmatpush.bf16.msra.mxu0 %v1728
      %2548 = vmatpush.bf16.msra.mxu0 %v1724
      %2549 = vmatpush.bf16.msra.mxu0 %v1720
      %2550 = vmatpush.bf16.msra.mxu0 %v1716
      %2551 = vmatmul.bf16.gmra.mxu0 %v686
      %v2552 = vpop.f32.mrf.mxu0
      %v2553 = vadd.f32 %v2524, %v2552
      %v2554 = vpop.f32.mrf.mxu0
      %v2555 = vadd.f32 %v2526, %v2554
      %2556 = vmatmul.bf16.gmra.mxu0 %v695
      %v2557 = vpop.f32.mrf.mxu0
      %v2558 = vadd.f32 %v2529, %v2557
      %v2559 = vpop.f32.mrf.mxu0
      %v2560 = vadd.f32 %v2531, %v2559
      %2561 = vmatmul.bf16.gmra.mxu0 %v704
      %v2562 = vpop.f32.mrf.mxu0
      %v2563 = vadd.f32 %v2534, %v2562
      %v2564 = vpop.f32.mrf.mxu0
      %v2565 = vadd.f32 %v2536, %v2564
      %2566 = vmatmul.bf16.gmra.mxu0 %v713
      %v2567 = vpop.f32.mrf.mxu0
      %v2568 = vadd.f32 %v2539, %v2567
      %v2569 = vpop.f32.mrf.mxu0
      %v2570 = vadd.f32 %v2541, %v2569
      %2571 = vdwg.mxu0
      %2572 = vmatpush.bf16.msra.mxu0 %v1776
      %2573 = vmatpush.bf16.msra.mxu0 %v1772
      %2574 = vmatpush.bf16.msra.mxu0 %v1768
      %2575 = vmatpush.bf16.msra.mxu0 %v1764
      %2576 = vmatpush.bf16.msra.mxu0 %v1760
      %2577 = vmatpush.bf16.msra.mxu0 %v1756
      %2578 = vmatpush.bf16.msra.mxu0 %v1752
      %2579 = vmatpush.bf16.msra.mxu0 %v1748
      %2580 = vmatmul.bf16.gmra.mxu0 %v687
      %v2581 = vpop.f32.mrf.mxu0
      %v2582 = vadd.f32 %v2553, %v2581
      %v2583 = vpop.f32.mrf.mxu0
      %v2584 = vadd.f32 %v2555, %v2583
      %2585 = vmatmul.bf16.gmra.mxu0 %v696
      %v2586 = vpop.f32.mrf.mxu0
      %v2587 = vadd.f32 %v2558, %v2586
      %v2588 = vpop.f32.mrf.mxu0
      %v2589 = vadd.f32 %v2560, %v2588
      %2590 = vmatmul.bf16.gmra.mxu0 %v705
      %v2591 = vpop.f32.mrf.mxu0
      %v2592 = vadd.f32 %v2563, %v2591
      %v2593 = vpop.f32.mrf.mxu0
      %v2594 = vadd.f32 %v2565, %v2593
      %2595 = vmatmul.bf16.gmra.mxu0 %v714
      %v2596 = vpop.f32.mrf.mxu0
      %v2597 = vadd.f32 %v2568, %v2596
      %v2598 = vpop.f32.mrf.mxu0
      %v2599 = vadd.f32 %v2570, %v2598
      %2600 = vdwg.mxu0
      %2601 = vmatpush.bf16.msra.mxu0 %v1808
      %2602 = vmatpush.bf16.msra.mxu0 %v1804
      %2603 = vmatpush.bf16.msra.mxu0 %v1800
      %2604 = vmatpush.bf16.msra.mxu0 %v1796
      %2605 = vmatpush.bf16.msra.mxu0 %v1792
      %2606 = vmatpush.bf16.msra.mxu0 %v1788
      %2607 = vmatpush.bf16.msra.mxu0 %v1784
      %2608 = vmatpush.bf16.msra.mxu0 %v1780
      %2609 = vmatmul.bf16.gmra.mxu0 %v688
      %v2610 = vpop.f32.mrf.mxu0
      %v2611 = vadd.f32 %v2582, %v2610
      %v2612 = vpop.f32.mrf.mxu0
      %v2613 = vadd.f32 %v2584, %v2612
      %2614 = vmatmul.bf16.gmra.mxu0 %v697
      %v2615 = vpop.f32.mrf.mxu0
      %v2616 = vadd.f32 %v2587, %v2615
      %v2617 = vpop.f32.mrf.mxu0
      %v2618 = vadd.f32 %v2589, %v2617
      %2619 = vmatmul.bf16.gmra.mxu0 %v706
      %v2620 = vpop.f32.mrf.mxu0
      %v2621 = vadd.f32 %v2592, %v2620
      %v2622 = vpop.f32.mrf.mxu0
      %v2623 = vadd.f32 %v2594, %v2622
      %2624 = vmatmul.bf16.gmra.mxu0 %v715
      %v2625 = vpop.f32.mrf.mxu0
      %v2626 = vadd.f32 %v2597, %v2625
      %v2627 = vpop.f32.mrf.mxu0
      %v2628 = vadd.f32 %v2599, %v2627
      %2629 = vdwg.mxu0
      %2630 = vmatpush.bf16.msra.mxu0 %v1840
      %2631 = vmatpush.bf16.msra.mxu0 %v1836
      %2632 = vmatpush.bf16.msra.mxu0 %v1832
      %2633 = vmatpush.bf16.msra.mxu0 %v1828
      %2634 = vmatpush.bf16.msra.mxu0 %v1824
      %2635 = vmatpush.bf16.msra.mxu0 %v1820
      %2636 = vmatpush.bf16.msra.mxu0 %v1816
      %2637 = vmatpush.bf16.msra.mxu0 %v1812
      %2638 = vmatmul.bf16.gmra.mxu0 %v689
      %v2639 = vpop.f32.mrf.mxu0
      %v2640 = vadd.f32 %v2611, %v2639
      %v2641 = vpop.f32.mrf.mxu0
      %v2642 = vadd.f32 %v2613, %v2641
      %2643 = vmatmul.bf16.gmra.mxu0 %v698
      %v2644 = vpop.f32.mrf.mxu0
      %v2645 = vadd.f32 %v2616, %v2644
      %v2646 = vpop.f32.mrf.mxu0
      %v2647 = vadd.f32 %v2618, %v2646
      %2648 = vmatmul.bf16.gmra.mxu0 %v707
      %v2649 = vpop.f32.mrf.mxu0
      %v2650 = vadd.f32 %v2621, %v2649
      %v2651 = vpop.f32.mrf.mxu0
      %v2652 = vadd.f32 %v2623, %v2651
      %2653 = vmatmul.bf16.gmra.mxu0 %v716
      %v2654 = vpop.f32.mrf.mxu0
      %v2655 = vadd.f32 %v2626, %v2654
      %v2656 = vpop.f32.mrf.mxu0
      %v2657 = vadd.f32 %v2628, %v2656
      %2658 = vdwg.mxu0
      %2659 = vmatpush.bf16.msra.mxu0 %v1872
      %2660 = vmatpush.bf16.msra.mxu0 %v1868
      %2661 = vmatpush.bf16.msra.mxu0 %v1864
      %2662 = vmatpush.bf16.msra.mxu0 %v1860
      %2663 = vmatpush.bf16.msra.mxu0 %v1856
      %2664 = vmatpush.bf16.msra.mxu0 %v1852
      %2665 = vmatpush.bf16.msra.mxu0 %v1848
      %2666 = vmatpush.bf16.msra.mxu0 %v1844
      %2667 = vmatmul.bf16.gmra.mxu0 %v690
      %v2668 = vpop.f32.mrf.mxu0
      %v2669 = vadd.f32 %v2640, %v2668
      %v2670 = vpop.f32.mrf.mxu0
      %v2671 = vadd.f32 %v2642, %v2670
      %2672 = vmatmul.bf16.gmra.mxu0 %v699
      %v2673 = vpop.f32.mrf.mxu0
      %v2674 = vadd.f32 %v2645, %v2673
      %v2675 = vpop.f32.mrf.mxu0
      %v2676 = vadd.f32 %v2647, %v2675
      %2677 = vmatmul.bf16.gmra.mxu0 %v708
      %v2678 = vpop.f32.mrf.mxu0
      %v2679 = vadd.f32 %v2650, %v2678
      %v2680 = vpop.f32.mrf.mxu0
      %v2681 = vadd.f32 %v2652, %v2680
      %2682 = vmatmul.bf16.gmra.mxu0 %v717
      %v2683 = vpop.f32.mrf.mxu0
      %v2684 = vadd.f32 %v2655, %v2683
      %v2685 = vpop.f32.mrf.mxu0
      %v2686 = vadd.f32 %v2657, %v2685
      %2687 = vdwg.mxu0
      %2688 = vmatpush.bf16.msra.mxu0 %v1904
      %2689 = vmatpush.bf16.msra.mxu0 %v1900
      %2690 = vmatpush.bf16.msra.mxu0 %v1896
      %2691 = vmatpush.bf16.msra.mxu0 %v1892
      %2692 = vmatpush.bf16.msra.mxu0 %v1888
      %2693 = vmatpush.bf16.msra.mxu0 %v1884
      %2694 = vmatpush.bf16.msra.mxu0 %v1880
      %2695 = vmatpush.bf16.msra.mxu0 %v1876
      %2696 = vmatmul.bf16.gmra.mxu0 %v691
      %v2697 = vpop.f32.mrf.mxu0
      %v2698 = vadd.f32 %v2669, %v2697
      %v2699 = vpop.f32.mrf.mxu0
      %v2700 = vadd.f32 %v2671, %v2699
      %2701 = vmatmul.bf16.gmra.mxu0 %v700
      %v2702 = vpop.f32.mrf.mxu0
      %v2703 = vadd.f32 %v2674, %v2702
      %v2704 = vpop.f32.mrf.mxu0
      %v2705 = vadd.f32 %v2676, %v2704
      %2706 = vmatmul.bf16.gmra.mxu0 %v709
      %v2707 = vpop.f32.mrf.mxu0
      %v2708 = vadd.f32 %v2679, %v2707
      %v2709 = vpop.f32.mrf.mxu0
      %v2710 = vadd.f32 %v2681, %v2709
      %2711 = vmatmul.bf16.gmra.mxu0 %v718
      %v2712 = vpop.f32.mrf.mxu0
      %v2713 = vadd.f32 %v2684, %v2712
      %v2714 = vpop.f32.mrf.mxu0
      %v2715 = vadd.f32 %v2686, %v2714
      %2716 = vdwg.mxu0
      %2717 = vmatpush.bf16.msra.mxu0 %v1649
      %2718 = vmatpush.bf16.msra.mxu0 %v1645
      %2719 = vmatpush.bf16.msra.mxu0 %v1641
      %2720 = vmatpush.bf16.msra.mxu0 %v1637
      %2721 = vmatpush.bf16.msra.mxu0 %v1633
      %2722 = vmatpush.bf16.msra.mxu0 %v1629
      %2723 = vmatpush.bf16.msra.mxu0 %v1625
      %2724 = vmatpush.bf16.msra.mxu0 %v1621
      %2725 = vmatmul.bf16.gmra.mxu0 %v683
      %v2726 = vpop.f32.mrf.mxu0
      %v2727 = vadd.f32 %v565, %v2726
      %v2728 = vpop.f32.mrf.mxu0
      %v2729 = vadd.f32 %v565, %v2728
      %2730 = vmatmul.bf16.gmra.mxu0 %v692
      %v2731 = vpop.f32.mrf.mxu0
      %v2732 = vadd.f32 %v565, %v2731
      %v2733 = vpop.f32.mrf.mxu0
      %v2734 = vadd.f32 %v565, %v2733
      %2735 = vmatmul.bf16.gmra.mxu0 %v701
      %v2736 = vpop.f32.mrf.mxu0
      %v2737 = vadd.f32 %v565, %v2736
      %v2738 = vpop.f32.mrf.mxu0
      %v2739 = vadd.f32 %v565, %v2738
      %2740 = vmatmul.bf16.gmra.mxu0 %v710
      %v2741 = vpop.f32.mrf.mxu0
      %v2742 = vadd.f32 %v565, %v2741
      %v2743 = vpop.f32.mrf.mxu0
      %v2744 = vadd.f32 %v565, %v2743
      %2745 = vdwg.mxu0
      %2746 = vmatpush.bf16.msra.mxu0 %v1681
      %2747 = vmatpush.bf16.msra.mxu0 %v1677
      %2748 = vmatpush.bf16.msra.mxu0 %v1673
      %2749 = vmatpush.bf16.msra.mxu0 %v1669
      %2750 = vmatpush.bf16.msra.mxu0 %v1665
      %2751 = vmatpush.bf16.msra.mxu0 %v1661
      %2752 = vmatpush.bf16.msra.mxu0 %v1657
      %2753 = vmatpush.bf16.msra.mxu0 %v1653
      %2754 = vmatmul.bf16.gmra.mxu0 %v684
      %v2755 = vpop.f32.mrf.mxu0
      %v2756 = vadd.f32 %v2727, %v2755
      %v2757 = vpop.f32.mrf.mxu0
      %v2758 = vadd.f32 %v2729, %v2757
      %2759 = vmatmul.bf16.gmra.mxu0 %v693
      %v2760 = vpop.f32.mrf.mxu0
      %v2761 = vadd.f32 %v2732, %v2760
      %v2762 = vpop.f32.mrf.mxu0
      %v2763 = vadd.f32 %v2734, %v2762
      %2764 = vmatmul.bf16.gmra.mxu0 %v702
      %v2765 = vpop.f32.mrf.mxu0
      %v2766 = vadd.f32 %v2737, %v2765
      %v2767 = vpop.f32.mrf.mxu0
      %v2768 = vadd.f32 %v2739, %v2767
      %2769 = vmatmul.bf16.gmra.mxu0 %v711
      %v2770 = vpop.f32.mrf.mxu0
      %v2771 = vadd.f32 %v2742, %v2770
      %v2772 = vpop.f32.mrf.mxu0
      %v2773 = vadd.f32 %v2744, %v2772
      %2774 = vdwg.mxu0
      %2775 = vmatpush.bf16.msra.mxu0 %v1713
      %2776 = vmatpush.bf16.msra.mxu0 %v1709
      %2777 = vmatpush.bf16.msra.mxu0 %v1705
      %2778 = vmatpush.bf16.msra.mxu0 %v1701
      %2779 = vmatpush.bf16.msra.mxu0 %v1697
      %2780 = vmatpush.bf16.msra.mxu0 %v1693
      %2781 = vmatpush.bf16.msra.mxu0 %v1689
      %2782 = vmatpush.bf16.msra.mxu0 %v1685
      %2783 = vmatmul.bf16.gmra.mxu0 %v685
      %v2784 = vpop.f32.mrf.mxu0
      %v2785 = vadd.f32 %v2756, %v2784
      %v2786 = vpop.f32.mrf.mxu0
      %v2787 = vadd.f32 %v2758, %v2786
      %2788 = vmatmul.bf16.gmra.mxu0 %v694
      %v2789 = vpop.f32.mrf.mxu0
      %v2790 = vadd.f32 %v2761, %v2789
      %v2791 = vpop.f32.mrf.mxu0
      %v2792 = vadd.f32 %v2763, %v2791
      %2793 = vmatmul.bf16.gmra.mxu0 %v703
      %v2794 = vpop.f32.mrf.mxu0
      %v2795 = vadd.f32 %v2766, %v2794
      %v2796 = vpop.f32.mrf.mxu0
      %v2797 = vadd.f32 %v2768, %v2796
      %2798 = vmatmul.bf16.gmra.mxu0 %v712
      %v2799 = vpop.f32.mrf.mxu0
      %v2800 = vadd.f32 %v2771, %v2799
      %v2801 = vpop.f32.mrf.mxu0
      %v2802 = vadd.f32 %v2773, %v2801
      %2803 = vdwg.mxu0
      %2804 = vmatpush.bf16.msra.mxu0 %v1745
      %2805 = vmatpush.bf16.msra.mxu0 %v1741
      %2806 = vmatpush.bf16.msra.mxu0 %v1737
      %2807 = vmatpush.bf16.msra.mxu0 %v1733
      %2808 = vmatpush.bf16.msra.mxu0 %v1729
      %2809 = vmatpush.bf16.msra.mxu0 %v1725
      %2810 = vmatpush.bf16.msra.mxu0 %v1721
      %2811 = vmatpush.bf16.msra.mxu0 %v1717
      %2812 = vmatmul.bf16.gmra.mxu0 %v686
      %v2813 = vpop.f32.mrf.mxu0
      %v2814 = vadd.f32 %v2785, %v2813
      %v2815 = vpop.f32.mrf.mxu0
      %v2816 = vadd.f32 %v2787, %v2815
      %2817 = vmatmul.bf16.gmra.mxu0 %v695
      %v2818 = vpop.f32.mrf.mxu0
      %v2819 = vadd.f32 %v2790, %v2818
      %v2820 = vpop.f32.mrf.mxu0
      %v2821 = vadd.f32 %v2792, %v2820
      %2822 = vmatmul.bf16.gmra.mxu0 %v704
      %v2823 = vpop.f32.mrf.mxu0
      %v2824 = vadd.f32 %v2795, %v2823
      %v2825 = vpop.f32.mrf.mxu0
      %v2826 = vadd.f32 %v2797, %v2825
      %2827 = vmatmul.bf16.gmra.mxu0 %v713
      %v2828 = vpop.f32.mrf.mxu0
      %v2829 = vadd.f32 %v2800, %v2828
      %v2830 = vpop.f32.mrf.mxu0
      %v2831 = vadd.f32 %v2802, %v2830
      %2832 = vdwg.mxu0
      %2833 = vmatpush.bf16.msra.mxu0 %v1777
      %2834 = vmatpush.bf16.msra.mxu0 %v1773
      %2835 = vmatpush.bf16.msra.mxu0 %v1769
      %2836 = vmatpush.bf16.msra.mxu0 %v1765
      %2837 = vmatpush.bf16.msra.mxu0 %v1761
      %2838 = vmatpush.bf16.msra.mxu0 %v1757
      %2839 = vmatpush.bf16.msra.mxu0 %v1753
      %2840 = vmatpush.bf16.msra.mxu0 %v1749
      %2841 = vmatmul.bf16.gmra.mxu0 %v687
      %v2842 = vpop.f32.mrf.mxu0
      %v2843 = vadd.f32 %v2814, %v2842
      %v2844 = vpop.f32.mrf.mxu0
      %v2845 = vadd.f32 %v2816, %v2844
      %2846 = vmatmul.bf16.gmra.mxu0 %v696
      %v2847 = vpop.f32.mrf.mxu0
      %v2848 = vadd.f32 %v2819, %v2847
      %v2849 = vpop.f32.mrf.mxu0
      %v2850 = vadd.f32 %v2821, %v2849
      %2851 = vmatmul.bf16.gmra.mxu0 %v705
      %v2852 = vpop.f32.mrf.mxu0
      %v2853 = vadd.f32 %v2824, %v2852
      %v2854 = vpop.f32.mrf.mxu0
      %v2855 = vadd.f32 %v2826, %v2854
      %2856 = vmatmul.bf16.gmra.mxu0 %v714
      %v2857 = vpop.f32.mrf.mxu0
      %v2858 = vadd.f32 %v2829, %v2857
      %v2859 = vpop.f32.mrf.mxu0
      %v2860 = vadd.f32 %v2831, %v2859
      %2861 = vdwg.mxu0
      %2862 = vmatpush.bf16.msra.mxu0 %v1809
      %2863 = vmatpush.bf16.msra.mxu0 %v1805
      %2864 = vmatpush.bf16.msra.mxu0 %v1801
      %2865 = vmatpush.bf16.msra.mxu0 %v1797
      %2866 = vmatpush.bf16.msra.mxu0 %v1793
      %2867 = vmatpush.bf16.msra.mxu0 %v1789
      %2868 = vmatpush.bf16.msra.mxu0 %v1785
      %2869 = vmatpush.bf16.msra.mxu0 %v1781
      %2870 = vmatmul.bf16.gmra.mxu0 %v688
      %v2871 = vpop.f32.mrf.mxu0
      %v2872 = vadd.f32 %v2843, %v2871
      %v2873 = vpop.f32.mrf.mxu0
      %v2874 = vadd.f32 %v2845, %v2873
      %2875 = vmatmul.bf16.gmra.mxu0 %v697
      %v2876 = vpop.f32.mrf.mxu0
      %v2877 = vadd.f32 %v2848, %v2876
      %v2878 = vpop.f32.mrf.mxu0
      %v2879 = vadd.f32 %v2850, %v2878
      %2880 = vmatmul.bf16.gmra.mxu0 %v706
      %v2881 = vpop.f32.mrf.mxu0
      %v2882 = vadd.f32 %v2853, %v2881
      %v2883 = vpop.f32.mrf.mxu0
      %v2884 = vadd.f32 %v2855, %v2883
      %2885 = vmatmul.bf16.gmra.mxu0 %v715
      %v2886 = vpop.f32.mrf.mxu0
      %v2887 = vadd.f32 %v2858, %v2886
      %v2888 = vpop.f32.mrf.mxu0
      %v2889 = vadd.f32 %v2860, %v2888
      %2890 = vdwg.mxu0
      %2891 = vmatpush.bf16.msra.mxu0 %v1841
      %2892 = vmatpush.bf16.msra.mxu0 %v1837
      %2893 = vmatpush.bf16.msra.mxu0 %v1833
      %2894 = vmatpush.bf16.msra.mxu0 %v1829
      %2895 = vmatpush.bf16.msra.mxu0 %v1825
      %2896 = vmatpush.bf16.msra.mxu0 %v1821
      %2897 = vmatpush.bf16.msra.mxu0 %v1817
      %2898 = vmatpush.bf16.msra.mxu0 %v1813
      %2899 = vmatmul.bf16.gmra.mxu0 %v689
      %v2900 = vpop.f32.mrf.mxu0
      %v2901 = vadd.f32 %v2872, %v2900
      %v2902 = vpop.f32.mrf.mxu0
      %v2903 = vadd.f32 %v2874, %v2902
      %2904 = vmatmul.bf16.gmra.mxu0 %v698
      %v2905 = vpop.f32.mrf.mxu0
      %v2906 = vadd.f32 %v2877, %v2905
      %v2907 = vpop.f32.mrf.mxu0
      %v2908 = vadd.f32 %v2879, %v2907
      %2909 = vmatmul.bf16.gmra.mxu0 %v707
      %v2910 = vpop.f32.mrf.mxu0
      %v2911 = vadd.f32 %v2882, %v2910
      %v2912 = vpop.f32.mrf.mxu0
      %v2913 = vadd.f32 %v2884, %v2912
      %2914 = vmatmul.bf16.gmra.mxu0 %v716
      %v2915 = vpop.f32.mrf.mxu0
      %v2916 = vadd.f32 %v2887, %v2915
      %v2917 = vpop.f32.mrf.mxu0
      %v2918 = vadd.f32 %v2889, %v2917
      %2919 = vdwg.mxu0
      %2920 = vmatpush.bf16.msra.mxu0 %v1873
      %2921 = vmatpush.bf16.msra.mxu0 %v1869
      %2922 = vmatpush.bf16.msra.mxu0 %v1865
      %2923 = vmatpush.bf16.msra.mxu0 %v1861
      %2924 = vmatpush.bf16.msra.mxu0 %v1857
      %2925 = vmatpush.bf16.msra.mxu0 %v1853
      %2926 = vmatpush.bf16.msra.mxu0 %v1849
      %2927 = vmatpush.bf16.msra.mxu0 %v1845
      %2928 = vmatmul.bf16.gmra.mxu0 %v690
      %v2929 = vpop.f32.mrf.mxu0
      %v2930 = vadd.f32 %v2901, %v2929
      %v2931 = vpop.f32.mrf.mxu0
      %v2932 = vadd.f32 %v2903, %v2931
      %2933 = vmatmul.bf16.gmra.mxu0 %v699
      %v2934 = vpop.f32.mrf.mxu0
      %v2935 = vadd.f32 %v2906, %v2934
      %v2936 = vpop.f32.mrf.mxu0
      %v2937 = vadd.f32 %v2908, %v2936
      %2938 = vmatmul.bf16.gmra.mxu0 %v708
      %v2939 = vpop.f32.mrf.mxu0
      %v2940 = vadd.f32 %v2911, %v2939
      %v2941 = vpop.f32.mrf.mxu0
      %v2942 = vadd.f32 %v2913, %v2941
      %2943 = vmatmul.bf16.gmra.mxu0 %v717
      %v2944 = vpop.f32.mrf.mxu0
      %v2945 = vadd.f32 %v2916, %v2944
      %v2946 = vpop.f32.mrf.mxu0
      %v2947 = vadd.f32 %v2918, %v2946
      %2948 = vdwg.mxu0
      %2949 = vmatpush.bf16.msra.mxu0 %v1905
      %2950 = vmatpush.bf16.msra.mxu0 %v1901
      %2951 = vmatpush.bf16.msra.mxu0 %v1897
      %2952 = vmatpush.bf16.msra.mxu0 %v1893
      %2953 = vmatpush.bf16.msra.mxu0 %v1889
      %2954 = vmatpush.bf16.msra.mxu0 %v1885
      %2955 = vmatpush.bf16.msra.mxu0 %v1881
      %2956 = vmatpush.bf16.msra.mxu0 %v1877
      %2957 = vmatmul.bf16.gmra.mxu0 %v691
      %v2958 = vpop.f32.mrf.mxu0
      %v2959 = vadd.f32 %v2930, %v2958
      %v2960 = vpop.f32.mrf.mxu0
      %v2961 = vadd.f32 %v2932, %v2960
      %2962 = vmatmul.bf16.gmra.mxu0 %v700
      %v2963 = vpop.f32.mrf.mxu0
      %v2964 = vadd.f32 %v2935, %v2963
      %v2965 = vpop.f32.mrf.mxu0
      %v2966 = vadd.f32 %v2937, %v2965
      %2967 = vmatmul.bf16.gmra.mxu0 %v709
      %v2968 = vpop.f32.mrf.mxu0
      %v2969 = vadd.f32 %v2940, %v2968
      %v2970 = vpop.f32.mrf.mxu0
      %v2971 = vadd.f32 %v2942, %v2970
      %2972 = vmatmul.bf16.gmra.mxu0 %v718
      %v2973 = vpop.f32.mrf.mxu0
      %v2974 = vadd.f32 %v2945, %v2973
      %v2975 = vpop.f32.mrf.mxu0
      %v2976 = vadd.f32 %v2947, %v2975
      %2977 = vdwg.mxu0
      %2978 = vmatpush.bf16.msra.mxu0 %v1650
      %2979 = vmatpush.bf16.msra.mxu0 %v1646
      %2980 = vmatpush.bf16.msra.mxu0 %v1642
      %2981 = vmatpush.bf16.msra.mxu0 %v1638
      %2982 = vmatpush.bf16.msra.mxu0 %v1634
      %2983 = vmatpush.bf16.msra.mxu0 %v1630
      %2984 = vmatpush.bf16.msra.mxu0 %v1626
      %2985 = vmatpush.bf16.msra.mxu0 %v1622
      %2986 = vmatmul.bf16.gmra.mxu0 %v683
      %v2987 = vpop.f32.mrf.mxu0
      %v2988 = vadd.f32 %v566, %v2987
      %v2989 = vpop.f32.mrf.mxu0
      %v2990 = vadd.f32 %v566, %v2989
      %2991 = vmatmul.bf16.gmra.mxu0 %v692
      %v2992 = vpop.f32.mrf.mxu0
      %v2993 = vadd.f32 %v566, %v2992
      %v2994 = vpop.f32.mrf.mxu0
      %v2995 = vadd.f32 %v566, %v2994
      %2996 = vmatmul.bf16.gmra.mxu0 %v701
      %v2997 = vpop.f32.mrf.mxu0
      %v2998 = vadd.f32 %v566, %v2997
      %v2999 = vpop.f32.mrf.mxu0
      %v3000 = vadd.f32 %v566, %v2999
      %3001 = vmatmul.bf16.gmra.mxu0 %v710
      %v3002 = vpop.f32.mrf.mxu0
      %v3003 = vadd.f32 %v566, %v3002
      %v3004 = vpop.f32.mrf.mxu0
      %v3005 = vadd.f32 %v566, %v3004
      %3006 = vdwg.mxu0
      %3007 = vmatpush.bf16.msra.mxu0 %v1682
      %3008 = vmatpush.bf16.msra.mxu0 %v1678
      %3009 = vmatpush.bf16.msra.mxu0 %v1674
      %3010 = vmatpush.bf16.msra.mxu0 %v1670
      %3011 = vmatpush.bf16.msra.mxu0 %v1666
      %3012 = vmatpush.bf16.msra.mxu0 %v1662
      %3013 = vmatpush.bf16.msra.mxu0 %v1658
      %3014 = vmatpush.bf16.msra.mxu0 %v1654
      %3015 = vmatmul.bf16.gmra.mxu0 %v684
      %v3016 = vpop.f32.mrf.mxu0
      %v3017 = vadd.f32 %v2988, %v3016
      %v3018 = vpop.f32.mrf.mxu0
      %v3019 = vadd.f32 %v2990, %v3018
      %3020 = vmatmul.bf16.gmra.mxu0 %v693
      %v3021 = vpop.f32.mrf.mxu0
      %v3022 = vadd.f32 %v2993, %v3021
      %v3023 = vpop.f32.mrf.mxu0
      %v3024 = vadd.f32 %v2995, %v3023
      %3025 = vmatmul.bf16.gmra.mxu0 %v702
      %v3026 = vpop.f32.mrf.mxu0
      %v3027 = vadd.f32 %v2998, %v3026
      %v3028 = vpop.f32.mrf.mxu0
      %v3029 = vadd.f32 %v3000, %v3028
      %3030 = vmatmul.bf16.gmra.mxu0 %v711
      %v3031 = vpop.f32.mrf.mxu0
      %v3032 = vadd.f32 %v3003, %v3031
      %v3033 = vpop.f32.mrf.mxu0
      %v3034 = vadd.f32 %v3005, %v3033
      %3035 = vdwg.mxu0
      %3036 = vmatpush.bf16.msra.mxu0 %v1714
      %3037 = vmatpush.bf16.msra.mxu0 %v1710
      %3038 = vmatpush.bf16.msra.mxu0 %v1706
      %3039 = vmatpush.bf16.msra.mxu0 %v1702
      %3040 = vmatpush.bf16.msra.mxu0 %v1698
      %3041 = vmatpush.bf16.msra.mxu0 %v1694
      %3042 = vmatpush.bf16.msra.mxu0 %v1690
      %3043 = vmatpush.bf16.msra.mxu0 %v1686
      %3044 = vmatmul.bf16.gmra.mxu0 %v685
      %v3045 = vpop.f32.mrf.mxu0
      %v3046 = vadd.f32 %v3017, %v3045
      %v3047 = vpop.f32.mrf.mxu0
      %v3048 = vadd.f32 %v3019, %v3047
      %3049 = vmatmul.bf16.gmra.mxu0 %v694
      %v3050 = vpop.f32.mrf.mxu0
      %v3051 = vadd.f32 %v3022, %v3050
      %v3052 = vpop.f32.mrf.mxu0
      %v3053 = vadd.f32 %v3024, %v3052
      %3054 = vmatmul.bf16.gmra.mxu0 %v703
      %v3055 = vpop.f32.mrf.mxu0
      %v3056 = vadd.f32 %v3027, %v3055
      %v3057 = vpop.f32.mrf.mxu0
      %v3058 = vadd.f32 %v3029, %v3057
      %3059 = vmatmul.bf16.gmra.mxu0 %v712
      %v3060 = vpop.f32.mrf.mxu0
      %v3061 = vadd.f32 %v3032, %v3060
      %v3062 = vpop.f32.mrf.mxu0
      %v3063 = vadd.f32 %v3034, %v3062
      %3064 = vdwg.mxu0
      %3065 = vmatpush.bf16.msra.mxu0 %v1746
      %3066 = vmatpush.bf16.msra.mxu0 %v1742
      %3067 = vmatpush.bf16.msra.mxu0 %v1738
      %3068 = vmatpush.bf16.msra.mxu0 %v1734
      %3069 = vmatpush.bf16.msra.mxu0 %v1730
      %3070 = vmatpush.bf16.msra.mxu0 %v1726
      %3071 = vmatpush.bf16.msra.mxu0 %v1722
      %3072 = vmatpush.bf16.msra.mxu0 %v1718
      %3073 = vmatmul.bf16.gmra.mxu0 %v686
      %v3074 = vpop.f32.mrf.mxu0
      %v3075 = vadd.f32 %v3046, %v3074
      %v3076 = vpop.f32.mrf.mxu0
      %v3077 = vadd.f32 %v3048, %v3076
      %3078 = vmatmul.bf16.gmra.mxu0 %v695
      %v3079 = vpop.f32.mrf.mxu0
      %v3080 = vadd.f32 %v3051, %v3079
      %v3081 = vpop.f32.mrf.mxu0
      %v3082 = vadd.f32 %v3053, %v3081
      %3083 = vmatmul.bf16.gmra.mxu0 %v704
      %v3084 = vpop.f32.mrf.mxu0
      %v3085 = vadd.f32 %v3056, %v3084
      %v3086 = vpop.f32.mrf.mxu0
      %v3087 = vadd.f32 %v3058, %v3086
      %3088 = vmatmul.bf16.gmra.mxu0 %v713
      %v3089 = vpop.f32.mrf.mxu0
      %v3090 = vadd.f32 %v3061, %v3089
      %v3091 = vpop.f32.mrf.mxu0
      %v3092 = vadd.f32 %v3063, %v3091
      %3093 = vdwg.mxu0
      %3094 = vmatpush.bf16.msra.mxu0 %v1778
      %3095 = vmatpush.bf16.msra.mxu0 %v1774
      %3096 = vmatpush.bf16.msra.mxu0 %v1770
      %3097 = vmatpush.bf16.msra.mxu0 %v1766
      %3098 = vmatpush.bf16.msra.mxu0 %v1762
      %3099 = vmatpush.bf16.msra.mxu0 %v1758
      %3100 = vmatpush.bf16.msra.mxu0 %v1754
      %3101 = vmatpush.bf16.msra.mxu0 %v1750
      %3102 = vmatmul.bf16.gmra.mxu0 %v687
      %v3103 = vpop.f32.mrf.mxu0
      %v3104 = vadd.f32 %v3075, %v3103
      %v3105 = vpop.f32.mrf.mxu0
      %v3106 = vadd.f32 %v3077, %v3105
      %3107 = vmatmul.bf16.gmra.mxu0 %v696
      %v3108 = vpop.f32.mrf.mxu0
      %v3109 = vadd.f32 %v3080, %v3108
      %v3110 = vpop.f32.mrf.mxu0
      %v3111 = vadd.f32 %v3082, %v3110
      %3112 = vmatmul.bf16.gmra.mxu0 %v705
      %v3113 = vpop.f32.mrf.mxu0
      %v3114 = vadd.f32 %v3085, %v3113
      %v3115 = vpop.f32.mrf.mxu0
      %v3116 = vadd.f32 %v3087, %v3115
      %3117 = vmatmul.bf16.gmra.mxu0 %v714
      %v3118 = vpop.f32.mrf.mxu0
      %v3119 = vadd.f32 %v3090, %v3118
      %v3120 = vpop.f32.mrf.mxu0
      %v3121 = vadd.f32 %v3092, %v3120
      %3122 = vdwg.mxu0
      %3123 = vmatpush.bf16.msra.mxu0 %v1810
      %3124 = vmatpush.bf16.msra.mxu0 %v1806
      %3125 = vmatpush.bf16.msra.mxu0 %v1802
      %3126 = vmatpush.bf16.msra.mxu0 %v1798
      %3127 = vmatpush.bf16.msra.mxu0 %v1794
      %3128 = vmatpush.bf16.msra.mxu0 %v1790
      %3129 = vmatpush.bf16.msra.mxu0 %v1786
      %3130 = vmatpush.bf16.msra.mxu0 %v1782
      %3131 = vmatmul.bf16.gmra.mxu0 %v688
      %v3132 = vpop.f32.mrf.mxu0
      %v3133 = vadd.f32 %v3104, %v3132
      %v3134 = vpop.f32.mrf.mxu0
      %v3135 = vadd.f32 %v3106, %v3134
      %3136 = vmatmul.bf16.gmra.mxu0 %v697
      %v3137 = vpop.f32.mrf.mxu0
      %v3138 = vadd.f32 %v3109, %v3137
      %v3139 = vpop.f32.mrf.mxu0
      %v3140 = vadd.f32 %v3111, %v3139
      %3141 = vmatmul.bf16.gmra.mxu0 %v706
      %v3142 = vpop.f32.mrf.mxu0
      %v3143 = vadd.f32 %v3114, %v3142
      %v3144 = vpop.f32.mrf.mxu0
      %v3145 = vadd.f32 %v3116, %v3144
      %3146 = vmatmul.bf16.gmra.mxu0 %v715
      %v3147 = vpop.f32.mrf.mxu0
      %v3148 = vadd.f32 %v3119, %v3147
      %v3149 = vpop.f32.mrf.mxu0
      %v3150 = vadd.f32 %v3121, %v3149
      %3151 = vdwg.mxu0
      %3152 = vmatpush.bf16.msra.mxu0 %v1842
      %3153 = vmatpush.bf16.msra.mxu0 %v1838
      %3154 = vmatpush.bf16.msra.mxu0 %v1834
      %3155 = vmatpush.bf16.msra.mxu0 %v1830
      %3156 = vmatpush.bf16.msra.mxu0 %v1826
      %3157 = vmatpush.bf16.msra.mxu0 %v1822
      %3158 = vmatpush.bf16.msra.mxu0 %v1818
      %3159 = vmatpush.bf16.msra.mxu0 %v1814
      %3160 = vmatmul.bf16.gmra.mxu0 %v689
      %v3161 = vpop.f32.mrf.mxu0
      %v3162 = vadd.f32 %v3133, %v3161
      %v3163 = vpop.f32.mrf.mxu0
      %v3164 = vadd.f32 %v3135, %v3163
      %3165 = vmatmul.bf16.gmra.mxu0 %v698
      %v3166 = vpop.f32.mrf.mxu0
      %v3167 = vadd.f32 %v3138, %v3166
      %v3168 = vpop.f32.mrf.mxu0
      %v3169 = vadd.f32 %v3140, %v3168
      %3170 = vmatmul.bf16.gmra.mxu0 %v707
      %v3171 = vpop.f32.mrf.mxu0
      %v3172 = vadd.f32 %v3143, %v3171
      %v3173 = vpop.f32.mrf.mxu0
      %v3174 = vadd.f32 %v3145, %v3173
      %3175 = vmatmul.bf16.gmra.mxu0 %v716
      %v3176 = vpop.f32.mrf.mxu0
      %v3177 = vadd.f32 %v3148, %v3176
      %v3178 = vpop.f32.mrf.mxu0
      %v3179 = vadd.f32 %v3150, %v3178
      %3180 = vdwg.mxu0
      %3181 = vmatpush.bf16.msra.mxu0 %v1874
      %3182 = vmatpush.bf16.msra.mxu0 %v1870
      %3183 = vmatpush.bf16.msra.mxu0 %v1866
      %3184 = vmatpush.bf16.msra.mxu0 %v1862
      %3185 = vmatpush.bf16.msra.mxu0 %v1858
      %3186 = vmatpush.bf16.msra.mxu0 %v1854
      %3187 = vmatpush.bf16.msra.mxu0 %v1850
      %3188 = vmatpush.bf16.msra.mxu0 %v1846
      %3189 = vmatmul.bf16.gmra.mxu0 %v690
      %v3190 = vpop.f32.mrf.mxu0
      %v3191 = vadd.f32 %v3162, %v3190
      %v3192 = vpop.f32.mrf.mxu0
      %v3193 = vadd.f32 %v3164, %v3192
      %3194 = vmatmul.bf16.gmra.mxu0 %v699
      %v3195 = vpop.f32.mrf.mxu0
      %v3196 = vadd.f32 %v3167, %v3195
      %v3197 = vpop.f32.mrf.mxu0
      %v3198 = vadd.f32 %v3169, %v3197
      %3199 = vmatmul.bf16.gmra.mxu0 %v708
      %v3200 = vpop.f32.mrf.mxu0
      %v3201 = vadd.f32 %v3172, %v3200
      %v3202 = vpop.f32.mrf.mxu0
      %v3203 = vadd.f32 %v3174, %v3202
      %3204 = vmatmul.bf16.gmra.mxu0 %v717
      %v3205 = vpop.f32.mrf.mxu0
      %v3206 = vadd.f32 %v3177, %v3205
      %v3207 = vpop.f32.mrf.mxu0
      %v3208 = vadd.f32 %v3179, %v3207
      %3209 = vdwg.mxu0
      %3210 = vmatpush.bf16.msra.mxu0 %v1906
      %3211 = vmatpush.bf16.msra.mxu0 %v1902
      %3212 = vmatpush.bf16.msra.mxu0 %v1898
      %3213 = vmatpush.bf16.msra.mxu0 %v1894
      %3214 = vmatpush.bf16.msra.mxu0 %v1890
      %3215 = vmatpush.bf16.msra.mxu0 %v1886
      %3216 = vmatpush.bf16.msra.mxu0 %v1882
      %3217 = vmatpush.bf16.msra.mxu0 %v1878
      %3218 = vmatmul.bf16.gmra.mxu0 %v691
      %v3219 = vpop.f32.mrf.mxu0
      %v3220 = vadd.f32 %v3191, %v3219
      %v3221 = vpop.f32.mrf.mxu0
      %v3222 = vadd.f32 %v3193, %v3221
      %3223 = vmatmul.bf16.gmra.mxu0 %v700
      %v3224 = vpop.f32.mrf.mxu0
      %v3225 = vadd.f32 %v3196, %v3224
      %v3226 = vpop.f32.mrf.mxu0
      %v3227 = vadd.f32 %v3198, %v3226
      %3228 = vmatmul.bf16.gmra.mxu0 %v709
      %v3229 = vpop.f32.mrf.mxu0
      %v3230 = vadd.f32 %v3201, %v3229
      %v3231 = vpop.f32.mrf.mxu0
      %v3232 = vadd.f32 %v3203, %v3231
      %3233 = vmatmul.bf16.gmra.mxu0 %v718
      %v3234 = vpop.f32.mrf.mxu0
      %v3235 = vadd.f32 %v3206, %v3234
      %v3236 = vpop.f32.mrf.mxu0
      %v3237 = vadd.f32 %v3208, %v3236
      %3238 = vdwg.mxu0
      %v3239 = vmax.f32 %v2437, 0.0
      %v3240 = vmax.f32 %v2698, 0.0
      %v3241 = vmax.f32 %v2959, 0.0
      %v3242 = vmax.f32 %v3220, 0.0
      %v3243 = vmax.f32 %v2439, 0.0
      %v3244 = vmax.f32 %v2700, 0.0
      %v3245 = vmax.f32 %v2961, 0.0
      %v3246 = vmax.f32 %v3222, 0.0
      %v3247 = vmax.f32 %v2442, 0.0
      %v3248 = vmax.f32 %v2703, 0.0
      %v3249 = vmax.f32 %v2964, 0.0
      %v3250 = vmax.f32 %v3225, 0.0
      %v3251 = vmax.f32 %v2444, 0.0
      %v3252 = vmax.f32 %v2705, 0.0
      %v3253 = vmax.f32 %v2966, 0.0
      %v3254 = vmax.f32 %v3227, 0.0
      %v3255 = vmax.f32 %v2447, 0.0
      %v3256 = vmax.f32 %v2708, 0.0
      %v3257 = vmax.f32 %v2969, 0.0
      %v3258 = vmax.f32 %v3230, 0.0
      %v3259 = vmax.f32 %v2449, 0.0
      %v3260 = vmax.f32 %v2710, 0.0
      %v3261 = vmax.f32 %v2971, 0.0
      %v3262 = vmax.f32 %v3232, 0.0
      %v3263 = vmax.f32 %v2452, 0.0
      %v3264 = vmax.f32 %v2713, 0.0
      %v3265 = vmax.f32 %v2974, 0.0
      %v3266 = vmax.f32 %v3235, 0.0
      %v3267 = vmax.f32 %v2454, 0.0
      %v3268 = vmax.f32 %v2715, 0.0
      %v3269 = vmax.f32 %v2976, 0.0
      %v3270 = vmax.f32 %v3237, 0.0
      %v3271 = vpack.c.bf16 %v3243, %v3239
      %v3272 = vpack.c.bf16 %v3244, %v3240
      %v3273 = vpack.c.bf16 %v3245, %v3241
      %v3274 = vpack.c.bf16 %v3246, %v3242
      %v3275 = vpack.c.bf16 %v3251, %v3247
      %v3276 = vpack.c.bf16 %v3252, %v3248
      %v3277 = vpack.c.bf16 %v3253, %v3249
      %v3278 = vpack.c.bf16 %v3254, %v3250
      %v3279 = vpack.c.bf16 %v3259, %v3255
      %v3280 = vpack.c.bf16 %v3260, %v3256
      %v3281 = vpack.c.bf16 %v3261, %v3257
      %v3282 = vpack.c.bf16 %v3262, %v3258
      %v3283 = vpack.c.bf16 %v3267, %v3263
      %v3284 = vpack.c.bf16 %v3268, %v3264
      %v3285 = vpack.c.bf16 %v3269, %v3265
      %v3286 = vpack.c.bf16 %v3270, %v3266
      %v3287 = vld [vmem:[%s3] sm:$0xff]
      %v3288 = vld [vmem:[%s3 + $0x8] sm:$0xff]
      %v3289 = vld [vmem:[%s3 + $0x10] sm:$0xff]
      %v3290 = vld [vmem:[%s3 + $0x18] sm:$0xff]
      %v3291 = vld [vmem:[%s3 + $0x20] sm:$0xff]
      %v3292 = vld [vmem:[%s3 + $0x28] sm:$0xff]
      %v3293 = vld [vmem:[%s3 + $0x30] sm:$0xff]
      %v3294 = vld [vmem:[%s3 + $0x38] sm:$0xff]
      %v3295 = vld [vmem:[%s3 + $0x40] sm:$0xff]
      %v3296 = vld [vmem:[%s3 + $0x48] sm:$0xff]
      %v3297 = vld [vmem:[%s3 + $0x50] sm:$0xff]
      %v3298 = vld [vmem:[%s3 + $0x58] sm:$0xff]
      %v3299 = vld [vmem:[%s3 + $0x60] sm:$0xff]
      %v3300 = vld [vmem:[%s3 + $0x68] sm:$0xff]
      %v3301 = vld [vmem:[%s3 + $0x70] sm:$0xff]
      %v3302 = vld [vmem:[%s3 + $0x78] sm:$0xff]
      %v3303 = vld [vmem:[%s3 + $0x80] sm:$0xff]
      %v3304 = vld [vmem:[%s3 + $0x88] sm:$0xff]
      %v3305 = vld [vmem:[%s3 + $0x90] sm:$0xff]
      %v3306 = vld [vmem:[%s3 + $0x98] sm:$0xff]
      %v3307 = vld [vmem:[%s3 + $0xa0] sm:$0xff]
      %v3308 = vld [vmem:[%s3 + $0xa8] sm:$0xff]
      %v3309 = vld [vmem:[%s3 + $0xb0] sm:$0xff]
      %v3310 = vld [vmem:[%s3 + $0xb8] sm:$0xff]
      %v3311 = vld [vmem:[%s3 + $0xc0] sm:$0xff]
      %v3312 = vld [vmem:[%s3 + $0xc8] sm:$0xff]
      %v3313 = vld [vmem:[%s3 + $0xd0] sm:$0xff]
      %v3314 = vld [vmem:[%s3 + $0xd8] sm:$0xff]
      %v3315 = vld [vmem:[%s3 + $0xe0] sm:$0xff]
      %v3316 = vld [vmem:[%s3 + $0xe8] sm:$0xff]
      %v3317 = vld [vmem:[%s3 + $0xf0] sm:$0xff]
      %v3318 = vld [vmem:[%s3 + $0xf8] sm:$0xff]
      %v3319 = vld [vmem:[%s3 + $0x100] sm:$0xff]
      %v3320 = vld [vmem:[%s3 + $0x108] sm:$0xff]
      %v3321 = vld [vmem:[%s3 + $0x110] sm:$0xff]
      %v3322 = vld [vmem:[%s3 + $0x118] sm:$0xff]
      %v3323 = vld [vmem:[%s3 + $0x120] sm:$0xff]
      %v3324 = vld [vmem:[%s3 + $0x128] sm:$0xff]
      %v3325 = vld [vmem:[%s3 + $0x130] sm:$0xff]
      %v3326 = vld [vmem:[%s3 + $0x138] sm:$0xff]
      %v3327 = vld [vmem:[%s3 + $0x140] sm:$0xff]
      %v3328 = vld [vmem:[%s3 + $0x148] sm:$0xff]
      %v3329 = vld [vmem:[%s3 + $0x150] sm:$0xff]
      %v3330 = vld [vmem:[%s3 + $0x158] sm:$0xff]
      %v3331 = vld [vmem:[%s3 + $0x160] sm:$0xff]
      %v3332 = vld [vmem:[%s3 + $0x168] sm:$0xff]
      %v3333 = vld [vmem:[%s3 + $0x170] sm:$0xff]
      %v3334 = vld [vmem:[%s3 + $0x178] sm:$0xff]
      %v3335 = vld [vmem:[%s3 + $0x180] sm:$0xff]
      %v3336 = vld [vmem:[%s3 + $0x188] sm:$0xff]
      %v3337 = vld [vmem:[%s3 + $0x190] sm:$0xff]
      %v3338 = vld [vmem:[%s3 + $0x198] sm:$0xff]
      %v3339 = vld [vmem:[%s3 + $0x1a0] sm:$0xff]
      %v3340 = vld [vmem:[%s3 + $0x1a8] sm:$0xff]
      %v3341 = vld [vmem:[%s3 + $0x1b0] sm:$0xff]
      %v3342 = vld [vmem:[%s3 + $0x1b8] sm:$0xff]
      %v3343 = vld [vmem:[%s3 + $0x1c0] sm:$0xff]
      %v3344 = vld [vmem:[%s3 + $0x1c8] sm:$0xff]
      %v3345 = vld [vmem:[%s3 + $0x1d0] sm:$0xff]
      %v3346 = vld [vmem:[%s3 + $0x1d8] sm:$0xff]
      %v3347 = vld [vmem:[%s3 + $0x1e0] sm:$0xff]
      %v3348 = vld [vmem:[%s3 + $0x1e8] sm:$0xff]
      %v3349 = vld [vmem:[%s3 + $0x1f0] sm:$0xff]
      %v3350 = vld [vmem:[%s3 + $0x1f8] sm:$0xff]
      %v3351 = vld [vmem:[%s4] sm:$0x3]
      %v3353 = vperm.slane %v3351, 0
      %v3354 = vperm.slane %v3351, 1
      %v3421 = vunpack.c.l.b16 %v3287
      %v3422 = vunpack.c.h.b16 %v3287
      %v3423 = vunpack.c.l.b16 %v3288
      %v3424 = vunpack.c.h.b16 %v3288
      %v3425 = vunpack.c.l.b16 %v3289
      %v3426 = vunpack.c.h.b16 %v3289
      %v3427 = vunpack.c.l.b16 %v3290
      %v3428 = vunpack.c.h.b16 %v3290
      %v3429 = vunpack.c.l.b16 %v3291
      %v3430 = vunpack.c.h.b16 %v3291
      %v3431 = vunpack.c.l.b16 %v3292
      %v3432 = vunpack.c.h.b16 %v3292
      %v3433 = vunpack.c.l.b16 %v3293
      %v3434 = vunpack.c.h.b16 %v3293
      %v3435 = vunpack.c.l.b16 %v3294
      %v3436 = vunpack.c.h.b16 %v3294
      %v3437 = vunpack.c.l.b16 %v3295
      %v3438 = vunpack.c.h.b16 %v3295
      %v3439 = vunpack.c.l.b16 %v3296
      %v3440 = vunpack.c.h.b16 %v3296
      %v3441 = vunpack.c.l.b16 %v3297
      %v3442 = vunpack.c.h.b16 %v3297
      %v3443 = vunpack.c.l.b16 %v3298
      %v3444 = vunpack.c.h.b16 %v3298
      %v3445 = vunpack.c.l.b16 %v3299
      %v3446 = vunpack.c.h.b16 %v3299
      %v3447 = vunpack.c.l.b16 %v3300
      %v3448 = vunpack.c.h.b16 %v3300
      %v3449 = vunpack.c.l.b16 %v3301
      %v3450 = vunpack.c.h.b16 %v3301
      %v3451 = vunpack.c.l.b16 %v3302
      %v3452 = vunpack.c.h.b16 %v3302
      %v3453 = vunpack.c.l.b16 %v3303
      %v3454 = vunpack.c.h.b16 %v3303
      %v3455 = vunpack.c.l.b16 %v3304
      %v3456 = vunpack.c.h.b16 %v3304
      %v3457 = vunpack.c.l.b16 %v3305
      %v3458 = vunpack.c.h.b16 %v3305
      %v3459 = vunpack.c.l.b16 %v3306
      %v3460 = vunpack.c.h.b16 %v3306
      %v3461 = vunpack.c.l.b16 %v3307
      %v3462 = vunpack.c.h.b16 %v3307
      %v3463 = vunpack.c.l.b16 %v3308
      %v3464 = vunpack.c.h.b16 %v3308
      %v3465 = vunpack.c.l.b16 %v3309
      %v3466 = vunpack.c.h.b16 %v3309
      %v3467 = vunpack.c.l.b16 %v3310
      %v3468 = vunpack.c.h.b16 %v3310
      %v3469 = vunpack.c.l.b16 %v3311
      %v3470 = vunpack.c.h.b16 %v3311
      %v3471 = vunpack.c.l.b16 %v3312
      %v3472 = vunpack.c.h.b16 %v3312
      %v3473 = vunpack.c.l.b16 %v3313
      %v3474 = vunpack.c.h.b16 %v3313
      %v3475 = vunpack.c.l.b16 %v3314
      %v3476 = vunpack.c.h.b16 %v3314
      %v3477 = vunpack.c.l.b16 %v3315
      %v3478 = vunpack.c.h.b16 %v3315
      %v3479 = vunpack.c.l.b16 %v3316
      %v3480 = vunpack.c.h.b16 %v3316
      %v3481 = vunpack.c.l.b16 %v3317
      %v3482 = vunpack.c.h.b16 %v3317
      %v3483 = vunpack.c.l.b16 %v3318
      %v3484 = vunpack.c.h.b16 %v3318
      %v3485 = vunpack.c.l.b16 %v3319
      %v3486 = vunpack.c.h.b16 %v3319
      %v3487 = vunpack.c.l.b16 %v3320
      %v3488 = vunpack.c.h.b16 %v3320
      %v3489 = vunpack.c.l.b16 %v3321
      %v3490 = vunpack.c.h.b16 %v3321
      %v3491 = vunpack.c.l.b16 %v3322
      %v3492 = vunpack.c.h.b16 %v3322
      %v3493 = vunpack.c.l.b16 %v3323
      %v3494 = vunpack.c.h.b16 %v3323
      %v3495 = vunpack.c.l.b16 %v3324
      %v3496 = vunpack.c.h.b16 %v3324
      %v3497 = vunpack.c.l.b16 %v3325
      %v3498 = vunpack.c.h.b16 %v3325
      %v3499 = vunpack.c.l.b16 %v3326
      %v3500 = vunpack.c.h.b16 %v3326
      %v3501 = vunpack.c.l.b16 %v3327
      %v3502 = vunpack.c.h.b16 %v3327
      %v3503 = vunpack.c.l.b16 %v3328
      %v3504 = vunpack.c.h.b16 %v3328
      %v3505 = vunpack.c.l.b16 %v3329
      %v3506 = vunpack.c.h.b16 %v3329
      %v3507 = vunpack.c.l.b16 %v3330
      %v3508 = vunpack.c.h.b16 %v3330
      %v3509 = vunpack.c.l.b16 %v3331
      %v3510 = vunpack.c.h.b16 %v3331
      %v3511 = vunpack.c.l.b16 %v3332
      %v3512 = vunpack.c.h.b16 %v3332
      %v3513 = vunpack.c.l.b16 %v3333
      %v3514 = vunpack.c.h.b16 %v3333
      %v3515 = vunpack.c.l.b16 %v3334
      %v3516 = vunpack.c.h.b16 %v3334
      %v3517 = vunpack.c.l.b16 %v3335
      %v3518 = vunpack.c.h.b16 %v3335
      %v3519 = vunpack.c.l.b16 %v3336
      %v3520 = vunpack.c.h.b16 %v3336
      %v3521 = vunpack.c.l.b16 %v3337
      %v3522 = vunpack.c.h.b16 %v3337
      %v3523 = vunpack.c.l.b16 %v3338
      %v3524 = vunpack.c.h.b16 %v3338
      %v3525 = vunpack.c.l.b16 %v3339
      %v3526 = vunpack.c.h.b16 %v3339
      %v3527 = vunpack.c.l.b16 %v3340
      %v3528 = vunpack.c.h.b16 %v3340
      %v3529 = vunpack.c.l.b16 %v3341
      %v3530 = vunpack.c.h.b16 %v3341
      %v3531 = vunpack.c.l.b16 %v3342
      %v3532 = vunpack.c.h.b16 %v3342
      %v3533 = vunpack.c.l.b16 %v3343
      %v3534 = vunpack.c.h.b16 %v3343
      %v3535 = vunpack.c.l.b16 %v3344
      %v3536 = vunpack.c.h.b16 %v3344
      %v3537 = vunpack.c.l.b16 %v3345
      %v3538 = vunpack.c.h.b16 %v3345
      %v3539 = vunpack.c.l.b16 %v3346
      %v3540 = vunpack.c.h.b16 %v3346
      %v3541 = vunpack.c.l.b16 %v3347
      %v3542 = vunpack.c.h.b16 %v3347
      %v3543 = vunpack.c.l.b16 %v3348
      %v3544 = vunpack.c.h.b16 %v3348
      %v3545 = vunpack.c.l.b16 %v3349
      %v3546 = vunpack.c.h.b16 %v3349
      %v3547 = vunpack.c.l.b16 %v3350
      %v3548 = vunpack.c.h.b16 %v3350
      %v3549 = vpack.c.b16 %v3423, %v3421
      %v3550 = vpack.c.b16 %v3424, %v3422
      %v3551 = vpack.c.b16 %v3427, %v3425
      %v3552 = vpack.c.b16 %v3428, %v3426
      %v3553 = vpack.c.b16 %v3431, %v3429
      %v3554 = vpack.c.b16 %v3432, %v3430
      %v3555 = vpack.c.b16 %v3435, %v3433
      %v3556 = vpack.c.b16 %v3436, %v3434
      %v3557 = vpack.c.b16 %v3439, %v3437
      %v3558 = vpack.c.b16 %v3440, %v3438
      %v3559 = vpack.c.b16 %v3443, %v3441
      %v3560 = vpack.c.b16 %v3444, %v3442
      %v3561 = vpack.c.b16 %v3447, %v3445
      %v3562 = vpack.c.b16 %v3448, %v3446
      %v3563 = vpack.c.b16 %v3451, %v3449
      %v3564 = vpack.c.b16 %v3452, %v3450
      %v3565 = vpack.c.b16 %v3455, %v3453
      %v3566 = vpack.c.b16 %v3456, %v3454
      %v3567 = vpack.c.b16 %v3459, %v3457
      %v3568 = vpack.c.b16 %v3460, %v3458
      %v3569 = vpack.c.b16 %v3463, %v3461
      %v3570 = vpack.c.b16 %v3464, %v3462
      %v3571 = vpack.c.b16 %v3467, %v3465
      %v3572 = vpack.c.b16 %v3468, %v3466
      %v3573 = vpack.c.b16 %v3471, %v3469
      %v3574 = vpack.c.b16 %v3472, %v3470
      %v3575 = vpack.c.b16 %v3475, %v3473
      %v3576 = vpack.c.b16 %v3476, %v3474
      %v3577 = vpack.c.b16 %v3479, %v3477
      %v3578 = vpack.c.b16 %v3480, %v3478
      %v3579 = vpack.c.b16 %v3483, %v3481
      %v3580 = vpack.c.b16 %v3484, %v3482
      %v3581 = vpack.c.b16 %v3487, %v3485
      %v3582 = vpack.c.b16 %v3488, %v3486
      %v3583 = vpack.c.b16 %v3491, %v3489
      %v3584 = vpack.c.b16 %v3492, %v3490
      %v3585 = vpack.c.b16 %v3495, %v3493
      %v3586 = vpack.c.b16 %v3496, %v3494
      %v3587 = vpack.c.b16 %v3499, %v3497
      %v3588 = vpack.c.b16 %v3500, %v3498
      %v3589 = vpack.c.b16 %v3503, %v3501
      %v3590 = vpack.c.b16 %v3504, %v3502
      %v3591 = vpack.c.b16 %v3507, %v3505
      %v3592 = vpack.c.b16 %v3508, %v3506
      %v3593 = vpack.c.b16 %v3511, %v3509
      %v3594 = vpack.c.b16 %v3512, %v3510
      %v3595 = vpack.c.b16 %v3515, %v3513
      %v3596 = vpack.c.b16 %v3516, %v3514
      %v3597 = vpack.c.b16 %v3519, %v3517
      %v3598 = vpack.c.b16 %v3520, %v3518
      %v3599 = vpack.c.b16 %v3523, %v3521
      %v3600 = vpack.c.b16 %v3524, %v3522
      %v3601 = vpack.c.b16 %v3527, %v3525
      %v3602 = vpack.c.b16 %v3528, %v3526
      %v3603 = vpack.c.b16 %v3531, %v3529
      %v3604 = vpack.c.b16 %v3532, %v3530
      %v3605 = vpack.c.b16 %v3535, %v3533
      %v3606 = vpack.c.b16 %v3536, %v3534
      %v3607 = vpack.c.b16 %v3539, %v3537
      %v3608 = vpack.c.b16 %v3540, %v3538
      %v3609 = vpack.c.b16 %v3543, %v3541
      %v3610 = vpack.c.b16 %v3544, %v3542
      %v3611 = vpack.c.b16 %v3547, %v3545
      %v3612 = vpack.c.b16 %v3548, %v3546
      %3677 = vmatpush.bf16.msra.mxu0 %v3563
      %3678 = vmatpush.bf16.msra.mxu0 %v3561
      %3679 = vmatpush.bf16.msra.mxu0 %v3559
      %3680 = vmatpush.bf16.msra.mxu0 %v3557
      %3681 = vmatpush.bf16.msra.mxu0 %v3555
      %3682 = vmatpush.bf16.msra.mxu0 %v3553
      %3683 = vmatpush.bf16.msra.mxu0 %v3551
      %3684 = vmatpush.bf16.msra.mxu0 %v3549
      %3685 = vmatmul.bf16.gmra.mxu0 %v3271
      %v3686 = vpop.f32.mrf.mxu0
      %v3687 = vadd.f32 %v3353, %v3686
      %v3688 = vpop.f32.mrf.mxu0
      %v3689 = vadd.f32 %v3353, %v3688
      %3690 = vmatmul.bf16.gmra.mxu0 %v3275
      %v3691 = vpop.f32.mrf.mxu0
      %v3692 = vadd.f32 %v3353, %v3691
      %v3693 = vpop.f32.mrf.mxu0
      %v3694 = vadd.f32 %v3353, %v3693
      %3695 = vmatmul.bf16.gmra.mxu0 %v3279
      %v3696 = vpop.f32.mrf.mxu0
      %v3697 = vadd.f32 %v3353, %v3696
      %v3698 = vpop.f32.mrf.mxu0
      %v3699 = vadd.f32 %v3353, %v3698
      %3700 = vmatmul.bf16.gmra.mxu0 %v3283
      %v3701 = vpop.f32.mrf.mxu0
      %v3702 = vadd.f32 %v3353, %v3701
      %v3703 = vpop.f32.mrf.mxu0
      %v3704 = vadd.f32 %v3353, %v3703
      %3705 = vdwg.mxu0
      %3706 = vmatpush.bf16.msra.mxu0 %v3579
      %3707 = vmatpush.bf16.msra.mxu0 %v3577
      %3708 = vmatpush.bf16.msra.mxu0 %v3575
      %3709 = vmatpush.bf16.msra.mxu0 %v3573
      %3710 = vmatpush.bf16.msra.mxu0 %v3571
      %3711 = vmatpush.bf16.msra.mxu0 %v3569
      %3712 = vmatpush.bf16.msra.mxu0 %v3567
      %3713 = vmatpush.bf16.msra.mxu0 %v3565
      %3714 = vmatmul.bf16.gmra.mxu0 %v3272
      %v3715 = vpop.f32.mrf.mxu0
      %v3716 = vadd.f32 %v3687, %v3715
      %v3717 = vpop.f32.mrf.mxu0
      %v3718 = vadd.f32 %v3689, %v3717
      %3719 = vmatmul.bf16.gmra.mxu0 %v3276
      %v3720 = vpop.f32.mrf.mxu0
      %v3721 = vadd.f32 %v3692, %v3720
      %v3722 = vpop.f32.mrf.mxu0
      %v3723 = vadd.f32 %v3694, %v3722
      %3724 = vmatmul.bf16.gmra.mxu0 %v3280
      %v3725 = vpop.f32.mrf.mxu0
      %v3726 = vadd.f32 %v3697, %v3725
      %v3727 = vpop.f32.mrf.mxu0
      %v3728 = vadd.f32 %v3699, %v3727
      %3729 = vmatmul.bf16.gmra.mxu0 %v3284
      %v3730 = vpop.f32.mrf.mxu0
      %v3731 = vadd.f32 %v3702, %v3730
      %v3732 = vpop.f32.mrf.mxu0
      %v3733 = vadd.f32 %v3704, %v3732
      %3734 = vdwg.mxu0
      %3735 = vmatpush.bf16.msra.mxu0 %v3595
      %3736 = vmatpush.bf16.msra.mxu0 %v3593
      %3737 = vmatpush.bf16.msra.mxu0 %v3591
      %3738 = vmatpush.bf16.msra.mxu0 %v3589
      %3739 = vmatpush.bf16.msra.mxu0 %v3587
      %3740 = vmatpush.bf16.msra.mxu0 %v3585
      %3741 = vmatpush.bf16.msra.mxu0 %v3583
      %3742 = vmatpush.bf16.msra.mxu0 %v3581
      %3743 = vmatmul.bf16.gmra.mxu0 %v3273
      %v3744 = vpop.f32.mrf.mxu0
      %v3745 = vadd.f32 %v3716, %v3744
      %v3746 = vpop.f32.mrf.mxu0
      %v3747 = vadd.f32 %v3718, %v3746
      %3748 = vmatmul.bf16.gmra.mxu0 %v3277
      %v3749 = vpop.f32.mrf.mxu0
      %v3750 = vadd.f32 %v3721, %v3749
      %v3751 = vpop.f32.mrf.mxu0
      %v3752 = vadd.f32 %v3723, %v3751
      %3753 = vmatmul.bf16.gmra.mxu0 %v3281
      %v3754 = vpop.f32.mrf.mxu0
      %v3755 = vadd.f32 %v3726, %v3754
      %v3756 = vpop.f32.mrf.mxu0
      %v3757 = vadd.f32 %v3728, %v3756
      %3758 = vmatmul.bf16.gmra.mxu0 %v3285
      %v3759 = vpop.f32.mrf.mxu0
      %v3760 = vadd.f32 %v3731, %v3759
      %v3761 = vpop.f32.mrf.mxu0
      %v3762 = vadd.f32 %v3733, %v3761
      %3763 = vdwg.mxu0
      %3764 = vmatpush.bf16.msra.mxu0 %v3611
      %3765 = vmatpush.bf16.msra.mxu0 %v3609
      %3766 = vmatpush.bf16.msra.mxu0 %v3607
      %3767 = vmatpush.bf16.msra.mxu0 %v3605
      %3768 = vmatpush.bf16.msra.mxu0 %v3603
      %3769 = vmatpush.bf16.msra.mxu0 %v3601
      %3770 = vmatpush.bf16.msra.mxu0 %v3599
      %3771 = vmatpush.bf16.msra.mxu0 %v3597
      %3772 = vmatmul.bf16.gmra.mxu0 %v3274
      %v3773 = vpop.f32.mrf.mxu0
      %v3774 = vadd.f32 %v3745, %v3773
      %v3775 = vpop.f32.mrf.mxu0
      %v3776 = vadd.f32 %v3747, %v3775
      %3777 = vmatmul.bf16.gmra.mxu0 %v3278
      %v3778 = vpop.f32.mrf.mxu0
      %v3779 = vadd.f32 %v3750, %v3778
      %v3780 = vpop.f32.mrf.mxu0
      %v3781 = vadd.f32 %v3752, %v3780
      %3782 = vmatmul.bf16.gmra.mxu0 %v3282
      %v3783 = vpop.f32.mrf.mxu0
      %v3784 = vadd.f32 %v3755, %v3783
      %v3785 = vpop.f32.mrf.mxu0
      %v3786 = vadd.f32 %v3757, %v3785
      %3787 = vmatmul.bf16.gmra.mxu0 %v3286
      %v3788 = vpop.f32.mrf.mxu0
      %v3789 = vadd.f32 %v3760, %v3788
      %v3790 = vpop.f32.mrf.mxu0
      %v3791 = vadd.f32 %v3762, %v3790
      %3792 = vdwg.mxu0
      %3793 = vmatpush.bf16.msra.mxu0 %v3564
      %3794 = vmatpush.bf16.msra.mxu0 %v3562
      %3795 = vmatpush.bf16.msra.mxu0 %v3560
      %3796 = vmatpush.bf16.msra.mxu0 %v3558
      %3797 = vmatpush.bf16.msra.mxu0 %v3556
      %3798 = vmatpush.bf16.msra.mxu0 %v3554
      %3799 = vmatpush.bf16.msra.mxu0 %v3552
      %3800 = vmatpush.bf16.msra.mxu0 %v3550
      %3801 = vmatmul.bf16.gmra.mxu0 %v3271
      %v3802 = vpop.f32.mrf.mxu0
      %v3803 = vadd.f32 %v3354, %v3802
      %v3804 = vpop.f32.mrf.mxu0
      %v3805 = vadd.f32 %v3354, %v3804
      %3806 = vmatmul.bf16.gmra.mxu0 %v3275
      %v3807 = vpop.f32.mrf.mxu0
      %v3808 = vadd.f32 %v3354, %v3807
      %v3809 = vpop.f32.mrf.mxu0
      %v3810 = vadd.f32 %v3354, %v3809
      %3811 = vmatmul.bf16.gmra.mxu0 %v3279
      %v3812 = vpop.f32.mrf.mxu0
      %v3813 = vadd.f32 %v3354, %v3812
      %v3814 = vpop.f32.mrf.mxu0
      %v3815 = vadd.f32 %v3354, %v3814
      %3816 = vmatmul.bf16.gmra.mxu0 %v3283
      %v3817 = vpop.f32.mrf.mxu0
      %v3818 = vadd.f32 %v3354, %v3817
      %v3819 = vpop.f32.mrf.mxu0
      %v3820 = vadd.f32 %v3354, %v3819
      %3821 = vdwg.mxu0
      %3822 = vmatpush.bf16.msra.mxu0 %v3580
      %3823 = vmatpush.bf16.msra.mxu0 %v3578
      %3824 = vmatpush.bf16.msra.mxu0 %v3576
      %3825 = vmatpush.bf16.msra.mxu0 %v3574
      %3826 = vmatpush.bf16.msra.mxu0 %v3572
      %3827 = vmatpush.bf16.msra.mxu0 %v3570
      %3828 = vmatpush.bf16.msra.mxu0 %v3568
      %3829 = vmatpush.bf16.msra.mxu0 %v3566
      %3830 = vmatmul.bf16.gmra.mxu0 %v3272
      %v3831 = vpop.f32.mrf.mxu0
      %v3832 = vadd.f32 %v3803, %v3831
      %v3833 = vpop.f32.mrf.mxu0
      %v3834 = vadd.f32 %v3805, %v3833
      %3835 = vmatmul.bf16.gmra.mxu0 %v3276
      %v3836 = vpop.f32.mrf.mxu0
      %v3837 = vadd.f32 %v3808, %v3836
      %v3838 = vpop.f32.mrf.mxu0
      %v3839 = vadd.f32 %v3810, %v3838
      %3840 = vmatmul.bf16.gmra.mxu0 %v3280
      %v3841 = vpop.f32.mrf.mxu0
      %v3842 = vadd.f32 %v3813, %v3841
      %v3843 = vpop.f32.mrf.mxu0
      %v3844 = vadd.f32 %v3815, %v3843
      %3845 = vmatmul.bf16.gmra.mxu0 %v3284
      %v3846 = vpop.f32.mrf.mxu0
      %v3847 = vadd.f32 %v3818, %v3846
      %v3848 = vpop.f32.mrf.mxu0
      %v3849 = vadd.f32 %v3820, %v3848
      %3850 = vdwg.mxu0
      %3851 = vmatpush.bf16.msra.mxu0 %v3596
      %3852 = vmatpush.bf16.msra.mxu0 %v3594
      %3853 = vmatpush.bf16.msra.mxu0 %v3592
      %3854 = vmatpush.bf16.msra.mxu0 %v3590
      %3855 = vmatpush.bf16.msra.mxu0 %v3588
      %3856 = vmatpush.bf16.msra.mxu0 %v3586
      %3857 = vmatpush.bf16.msra.mxu0 %v3584
      %3858 = vmatpush.bf16.msra.mxu0 %v3582
      %3859 = vmatmul.bf16.gmra.mxu0 %v3273
      %v3860 = vpop.f32.mrf.mxu0
      %v3861 = vadd.f32 %v3832, %v3860
      %v3862 = vpop.f32.mrf.mxu0
      %v3863 = vadd.f32 %v3834, %v3862
      %3864 = vmatmul.bf16.gmra.mxu0 %v3277
      %v3865 = vpop.f32.mrf.mxu0
      %v3866 = vadd.f32 %v3837, %v3865
      %v3867 = vpop.f32.mrf.mxu0
      %v3868 = vadd.f32 %v3839, %v3867
      %3869 = vmatmul.bf16.gmra.mxu0 %v3281
      %v3870 = vpop.f32.mrf.mxu0
      %v3871 = vadd.f32 %v3842, %v3870
      %v3872 = vpop.f32.mrf.mxu0
      %v3873 = vadd.f32 %v3844, %v3872
      %3874 = vmatmul.bf16.gmra.mxu0 %v3285
      %v3875 = vpop.f32.mrf.mxu0
      %v3876 = vadd.f32 %v3847, %v3875
      %v3877 = vpop.f32.mrf.mxu0
      %v3878 = vadd.f32 %v3849, %v3877
      %3879 = vdwg.mxu0
      %3880 = vmatpush.bf16.msra.mxu0 %v3612
      %3881 = vmatpush.bf16.msra.mxu0 %v3610
      %3882 = vmatpush.bf16.msra.mxu0 %v3608
      %3883 = vmatpush.bf16.msra.mxu0 %v3606
      %3884 = vmatpush.bf16.msra.mxu0 %v3604
      %3885 = vmatpush.bf16.msra.mxu0 %v3602
      %3886 = vmatpush.bf16.msra.mxu0 %v3600
      %3887 = vmatpush.bf16.msra.mxu0 %v3598
      %3888 = vmatmul.bf16.gmra.mxu0 %v3274
      %v3889 = vpop.f32.mrf.mxu0
      %v3890 = vadd.f32 %v3861, %v3889
      %v3891 = vpop.f32.mrf.mxu0
      %v3892 = vadd.f32 %v3863, %v3891
      %3893 = vmatmul.bf16.gmra.mxu0 %v3278
      %v3894 = vpop.f32.mrf.mxu0
      %v3895 = vadd.f32 %v3866, %v3894
      %v3896 = vpop.f32.mrf.mxu0
      %v3897 = vadd.f32 %v3868, %v3896
      %3898 = vmatmul.bf16.gmra.mxu0 %v3282
      %v3899 = vpop.f32.mrf.mxu0
      %v3900 = vadd.f32 %v3871, %v3899
      %v3901 = vpop.f32.mrf.mxu0
      %v3902 = vadd.f32 %v3873, %v3901
      %3903 = vmatmul.bf16.gmra.mxu0 %v3286
      %v3904 = vpop.f32.mrf.mxu0
      %v3905 = vadd.f32 %v3876, %v3904
      %v3906 = vpop.f32.mrf.mxu0
      %v3907 = vadd.f32 %v3878, %v3906
      %3908 = vdwg.mxu0
      %3909 = vst [vmem:[%s231] sm:$0xff] %v3774
      %3910 = vst [vmem:[%s231 + $0x8] sm:$0xff] %v3890
      %3911 = vst [vmem:[%s231 + $0x10] sm:$0xff] %v3776
      %3912 = vst [vmem:[%s231 + $0x18] sm:$0xff] %v3892
      %3913 = vst [vmem:[%s231 + $0x20] sm:$0xff] %v3779
      %3914 = vst [vmem:[%s231 + $0x28] sm:$0xff] %v3895
      %3915 = vst [vmem:[%s231 + $0x30] sm:$0xff] %v3781
      %3916 = vst [vmem:[%s231 + $0x38] sm:$0xff] %v3897
      %3917 = vst [vmem:[%s231 + $0x40] sm:$0xff] %v3784
      %3918 = vst [vmem:[%s231 + $0x48] sm:$0xff] %v3900
      %3919 = vst [vmem:[%s231 + $0x50] sm:$0xff] %v3786
      %3920 = vst [vmem:[%s231 + $0x58] sm:$0xff] %v3902
      %3921 = vst [vmem:[%s231 + $0x60] sm:$0xff] %v3789
      %3922 = vst [vmem:[%s231 + $0x68] sm:$0xff] %v3905
      %3923 = vst [vmem:[%s231 + $0x70] sm:$0xff] %v3791
      %3924 = vst [vmem:[%s231 + $0x78] sm:$0xff] %v3907
      %s3925 = smul.u32 8, %s16
      %p3926 = scmp.lt.s32.totalorder %s3925, 15
      %s3927 = scalar_select %p3926, %s3925, 15
      %s3928 = smul.addr %s3927, 2
      %s3929 = smul.addr %s3928, 8
      %s3930 = scalar_lea.vmem %s5, %s3929
      // Predicated region
      $region41: #{two_stage_detector_forward.4} parent=39 // pred_check
        %p3931 = pneg %p144
      $region42: #{two_stage_detector_forward.4} parent=39 // pred_check_branch
        %3933 = sbr.rel (%p3931) target = $region44
      $region43: #{two_stage_detector_forward.4} parent=39 // pred_region
        %s3934 = smul.u32 8, %s16
      $region44: #{two_stage_detector_forward.4} parent=39 // pred_fallthru
        _
    $region40: #{two_stage_detector_forward.4} parent=5 // pred_fallthru
      _
    %p3935 = scmp.le.s32.totalorder 2, %s11
    // Predicated region
    $region45: #{two_stage_detector_forward.4} parent=5 // pred_check
      %p3936 = pneg %p3935
    $region46: #{two_stage_detector_forward.4} parent=5 // pred_check_branch
      %3938 = sbr.rel (%p3936) target = $region48
    $region47: #{two_stage_detector_forward.4} parent=5 // pred_region
      %s3939 = ssub.s32 %s11, 2
      // Predicated region
      $region49: #{two_stage_detector_forward.4} parent=47 // pred_check
        %p3940 = pneg %p150
      $region50: #{two_stage_detector_forward.4} parent=47 // pred_check_branch
        %3942 = sbr.rel (%p3940) target = $region52
      $region51: #{two_stage_detector_forward.4} parent=47 // pred_region
        %s3943 = smul.u32 8, %s17
        %p3944 = scmp.lt.s32.totalorder %s3943, 15
        %s3945 = scalar_select %p3944, %s3943, 15
        %s3946 = smul.addr %s3945, 2
        %s3947 = smul.addr %s3946, 8
        %s3948 = scalar_lea.vmem %s5, %s3947
      $region52: #{two_stage_detector_forward.4} parent=47 // pred_fallthru
        _
    $region48: #{two_stage_detector_forward.4} parent=5 // pred_fallthru
      _
  $region6: #{two_stage_detector_forward.4} parent=0 // loop_footer
    %s15 = sadd.s32 1, %s11
  $region7: #{two_stage_detector_forward.4} parent=0 // loop_footer_branch
    %10 = sbr.rel target = $region3
  $region8: #{two_stage_detector_forward.4} parent=0 // loop_exit
    _

// kernel: two_stage_detector_forward.5
$region0: #{two_stage_detector_forward.5}
  #allocation0 [shape = 'u32[]', space=smem, size = 0x4, offset = 0x4, fixed_abs, tag = 'smem constant byte address 0x4 - core index']
  #allocation1 [shape = 'u32[72,128]{1,0:T(1,128)}', space=vmem, size = 0x9000, scoped, tag = 'internal scratch']
  %s0 = inlined_call_operand.vmem [shape: bf16[16,128], index: 0, kind: input, shape index: {}]
  %s1 = inlined_call_operand.vmem [shape: f32[16,1], index: 1, kind: input, shape index: {}]
  %s2 = inlined_call_operand.vmem [shape: bf16[128,128], index: 2, kind: input, shape index: {}]
  %s3 = inlined_call_operand.vmem [shape: bf16[128,512], index: 3, kind: input, shape index: {}]
  %s4 = inlined_call_operand.vmem [shape: f32[1,512], index: 4, kind: input, shape index: {}]
  %s5 = inlined_call_operand.vmem [shape: bf16[512,128], index: 5, kind: input, shape index: {}]
  %s6 = inlined_call_operand.vmem [shape: f32[1,128], index: 6, kind: input, shape index: {}]
  %s7 = inlined_call_operand.vmem [shape: f32[1,16], index: 7, kind: input, shape index: {}]
  %s8 = inlined_call_operand.vmem [shape: f32[1,16], index: 8, kind: input, shape index: {}]
  %s9 = inlined_call_operand.vmem [shape: f32[16,4], index: 9, kind: input, shape index: {}]
  %s10 = inlined_call_operand.vmem [shape: f32[16,4], index: 10, kind: input, shape index: {}]
  %s11 = inlined_call_operand.vmem [shape: f32[16,4], index: 11, kind: input, shape index: {}]
  %s12 = inlined_call_operand.hbm [shape: f32[1,1], index: 12, kind: output, shape index: {}]
  %s13 = sld [smem:[#allocation0]]
  $region58: #{two_stage_detector_forward.5} parent=0
    _
  %s15 = ssub.s32 1, %s13
  %s16 = scalar_select 0, %s15, %s13
  $region1: #{two_stage_detector_forward.5} parent=0
    #allocation2 [shape = 'u8[512]{0}', space=vmem, size = 0x400, scoped, tag = 'output window, operand 0, single buffered']
    #allocation3 [shape = 's32[1]{0}', space=sflag, size = 0x4, scoped, tag = 'scoped memory for two_stage_detector_forward.5']
    %17 = vsyncpa [#allocation3], 0
    // Predicated region
    $region2: #{two_stage_detector_forward.5} parent=1 // pred_check
      _
    $region3: #{two_stage_detector_forward.5} parent=1 // pred_check_branch
      %19 = sbr.rel (0) target = $region5
    $region4: #{two_stage_detector_forward.5} parent=1 // pred_region
      _
    $region5: #{two_stage_detector_forward.5} parent=1 // pred_fallthru
      _
    // Predicated region
    $region6: #{two_stage_detector_forward.5} parent=1 // pred_check
      _
    $region7: #{two_stage_detector_forward.5} parent=1 // pred_check_branch
      %21 = sbr.rel (0) target = $region9
    $region8: #{two_stage_detector_forward.5} parent=1 // pred_region
      _
    $region9: #{two_stage_detector_forward.5} parent=1 // pred_fallthru
      _
    // Predicated region
    $region10: #{two_stage_detector_forward.5} parent=1 // pred_check
      _
    $region11: #{two_stage_detector_forward.5} parent=1 // pred_check_branch
      %23 = sbr.rel (0) target = $region13
    $region12: #{two_stage_detector_forward.5} parent=1 // pred_region
      _
    $region13: #{two_stage_detector_forward.5} parent=1 // pred_fallthru
      _
    // Predicated region
    $region14: #{two_stage_detector_forward.5} parent=1 // pred_check
      _
    $region15: #{two_stage_detector_forward.5} parent=1 // pred_check_branch
      %25 = sbr.rel (0) target = $region17
    $region16: #{two_stage_detector_forward.5} parent=1 // pred_region
      _
    $region17: #{two_stage_detector_forward.5} parent=1 // pred_fallthru
      _
    // Predicated region
    $region18: #{two_stage_detector_forward.5} parent=1 // pred_check
      _
    $region19: #{two_stage_detector_forward.5} parent=1 // pred_check_branch
      %27 = sbr.rel (0) target = $region21
    $region20: #{two_stage_detector_forward.5} parent=1 // pred_region
      _
    $region21: #{two_stage_detector_forward.5} parent=1 // pred_fallthru
      _
    // Predicated region
    $region22: #{two_stage_detector_forward.5} parent=1 // pred_check
      _
    $region23: #{two_stage_detector_forward.5} parent=1 // pred_check_branch
      %29 = sbr.rel (0) target = $region25
    $region24: #{two_stage_detector_forward.5} parent=1 // pred_region
      _
    $region25: #{two_stage_detector_forward.5} parent=1 // pred_fallthru
      _
    // Predicated region
    $region26: #{two_stage_detector_forward.5} parent=1 // pred_check
      _
    $region27: #{two_stage_detector_forward.5} parent=1 // pred_check_branch
      %31 = sbr.rel (0) target = $region29
    $region28: #{two_stage_detector_forward.5} parent=1 // pred_region
      _
    $region29: #{two_stage_detector_forward.5} parent=1 // pred_fallthru
      _
    // Predicated region
    $region30: #{two_stage_detector_forward.5} parent=1 // pred_check
      _
    $region31: #{two_stage_detector_forward.5} parent=1 // pred_check_branch
      %33 = sbr.rel (0) target = $region33
    $region32: #{two_stage_detector_forward.5} parent=1 // pred_region
      _
    $region33: #{two_stage_detector_forward.5} parent=1 // pred_fallthru
      _
    // Predicated region
    $region34: #{two_stage_detector_forward.5} parent=1 // pred_check
      _
    $region35: #{two_stage_detector_forward.5} parent=1 // pred_check_branch
      %35 = sbr.rel (0) target = $region37
    $region36: #{two_stage_detector_forward.5} parent=1 // pred_region
      _
    $region37: #{two_stage_detector_forward.5} parent=1 // pred_fallthru
      _
    // Predicated region
    $region38: #{two_stage_detector_forward.5} parent=1 // pred_check
      _
    $region39: #{two_stage_detector_forward.5} parent=1 // pred_check_branch
      %37 = sbr.rel (0) target = $region41
    $region40: #{two_stage_detector_forward.5} parent=1 // pred_region
      _
    $region41: #{two_stage_detector_forward.5} parent=1 // pred_fallthru
      _
    // Predicated region
    $region42: #{two_stage_detector_forward.5} parent=1 // pred_check
      _
    $region43: #{two_stage_detector_forward.5} parent=1 // pred_check_branch
      %39 = sbr.rel (0) target = $region45
    $region44: #{two_stage_detector_forward.5} parent=1 // pred_region
      _
    $region45: #{two_stage_detector_forward.5} parent=1 // pred_fallthru
      _
    // Predicated region
    $region46: #{two_stage_detector_forward.5} parent=1 // pred_check
      _
    $region47: #{two_stage_detector_forward.5} parent=1 // pred_check_branch
      %41 = sbr.rel (0) target = $region49
    $region48: #{two_stage_detector_forward.5} parent=1 // pred_region
      _
    $region49: #{two_stage_detector_forward.5} parent=1 // pred_fallthru
      _
    %v42 = vld [vmem:[%s0] sm:$0xf]
    %v43 = vld [vmem:[%s0 + $0x4] sm:$0xf]
    %v44 = vld [vmem:[%s2] sm:$0xf]
    %v45 = vld [vmem:[%s2 + $0x4] sm:$0xf]
    %v46 = vld [vmem:[%s2 + $0x8] sm:$0xf]
    %v47 = vld [vmem:[%s2 + $0xc] sm:$0xf]
    %v48 = vld [vmem:[%s2 + $0x10] sm:$0xf]
    %v49 = vld [vmem:[%s2 + $0x14] sm:$0xf]
    %v50 = vld [vmem:[%s2 + $0x18] sm:$0xf]
    %v51 = vld [vmem:[%s2 + $0x1c] sm:$0xf]
    %v52 = vld [vmem:[%s2 + $0x20] sm:$0xf]
    %v53 = vld [vmem:[%s2 + $0x24] sm:$0xf]
    %v54 = vld [vmem:[%s2 + $0x28] sm:$0xf]
    %v55 = vld [vmem:[%s2 + $0x2c] sm:$0xf]
    %v56 = vld [vmem:[%s2 + $0x30] sm:$0xf]
    %v57 = vld [vmem:[%s2 + $0x34] sm:$0xf]
    %v58 = vld [vmem:[%s2 + $0x38] sm:$0xf]
    %v59 = vld [vmem:[%s2 + $0x3c] sm:$0xf]
    %v62 = vunpack.c.l.b16 %v42
    %v63 = vunpack.c.l.b16 %v43
    %v64 = vpack.c.b16 %v63, %v62
    %v82 = vunpack.c.l.b16 %v44
    %v83 = vunpack.c.l.b16 %v45
    %v84 = vunpack.c.l.b16 %v46
    %v85 = vunpack.c.l.b16 %v47
    %v86 = vunpack.c.l.b16 %v48
    %v87 = vunpack.c.l.b16 %v49
    %v88 = vunpack.c.l.b16 %v50
    %v89 = vunpack.c.l.b16 %v51
    %v90 = vunpack.c.l.b16 %v52
    %v91 = vunpack.c.l.b16 %v53
    %v92 = vunpack.c.l.b16 %v54
    %v93 = vunpack.c.l.b16 %v55
    %v94 = vunpack.c.l.b16 %v56
    %v95 = vunpack.c.l.b16 %v57
    %v96 = vunpack.c.l.b16 %v58
    %v97 = vunpack.c.l.b16 %v59
    %v98 = vpack.c.b16 %v83, %v82
    %v99 = vpack.c.b16 %v85, %v84
    %v100 = vpack.c.b16 %v87, %v86
    %v101 = vpack.c.b16 %v89, %v88
    %v102 = vpack.c.b16 %v91, %v90
    %v103 = vpack.c.b16 %v93, %v92
    %v104 = vpack.c.b16 %v95, %v94
    %v105 = vpack.c.b16 %v97, %v96
    %114 = vmatpush.bf16.msra.mxu0 %v105
    %115 = vmatpush.bf16.msra.mxu0 %v104
    %116 = vmatpush.bf16.msra.mxu0 %v103
    %117 = vmatpush.bf16.msra.mxu0 %v102
    %118 = vmatpush.bf16.msra.mxu0 %v101
    %119 = vmatpush.bf16.msra.mxu0 %v100
    %120 = vmatpush.bf16.msra.mxu0 %v99
    %121 = vmatpush.bf16.msra.mxu0 %v98
    %122 = vmatmul.bf16.gmra.mxu0 %v64
    %v123 = vpop.f32.mrf.mxu0
    %v124 = vadd.f32 0.0, %v123
    %v125 = vpop.f32.mrf.mxu0
    %v126 = vadd.f32 0.0, %v125
    %127 = vdwg.mxu0
    %v128 = vld [vmem:[%s1] sm:$0xff]
    %v129 = vld [vmem:[%s1 + $0x8] sm:$0xff]
    %131 = vset.pattern.permute.xlu0 0
    %132 = vperm.xlu0 %131, %v128
    %v133 = vpop.permute.xlu0 %132
    %136 = vset.pattern.permute.xlu0 0
    %137 = vperm.xlu0 %136, %v129
    %v138 = vpop.permute.xlu0 %137
    %v140 = vmul.f32 %v124, %v133
    %v141 = vmul.f32 %v126, %v138
    %v142 = vpack.c.bf16 %v141, %v140
    %v143 = vld [vmem:[%s3] sm:$0xff]
    %v144 = vld [vmem:[%s3 + $0x8] sm:$0xff]
    %v145 = vld [vmem:[%s3 + $0x10] sm:$0xff]
    %v146 = vld [vmem:[%s3 + $0x18] sm:$0xff]
    %v147 = vld [vmem:[%s3 + $0x20] sm:$0xff]
    %v148 = vld [vmem:[%s3 + $0x28] sm:$0xff]
    %v149 = vld [vmem:[%s3 + $0x30] sm:$0xff]
    %v150 = vld [vmem:[%s3 + $0x38] sm:$0xff]
    %v151 = vld [vmem:[%s3 + $0x40] sm:$0xff]
    %v152 = vld [vmem:[%s3 + $0x48] sm:$0xff]
    %v153 = vld [vmem:[%s3 + $0x50] sm:$0xff]
    %v154 = vld [vmem:[%s3 + $0x58] sm:$0xff]
    %v155 = vld [vmem:[%s3 + $0x60] sm:$0xff]
    %v156 = vld [vmem:[%s3 + $0x68] sm:$0xff]
    %v157 = vld [vmem:[%s3 + $0x70] sm:$0xff]
    %v158 = vld [vmem:[%s3 + $0x78] sm:$0xff]
    %v159 = vld [vmem:[%s3 + $0x80] sm:$0xff]
    %v160 = vld [vmem:[%s3 + $0x88] sm:$0xff]
    %v161 = vld [vmem:[%s3 + $0x90] sm:$0xff]
    %v162 = vld [vmem:[%s3 + $0x98] sm:$0xff]
    %v163 = vld [vmem:[%s3 + $0xa0] sm:$0xff]
    %v164 = vld [vmem:[%s3 + $0xa8] sm:$0xff]
    %v165 = vld [vmem:[%s3 + $0xb0] sm:$0xff]
    %v166 = vld [vmem:[%s3 + $0xb8] sm:$0xff]
    %v167 = vld [vmem:[%s3 + $0xc0] sm:$0xff]
    %v168 = vld [vmem:[%s3 + $0xc8] sm:$0xff]
    %v169 = vld [vmem:[%s3 + $0xd0] sm:$0xff]
    %v170 = vld [vmem:[%s3 + $0xd8] sm:$0xff]
    %v171 = vld [vmem:[%s3 + $0xe0] sm:$0xff]
    %v172 = vld [vmem:[%s3 + $0xe8] sm:$0xff]
    %v173 = vld [vmem:[%s3 + $0xf0] sm:$0xff]
    %v174 = vld [vmem:[%s3 + $0xf8] sm:$0xff]
    %v175 = vld [vmem:[%s4] sm:$0xf]
    %v177 = vperm.slane %v175, 0
    %v178 = vperm.slane %v175, 1
    %v179 = vperm.slane %v175, 2
    %v180 = vperm.slane %v175, 3
    %v217 = vunpack.c.l.b16 %v143
    %v218 = vunpack.c.h.b16 %v143
    %v219 = vunpack.c.l.b16 %v144
    %v220 = vunpack.c.h.b16 %v144
    %v221 = vunpack.c.l.b16 %v145
    %v222 = vunpack.c.h.b16 %v145
    %v223 = vunpack.c.l.b16 %v146
    %v224 = vunpack.c.h.b16 %v146
    %v225 = vunpack.c.l.b16 %v147
    %v226 = vunpack.c.h.b16 %v147
    %v227 = vunpack.c.l.b16 %v148
    %v228 = vunpack.c.h.b16 %v148
    %v229 = vunpack.c.l.b16 %v149
    %v230 = vunpack.c.h.b16 %v149
    %v231 = vunpack.c.l.b16 %v150
    %v232 = vunpack.c.h.b16 %v150
    %v233 = vunpack.c.l.b16 %v151
    %v234 = vunpack.c.h.b16 %v151
    %v235 = vunpack.c.l.b16 %v152
    %v236 = vunpack.c.h.b16 %v152
    %v237 = vunpack.c.l.b16 %v153
    %v238 = vunpack.c.h.b16 %v153
    %v239 = vunpack.c.l.b16 %v154
    %v240 = vunpack.c.h.b16 %v154
    %v241 = vunpack.c.l.b16 %v155
    %v242 = vunpack.c.h.b16 %v155
    %v243 = vunpack.c.l.b16 %v156
    %v244 = vunpack.c.h.b16 %v156
    %v245 = vunpack.c.l.b16 %v157
    %v246 = vunpack.c.h.b16 %v157
    %v247 = vunpack.c.l.b16 %v158
    %v248 = vunpack.c.h.b16 %v158
    %v249 = vunpack.c.l.b16 %v159
    %v250 = vunpack.c.h.b16 %v159
    %v251 = vunpack.c.l.b16 %v160
    %v252 = vunpack.c.h.b16 %v160
    %v253 = vunpack.c.l.b16 %v161
    %v254 = vunpack.c.h.b16 %v161
    %v255 = vunpack.c.l.b16 %v162
    %v256 = vunpack.c.h.b16 %v162
    %v257 = vunpack.c.l.b16 %v163
    %v258 = vunpack.c.h.b16 %v163
    %v259 = vunpack.c.l.b16 %v164
    %v260 = vunpack.c.h.b16 %v164
    %v261 = vunpack.c.l.b16 %v165
    %v262 = vunpack.c.h.b16 %v165
    %v263 = vunpack.c.l.b16 %v166
    %v264 = vunpack.c.h.b16 %v166
    %v265 = vunpack.c.l.b16 %v167
    %v266 = vunpack.c.h.b16 %v167
    %v267 = vunpack.c.l.b16 %v168
    %v268 = vunpack.c.h.b16 %v168
    %v269 = vunpack.c.l.b16 %v169
    %v270 = vunpack.c.h.b16 %v169
    %v271 = vunpack.c.l.b16 %v170
    %v272 = vunpack.c.h.b16 %v170
    %v273 = vunpack.c.l.b16 %v171
    %v274 = vunpack.c.h.b16 %v171
    %v275 = vunpack.c.l.b16 %v172
    %v276 = vunpack.c.h.b16 %v172
    %v277 = vunpack.c.l.b16 %v173
    %v278 = vunpack.c.h.b16 %v173
    %v279 = vunpack.c.l.b16 %v174
    %v280 = vunpack.c.h.b16 %v174
    %v281 = vpack.c.b16 %v221, %v217
    %v282 = vpack.c.b16 %v222, %v218
    %v283 = vpack.c.b16 %v223, %v219
    %v284 = vpack.c.b16 %v224, %v220
    %v285 = vpack.c.b16 %v229, %v225
    %v286 = vpack.c.b16 %v230, %v226
    %v287 = vpack.c.b16 %v231, %v227
    %v288 = vpack.c.b16 %v232, %v228
    %v289 = vpack.c.b16 %v237, %v233
    %v290 = vpack.c.b16 %v238, %v234
    %v291 = vpack.c.b16 %v239, %v235
    %v292 = vpack.c.b16 %v240, %v236
    %v293 = vpack.c.b16 %v245, %v241
    %v294 = vpack.c.b16 %v246, %v242
    %v295 = vpack.c.b16 %v247, %v243
    %v296 = vpack.c.b16 %v248, %v244
    %v297 = vpack.c.b16 %v253, %v249
    %v298 = vpack.c.b16 %v254, %v250
    %v299 = vpack.c.b16 %v255, %v251
    %v300 = vpack.c.b16 %v256, %v252
    %v301 = vpack.c.b16 %v261, %v257
    %v302 = vpack.c.b16 %v262, %v258
    %v303 = vpack.c.b16 %v263, %v259
    %v304 = vpack.c.b16 %v264, %v260
    %v305 = vpack.c.b16 %v269, %v265
    %v306 = vpack.c.b16 %v270, %v266
    %v307 = vpack.c.b16 %v271, %v267
    %v308 = vpack.c.b16 %v272, %v268
    %v309 = vpack.c.b16 %v277, %v273
    %v310 = vpack.c.b16 %v278, %v274
    %v311 = vpack.c.b16 %v279, %v275
    %v312 = vpack.c.b16 %v280, %v276
    %345 = vmatpush.bf16.msra.mxu0 %v309
    %346 = vmatpush.bf16.msra.mxu0 %v305
    %347 = vmatpush.bf16.msra.mxu0 %v301
    %348 = vmatpush.bf16.msra.mxu0 %v297
    %349 = vmatpush.bf16.msra.mxu0 %v293
    %350 = vmatpush.bf16.msra.mxu0 %v289
    %351 = vmatpush.bf16.msra.mxu0 %v285
    %352 = vmatpush.bf16.msra.mxu0 %v281
    %353 = vmatmul.bf16.gmra.mxu0 %v142
    %v354 = vpop.f32.mrf.mxu0
    %v355 = vadd.f32 %v177, %v354
    %v356 = vpop.f32.mrf.mxu0
    %v357 = vadd.f32 %v177, %v356
    %358 = vdwg.mxu0
    %359 = vmatpush.bf16.msra.mxu0 %v310
    %360 = vmatpush.bf16.msra.mxu0 %v306
    %361 = vmatpush.bf16.msra.mxu0 %v302
    %362 = vmatpush.bf16.msra.mxu0 %v298
    %363 = vmatpush.bf16.msra.mxu0 %v294
    %364 = vmatpush.bf16.msra.mxu0 %v290
    %365 = vmatpush.bf16.msra.mxu0 %v286
    %366 = vmatpush.bf16.msra.mxu0 %v282
    %367 = vmatmul.bf16.gmra.mxu0 %v142
    %v368 = vpop.f32.mrf.mxu0
    %v369 = vadd.f32 %v178, %v368
    %v370 = vpop.f32.mrf.mxu0
    %v371 = vadd.f32 %v178, %v370
    %372 = vdwg.mxu0
    %373 = vmatpush.bf16.msra.mxu0 %v311
    %374 = vmatpush.bf16.msra.mxu0 %v307
    %375 = vmatpush.bf16.msra.mxu0 %v303
    %376 = vmatpush.bf16.msra.mxu0 %v299
    %377 = vmatpush.bf16.msra.mxu0 %v295
    %378 = vmatpush.bf16.msra.mxu0 %v291
    %379 = vmatpush.bf16.msra.mxu0 %v287
    %380 = vmatpush.bf16.msra.mxu0 %v283
    %381 = vmatmul.bf16.gmra.mxu0 %v142
    %v382 = vpop.f32.mrf.mxu0
    %v383 = vadd.f32 %v179, %v382
    %v384 = vpop.f32.mrf.mxu0
    %v385 = vadd.f32 %v179, %v384
    %386 = vdwg.mxu0
    %387 = vmatpush.bf16.msra.mxu0 %v312
    %388 = vmatpush.bf16.msra.mxu0 %v308
    %389 = vmatpush.bf16.msra.mxu0 %v304
    %390 = vmatpush.bf16.msra.mxu0 %v300
    %391 = vmatpush.bf16.msra.mxu0 %v296
    %392 = vmatpush.bf16.msra.mxu0 %v292
    %393 = vmatpush.bf16.msra.mxu0 %v288
    %394 = vmatpush.bf16.msra.mxu0 %v284
    %395 = vmatmul.bf16.gmra.mxu0 %v142
    %v396 = vpop.f32.mrf.mxu0
    %v397 = vadd.f32 %v180, %v396
    %v398 = vpop.f32.mrf.mxu0
    %v399 = vadd.f32 %v180, %v398
    %400 = vdwg.mxu0
    %v401 = vmax.f32 %v355, 0.0
    %v402 = vmax.f32 %v369, 0.0
    %v403 = vmax.f32 %v383, 0.0
    %v404 = vmax.f32 %v397, 0.0
    %v405 = vmax.f32 %v357, 0.0
    %v406 = vmax.f32 %v371, 0.0
    %v407 = vmax.f32 %v385, 0.0
    %v408 = vmax.f32 %v399, 0.0
    %v409 = vpack.c.bf16 %v405, %v401
    %v410 = vpack.c.bf16 %v406, %v402
    %v411 = vpack.c.bf16 %v407, %v403
    %v412 = vpack.c.bf16 %v408, %v404
    %v413 = vld [vmem:[%s5] sm:$0xf]
    %v414 = vld [vmem:[%s5 + $0x4] sm:$0xf]
    %v415 = vld [vmem:[%s5 + $0x8] sm:$0xf]
    %v416 = vld [vmem:[%s5 + $0xc] sm:$0xf]
    %v417 = vld [vmem:[%s5 + $0x10] sm:$0xf]
    %v418 = vld [vmem:[%s5 + $0x14] sm:$0xf]
    %v419 = vld [vmem:[%s5 + $0x18] sm:$0xf]
    %v420 = vld [vmem:[%s5 + $0x1c] sm:$0xf]
    %v421 = vld [vmem:[%s5 + $0x20] sm:$0xf]
    %v422 = vld [vmem:[%s5 + $0x24] sm:$0xf]
    %v423 = vld [vmem:[%s5 + $0x28] sm:$0xf]
    %v424 = vld [vmem:[%s5 + $0x2c] sm:$0xf]
    %v425 = vld [vmem:[%s5 + $0x30] sm:$0xf]
    %v426 = vld [vmem:[%s5 + $0x34] sm:$0xf]
    %v427 = vld [vmem:[%s5 + $0x38] sm:$0xf]
    %v428 = vld [vmem:[%s5 + $0x3c] sm:$0xf]
    %v429 = vld [vmem:[%s5 + $0x40] sm:$0xf]
    %v430 = vld [vmem:[%s5 + $0x44] sm:$0xf]
    %v431 = vld [vmem:[%s5 + $0x48] sm:$0xf]
    %v432 = vld [vmem:[%s5 + $0x4c] sm:$0xf]
    %v433 = vld [vmem:[%s5 + $0x50] sm:$0xf]
    %v434 = vld [vmem:[%s5 + $0x54] sm:$0xf]
    %v435 = vld [vmem:[%s5 + $0x58] sm:$0xf]
    %v436 = vld [vmem:[%s5 + $0x5c] sm:$0xf]
    %v437 = vld [vmem:[%s5 + $0x60] sm:$0xf]
    %v438 = vld [vmem:[%s5 + $0x64] sm:$0xf]
    %v439 = vld [vmem:[%s5 + $0x68] sm:$0xf]
    %v440 = vld [vmem:[%s5 + $0x6c] sm:$0xf]
    %v441 = vld [vmem:[%s5 + $0x70] sm:$0xf]
    %v442 = vld [vmem:[%s5 + $0x74] sm:$0xf]
    %v443 = vld [vmem:[%s5 + $0x78] sm:$0xf]
    %v444 = vld [vmem:[%s5 + $0x7c] sm:$0xf]
    %v445 = vld [vmem:[%s5 + $0x80] sm:$0xf]
    %v446 = vld [vmem:[%s5 + $0x84] sm:$0xf]
    %v447 = vld [vmem:[%s5 + $0x88] sm:$0xf]
    %v448 = vld [vmem:[%s5 + $0x8c] sm:$0xf]
    %v449 = vld [vmem:[%s5 + $0x90] sm:$0xf]
    %v450 = vld [vmem:[%s5 + $0x94] sm:$0xf]
    %v451 = vld [vmem:[%s5 + $0x98] sm:$0xf]
    %v452 = vld [vmem:[%s5 + $0x9c] sm:$0xf]
    %v453 = vld [vmem:[%s5 + $0xa0] sm:$0xf]
    %v454 = vld [vmem:[%s5 + $0xa4] sm:$0xf]
    %v455 = vld [vmem:[%s5 + $0xa8] sm:$0xf]
    %v456 = vld [vmem:[%s5 + $0xac] sm:$0xf]
    %v457 = vld [vmem:[%s5 + $0xb0] sm:$0xf]
    %v458 = vld [vmem:[%s5 + $0xb4] sm:$0xf]
    %v459 = vld [vmem:[%s5 + $0xb8] sm:$0xf]
    %v460 = vld [vmem:[%s5 + $0xbc] sm:$0xf]
    %v461 = vld [vmem:[%s5 + $0xc0] sm:$0xf]
    %v462 = vld [vmem:[%s5 + $0xc4] sm:$0xf]
    %v463 = vld [vmem:[%s5 + $0xc8] sm:$0xf]
    %v464 = vld [vmem:[%s5 + $0xcc] sm:$0xf]
    %v465 = vld [vmem:[%s5 + $0xd0] sm:$0xf]
    %v466 = vld [vmem:[%s5 + $0xd4] sm:$0xf]
    %v467 = vld [vmem:[%s5 + $0xd8] sm:$0xf]
    %v468 = vld [vmem:[%s5 + $0xdc] sm:$0xf]
    %v469 = vld [vmem:[%s5 + $0xe0] sm:$0xf]
    %v470 = vld [vmem:[%s5 + $0xe4] sm:$0xf]
    %v471 = vld [vmem:[%s5 + $0xe8] sm:$0xf]
    %v472 = vld [vmem:[%s5 + $0xec] sm:$0xf]
    %v473 = vld [vmem:[%s5 + $0xf0] sm:$0xf]
    %v474 = vld [vmem:[%s5 + $0xf4] sm:$0xf]
    %v475 = vld [vmem:[%s5 + $0xf8] sm:$0xf]
    %v476 = vld [vmem:[%s5 + $0xfc] sm:$0xf]
    %v477 = vld [vmem:[%s6] sm:$0x1]
    %v479 = vperm.slane %v477, 0
    %v545 = vunpack.c.l.b16 %v413
    %v546 = vunpack.c.l.b16 %v414
    %v547 = vunpack.c.l.b16 %v415
    %v548 = vunpack.c.l.b16 %v416
    %v549 = vunpack.c.l.b16 %v417
    %v550 = vunpack.c.l.b16 %v418
    %v551 = vunpack.c.l.b16 %v419
    %v552 = vunpack.c.l.b16 %v420
    %v553 = vunpack.c.l.b16 %v421
    %v554 = vunpack.c.l.b16 %v422
    %v555 = vunpack.c.l.b16 %v423
    %v556 = vunpack.c.l.b16 %v424
    %v557 = vunpack.c.l.b16 %v425
    %v558 = vunpack.c.l.b16 %v426
    %v559 = vunpack.c.l.b16 %v427
    %v560 = vunpack.c.l.b16 %v428
    %v561 = vunpack.c.l.b16 %v429
    %v562 = vunpack.c.l.b16 %v430
    %v563 = vunpack.c.l.b16 %v431
    %v564 = vunpack.c.l.b16 %v432
    %v565 = vunpack.c.l.b16 %v433
    %v566 = vunpack.c.l.b16 %v434
    %v567 = vunpack.c.l.b16 %v435
    %v568 = vunpack.c.l.b16 %v436
    %v569 = vunpack.c.l.b16 %v437
    %v570 = vunpack.c.l.b16 %v438
    %v571 = vunpack.c.l.b16 %v439
    %v572 = vunpack.c.l.b16 %v440
    %v573 = vunpack.c.l.b16 %v441
    %v574 = vunpack.c.l.b16 %v442
    %v575 = vunpack.c.l.b16 %v443
    %v576 = vunpack.c.l.b16 %v444
    %v577 = vunpack.c.l.b16 %v445
    %v578 = vunpack.c.l.b16 %v446
    %v579 = vunpack.c.l.b16 %v447
    %v580 = vunpack.c.l.b16 %v448
    %v581 = vunpack.c.l.b16 %v449
    %v582 = vunpack.c.l.b16 %v450
    %v583 = vunpack.c.l.b16 %v451
    %v584 = vunpack.c.l.b16 %v452
    %v585 = vunpack.c.l.b16 %v453
    %v586 = vunpack.c.l.b16 %v454
    %v587 = vunpack.c.l.b16 %v455
    %v588 = vunpack.c.l.b16 %v456
    %v589 = vunpack.c.l.b16 %v457
    %v590 = vunpack.c.l.b16 %v458
    %v591 = vunpack.c.l.b16 %v459
    %v592 = vunpack.c.l.b16 %v460
    %v593 = vunpack.c.l.b16 %v461
    %v594 = vunpack.c.l.b16 %v462
    %v595 = vunpack.c.l.b16 %v463
    %v596 = vunpack.c.l.b16 %v464
    %v597 = vunpack.c.l.b16 %v465
    %v598 = vunpack.c.l.b16 %v466
    %v599 = vunpack.c.l.b16 %v467
    %v600 = vunpack.c.l.b16 %v468
    %v601 = vunpack.c.l.b16 %v469
    %v602 = vunpack.c.l.b16 %v470
    %v603 = vunpack.c.l.b16 %v471
    %v604 = vunpack.c.l.b16 %v472
    %v605 = vunpack.c.l.b16 %v473
    %v606 = vunpack.c.l.b16 %v474
    %v607 = vunpack.c.l.b16 %v475
    %v608 = vunpack.c.l.b16 %v476
    %v609 = vpack.c.b16 %v546, %v545
    %v610 = vpack.c.b16 %v548, %v547
    %v611 = vpack.c.b16 %v550, %v549
    %v612 = vpack.c.b16 %v552, %v551
    %v613 = vpack.c.b16 %v554, %v553
    %v614 = vpack.c.b16 %v556, %v555
    %v615 = vpack.c.b16 %v558, %v557
    %v616 = vpack.c.b16 %v560, %v559
    %v617 = vpack.c.b16 %v562, %v561
    %v618 = vpack.c.b16 %v564, %v563
    %v619 = vpack.c.b16 %v566, %v565
    %v620 = vpack.c.b16 %v568, %v567
    %v621 = vpack.c.b16 %v570, %v569
    %v622 = vpack.c.b16 %v572, %v571
    %v623 = vpack.c.b16 %v574, %v573
    %v624 = vpack.c.b16 %v576, %v575
    %v625 = vpack.c.b16 %v578, %v577
    %v626 = vpack.c.b16 %v580, %v579
    %v627 = vpack.c.b16 %v582, %v581
    %v628 = vpack.c.b16 %v584, %v583
    %v629 = vpack.c.b16 %v586, %v585
    %v630 = vpack.c.b16 %v588, %v587
    %v631 = vpack.c.b16 %v590, %v589
    %v632 = vpack.c.b16 %v592, %v591
    %v633 = vpack.c.b16 %v594, %v593
    %v634 = vpack.c.b16 %v596, %v595
    %v635 = vpack.c.b16 %v598, %v597
    %v636 = vpack.c.b16 %v600, %v599
    %v637 = vpack.c.b16 %v602, %v601
    %v638 = vpack.c.b16 %v604, %v603
    %v639 = vpack.c.b16 %v606, %v605
    %v640 = vpack.c.b16 %v608, %v607
    %673 = vmatpush.bf16.msra.mxu0 %v616
    %674 = vmatpush.bf16.msra.mxu0 %v615
    %675 = vmatpush.bf16.msra.mxu0 %v614
    %676 = vmatpush.bf16.msra.mxu0 %v613
    %677 = vmatpush.bf16.msra.mxu0 %v612
    %678 = vmatpush.bf16.msra.mxu0 %v611
    %679 = vmatpush.bf16.msra.mxu0 %v610
    %680 = vmatpush.bf16.msra.mxu0 %v609
    %681 = vmatmul.bf16.gmra.mxu0 %v409
    %v682 = vpop.f32.mrf.mxu0
    %v683 = vadd.f32 %v479, %v682
    %v684 = vpop.f32.mrf.mxu0
    %v685 = vadd.f32 %v479, %v684
    %686 = vdwg.mxu0
    %687 = vmatpush.bf16.msra.mxu0 %v624
    %688 = vmatpush.bf16.msra.mxu0 %v623
    %689 = vmatpush.bf16.msra.mxu0 %v622
    %690 = vmatpush.bf16.msra.mxu0 %v621
    %691 = vmatpush.bf16.msra.mxu0 %v620
    %692 = vmatpush.bf16.msra.mxu0 %v619
    %693 = vmatpush.bf16.msra.mxu0 %v618
    %694 = vmatpush.bf16.msra.mxu0 %v617
    %695 = vmatmul.bf16.gmra.mxu0 %v410
    %v696 = vpop.f32.mrf.mxu0
    %v697 = vadd.f32 %v683, %v696
    %v698 = vpop.f32.mrf.mxu0
    %v699 = vadd.f32 %v685, %v698
    %700 = vdwg.mxu0
    %701 = vmatpush.bf16.msra.mxu0 %v632
    %702 = vmatpush.bf16.msra.mxu0 %v631
    %703 = vmatpush.bf16.msra.mxu0 %v630
    %704 = vmatpush.bf16.msra.mxu0 %v629
    %705 = vmatpush.bf16.msra.mxu0 %v628
    %706 = vmatpush.bf16.msra.mxu0 %v627
    %707 = vmatpush.bf16.msra.mxu0 %v626
    %708 = vmatpush.bf16.msra.mxu0 %v625
    %709 = vmatmul.bf16.gmra.mxu0 %v411
    %v710 = vpop.f32.mrf.mxu0
    %v711 = vadd.f32 %v697, %v710
    %v712 = vpop.f32.mrf.mxu0
    %v713 = vadd.f32 %v699, %v712
    %714 = vdwg.mxu0
    %715 = vmatpush.bf16.msra.mxu0 %v640
    %716 = vmatpush.bf16.msra.mxu0 %v639
    %717 = vmatpush.bf16.msra.mxu0 %v638
    %718 = vmatpush.bf16.msra.mxu0 %v637
    %719 = vmatpush.bf16.msra.mxu0 %v636
    %720 = vmatpush.bf16.msra.mxu0 %v635
    %721 = vmatpush.bf16.msra.mxu0 %v634
    %722 = vmatpush.bf16.msra.mxu0 %v633
    %723 = vmatmul.bf16.gmra.mxu0 %v412
    %v724 = vpop.f32.mrf.mxu0
    %v725 = vadd.f32 %v711, %v724
    %v726 = vpop.f32.mrf.mxu0
    %v727 = vadd.f32 %v713, %v726
    %728 = vdwg.mxu0
    %v729 = vld [vmem:[%s7] sm:$0x1]
    %v730 = vld [vmem:[%s8] sm:$0x1]
    %v731 = vmax.f32 %v729, 0.0
    %v732 = vsub.f32 %v731, %v729
    %v733 = vand.u32 2147483647, %v729
    %v734 = vsub.f32 0.0, %v733
    %v735 = vmul.f32 %v734, 1.442695
    %v736 = vpow.pop %v735
    %v737 = vadd.f32 %v736, 1.0
    %v738 = vlog2.pop %v737
    %v739 = vmul.f32 %v738, 0.6931472
    %v740 = vadd.f32 %v732, %v739
    %vm741 = vcmask 122880
    %v742 = vsel %vm741, %v740, 0.0
    %743 = vadd.xlane.f32.xlu0 %v742
    %v744 = vpop.xlane.xlu0 %743
    %v745 = vrot.slane %v744, 4
    %v746 = vadd.f32 %v744, %v745
    %v747 = vrot.slane %v746, 2
    %v748 = vadd.f32 %v746, %v747
    %v749 = vrot.slane %v748, 1
    %v750 = vadd.f32 %v748, %v749
    %s751 = vtos %v750
    %v752 = vmax.f32 %v730, 0.0
    %v753 = vmul.f32 %v730, 0.0
    %v754 = vsub.f32 %v752, %v753
    %v755 = vand.u32 2147483647, %v730
    %v756 = vsub.f32 0.0, %v755
    %v757 = vmul.f32 %v756, 1.442695
    %v758 = vpow.pop %v757
    %v759 = vadd.f32 %v758, 1.0
    %v760 = vlog2.pop %v759
    %v761 = vmul.f32 %v760, 0.6931472
    %v762 = vadd.f32 %v754, %v761
    %v763 = vsel %vm741, %v762, 0.0
    %764 = vadd.xlane.f32.xlu0 %v763
    %v765 = vpop.xlane.xlu0 %764
    %v766 = vrot.slane %v765, 4
    %v767 = vadd.f32 %v765, %v766
    %v768 = vrot.slane %v767, 2
    %v769 = vadd.f32 %v767, %v768
    %v770 = vrot.slane %v769, 1
    %v771 = vadd.f32 %v769, %v770
    %s772 = vtos %v771
    %s773 = sadd.f32 %s751, %s772
    %v774 = vrcp.pop 2.0
    %v775 = vmul.f32 2.0, %v774
    %v776 = vsub.f32 1.0, %v775
    %v777 = vmul.f32 %v774, %v776
    %v778 = vadd.f32 %v774, %v777
    %vm779 = vweird.f32 %v774
    %v780 = vsel %vm779, %v774, %v778
    %s781 = vtos %v780
    %s782 = smul.f32 %s773, %s781
    %v783 = vld [vmem:[%s9] sm:$0xff]
    %v784 = vld [vmem:[%s9 + $0x8] sm:$0xff]
    %v785 = vld [vmem:[%s10] sm:$0xff]
    %v786 = vld [vmem:[%s10 + $0x8] sm:$0xff]
    %v787 = vsub.f32 %v783, %v785
    %v788 = vsub.f32 %v784, %v786
    %v789 = vand.u32 2147483647, %v787
    %v790 = vand.u32 2147483647, %v788
    %vm791 = vcmp.lt.f32.partialorder %v789, 1.0
    %vm792 = vcmp.lt.f32.partialorder %v790, 1.0
    %v793 = vmul.f32 %v787, 0.5
    %v794 = vmul.f32 %v788, 0.5
    %v795 = vmul.f32 %v793, %v787
    %v796 = vmul.f32 %v794, %v788
    %v797 = vsub.f32 %v789, 0.5
    %v798 = vsub.f32 %v790, 0.5
    %v799 = vsel %vm791, %v795, %v797
    %v800 = vsel %vm792, %v796, %v798
    %vm801 = vcmask 31744
    %v802 = vsel %vm801, %v799, 0.0
    %v803 = vsel %vm801, %v800, 0.0
    %v804 = vadd.f32 %v802, %v803
    %805 = vadd.xlane.f32.xlu0 %v804
    %v806 = vpop.xlane.xlu0 %805
    %v807 = vrot.slane %v806, 4
    %v808 = vadd.f32 %v806, %v807
    %v809 = vrot.slane %v808, 2
    %v810 = vadd.f32 %v808, %v809
    %v811 = vrot.slane %v810, 1
    %v812 = vadd.f32 %v810, %v811
    %s813 = vtos %v812
    %v814 = vrcp.pop 2.0
    %v815 = vmul.f32 2.0, %v814
    %v816 = vsub.f32 1.0, %v815
    %v817 = vmul.f32 %v814, %v816
    %v818 = vadd.f32 %v814, %v817
    %vm819 = vweird.f32 %v814
    %v820 = vsel %vm819, %v814, %v818
    %s821 = vtos %v820
    %s822 = smul.f32 %s813, %s821
    %v823 = vsel %vm801, %v725, -inf
    %824 = vmax.xlane.f32.xlu0 %v823
    %v825 = vpop.xlane.xlu0 %824
    %v826 = vsel %vm801, %v727, -inf
    %827 = vmax.xlane.f32.xlu0 %v826
    %v828 = vpop.xlane.xlu0 %827
    %v829 = vsub.f32 %v725, %v825
    %v830 = vsub.f32 %v727, %v828
    %v831 = vmul.f32 %v829, 1.442695
    %v832 = vpow.pop %v831
    %v833 = vmul.f32 %v830, 1.442695
    %v834 = vpow.pop %v833
    %v835 = vsel %vm801, %v832, 0.0
    %836 = vadd.xlane.f32.xlu0 %v835
    %v837 = vpop.xlane.xlu0 %836
    %v838 = vsel %vm801, %v834, 0.0
    %839 = vadd.xlane.f32.xlu0 %v838
    %v840 = vpop.xlane.xlu0 %839
    %v841 = vlog2.pop %v837
    %v842 = vmul.f32 %v841, 0.6931472
    %v843 = vlog2.pop %v840
    %v844 = vmul.f32 %v843, 0.6931472
    %v845 = vadd.f32 %v825, %v842
    %v846 = vadd.f32 %v828, %v844
    %v847 = vld [vmem:[%s11] sm:$0xff]
    %v848 = vld [vmem:[%s11 + $0x8] sm:$0xff]
    %v849 = vsub.f32 %v725, %v845
    %v850 = vsub.f32 %v727, %v846
    %v851 = vmul.f32 %v847, %v849
    %v852 = vmul.f32 %v848, %v850
    %v853 = vsel %vm801, %v851, 0.0
    %v854 = vsel %vm801, %v852, 0.0
    %v855 = vadd.f32 %v853, %v854
    %856 = vadd.xlane.f32.xlu0 %v855
    %v857 = vpop.xlane.xlu0 %856
    %v858 = vrot.slane %v857, 4
    %v859 = vadd.f32 %v857, %v858
    %v860 = vrot.slane %v859, 2
    %v861 = vadd.f32 %v859, %v860
    %v862 = vrot.slane %v861, 1
    %v863 = vadd.f32 %v861, %v862
    %s864 = vtos %v863
    %s865 = ssub.f32 0.0, %s864
    %v866 = vrcp.pop 16.0
    %v867 = vmul.f32 16.0, %v866
    %v868 = vsub.f32 1.0, %v867
    %v869 = vmul.f32 %v866, %v868
    %v870 = vadd.f32 %v866, %v869
    %vm871 = vweird.f32 %v866
    %v872 = vsel %vm871, %v866, %v870
    %s873 = vtos %v872
    %s874 = smul.f32 %s865, %s873
    %s875 = smul.f32 %s822, 5.0
    %s876 = sadd.f32 %s782, %s875
    %s877 = sadd.f32 %s876, %s874
    %v878 = vstv %s877
    %vm879 = vcmask 0
    %880 = vst.msk [vmem:[#allocation2] sm:$0x1] %vm879, %v878
    // Predicated region
    $region50: #{two_stage_detector_forward.5} parent=1 // pred_check
      _
    $region51: #{two_stage_detector_forward.5} parent=1 // pred_check_branch
      %882 = sbr.rel (0) target = $region53
    $region52: #{two_stage_detector_forward.5} parent=1 // pred_region
      %884 = vsyncadd [#allocation3], 0
      %s886 = sshll.u32 [#allocation2], 4
      %s887 = int_to_ptr.vmem [resolvable:$true] %s886
      %s888 = sshll.u32 %s12, 4
      %s889 = int_to_ptr.hbm [resolvable:$true] %s888
      %891 = dma.vmem_to_hbm [thread:$0]  %s887, 16, %s889, [#allocation3]
    $region53: #{two_stage_detector_forward.5} parent=1 // pred_fallthru
      _
    // Predicated region
    $region54: #{two_stage_detector_forward.5} parent=1 // pred_check
      _
    $region55: #{two_stage_detector_forward.5} parent=1 // pred_check_branch
      %893 = sbr.rel (0) target = $region57
    $region56: #{two_stage_detector_forward.5} parent=1 // pred_region
      %895 = dma.done [#allocation3], 16
    $region57: #{two_stage_detector_forward.5} parent=1 // pred_fallthru
      _
    %896 = vsyncpa [#allocation3], 1

</llo_original>
